<compile_context>
chip_gen: v5e
topology: v5e:2x2
jax: 0.10.0
libtpu: 0.0.40
codegen_flags: <defaults>
</compile_context>

<pallas_src>
import math

import jax
import jax.numpy as jnp
from jax import lax
from jax.experimental import pallas as pl
from jax.experimental.pallas import tpu as pltpu

BN_EPS = 1e-5


def _round_up(x, m):
    return (x + m - 1) // m * m


# --------------------------------------------------------------------------
# Fused in-kernel computation (values already loaded from VMEM refs)
# --------------------------------------------------------------------------

def _ir_compute(x2, mask, w1, b1, wdw, b2, w3, b3, res, *, H, W, Hp, Wp):
    """Fused expand -> depthwise -> project for one image held in VMEM.

    x2   : (Hp*Wp, Cin)  spatially padded, flattened input (bf16 if expanding)
    mask : (Hp*Wp, 1)    1.0 inside the image, 0.0 on the padding ring
    w1,b1: (Cin, hid) bf16 / (1, hid) f32   expand 1x1 (BN folded), or None
    wdw  : (9, 1, hid) f32                  depthwise taps (BN scale folded)
    b2   : (1, hid) f32
    w3,b3: (hid, oup) bf16 / (1, oup) f32   project 1x1 (BN folded)
    res  : (H*W, oup) f32 residual or None
    Returns the stride-1 resolution output (H*W, oup) in f32.
    """
    if w1 is not None:
        # Expand 1x1 on the MXU (bf16 in, f32 accumulate) + BN bias + ReLU6.
        h = jnp.dot(x2, w1, preferred_element_type=jnp.float32) + b1
        h = jnp.clip(h, 0.0, 6.0)
    else:
        h = x2.astype(jnp.float32)
    # Re-zero the depthwise padding ring (PyTorch pads the *hidden* activation
    # with zeros; after BN bias that is not automatic for general params).
    h = h * mask

    hidden = h.shape[-1]
    h3 = h.reshape(Hp, Wp, hidden)          # Wp is a multiple of 8 -> cheap

    # Depthwise 3x3 as 9 unrolled per-channel MAC taps on the VPU (f32).
    acc = None
    for k in range(9):
        kh, kw = divmod(k, 3)
        tap = h3[kh:kh + H, kw:kw + W, :] * wdw[k]
        acc = tap if acc is None else acc + tap
    acc = jnp.clip(acc + b2, 0.0, 6.0)      # BN bias + ReLU6

    # Project 1x1 on the MXU (bf16 in, f32 accumulate) + BN bias.
    y = jnp.dot(acc.reshape(H * W, hidden).astype(jnp.bfloat16), w3,
                preferred_element_type=jnp.float32) + b3
    if res is not None:
        y = y + res                          # fused inverted-residual skip
    return y


def _make_ir_kernel(expand, use_res, H, W, Hp, Wp):
    """Build the pallas kernel variant matching the block configuration."""
    if expand and use_res:
        def kernel(x_ref, m_ref, w1_ref, b1_ref, wdw_ref, b2_ref, w3_ref,
                   b3_ref, res_ref, o_ref):
            o_ref[0] = _ir_compute(x_ref[0], m_ref[...], w1_ref[...],
                                   b1_ref[...], wdw_ref[...], b2_ref[...],
                                   w3_ref[...], b3_ref[...], res_ref[0],
                                   H=H, W=W, Hp=Hp, Wp=Wp)
    elif expand:
        def kernel(x_ref, m_ref, w1_ref, b1_ref, wdw_ref, b2_ref, w3_ref,
                   b3_ref, o_ref):
            o_ref[0] = _ir_compute(x_ref[0], m_ref[...], w1_ref[...],
                                   b1_ref[...], wdw_ref[...], b2_ref[...],
                                   w3_ref[...], b3_ref[...], None,
                                   H=H, W=W, Hp=Hp, Wp=Wp)
    elif use_res:
        def kernel(x_ref, m_ref, wdw_ref, b2_ref, w3_ref, b3_ref, res_ref,
                   o_ref):
            o_ref[0] = _ir_compute(x_ref[0], m_ref[...], None, None,
                                   wdw_ref[...], b2_ref[...], w3_ref[...],
                                   b3_ref[...], res_ref[0],
                                   H=H, W=W, Hp=Hp, Wp=Wp)
    else:
        def kernel(x_ref, m_ref, wdw_ref, b2_ref, w3_ref, b3_ref, o_ref):
            o_ref[0] = _ir_compute(x_ref[0], m_ref[...], None, None,
                                   wdw_ref[...], b2_ref[...], w3_ref[...],
                                   b3_ref[...], None,
                                   H=H, W=W, Hp=Hp, Wp=Wp)
    return kernel


# --------------------------------------------------------------------------
# Pallas forward pass for one InvertedResidual block
# --------------------------------------------------------------------------

def inverted_residual_forward(params, x_nchw):
    """x_nchw: (N, Cin, H, W) f32 -> (N, oup, Ho, Wo) f32 (PyTorch layout)."""
    stride = params['stride']
    expand = params['expand_ratio'] != 1
    use_res = params['use_res']

    x = jnp.transpose(x_nchw, (0, 2, 3, 1)).astype(jnp.float32)   # NHWC
    N, H, W, Cin = x.shape
    hidden = params['wdw'].shape[-1]
    oup = params['w3'].shape[-1]

    # Pad spatially once (zeros); pad W to a sublane multiple so the in-kernel
    # (Hp*Wp, hid) -> (Hp, Wp, hid) reshape is layout-trivial.
    Hp = H + 2
    Wp = _round_up(W + 2, 8)
    xp = jnp.pad(x, ((0, 0), (1, 1), (1, Wp - W - 1), (0, 0)))
    x_dt = jnp.bfloat16 if expand else jnp.float32
    xp2 = xp.reshape(N, Hp * Wp, Cin).astype(x_dt)

    # Validity mask: 1 inside the original HxW image, 0 on the padding ring.
    mask = jnp.zeros((Hp, Wp), jnp.float32).at[1:H + 1, 1:W + 1].set(1.0)
    mask = mask.reshape(Hp * Wp, 1)

    in_specs = [pl.BlockSpec((1, Hp * Wp, Cin), lambda n: (n, 0, 0)),
                pl.BlockSpec((Hp * Wp, 1), lambda n: (0, 0))]
    args = [xp2, mask]
    if expand:
        in_specs += [pl.BlockSpec((Cin, hidden), lambda n: (0, 0)),
                     pl.BlockSpec((1, hidden), lambda n: (0, 0))]
        args += [params['w1'].astype(jnp.bfloat16), params['b1']]
    in_specs += [pl.BlockSpec((9, 1, hidden), lambda n: (0, 0, 0)),
                 pl.BlockSpec((1, hidden), lambda n: (0, 0)),
                 pl.BlockSpec((hidden, oup), lambda n: (0, 0)),
                 pl.BlockSpec((1, oup), lambda n: (0, 0))]
    args += [params['wdw'], params['b2'],
             params['w3'].astype(jnp.bfloat16), params['b3']]
    if use_res:
        in_specs.append(pl.BlockSpec((1, H * W, oup), lambda n: (n, 0, 0)))
        args.append(x.reshape(N, H * W, Cin))   # Cin == oup when use_res

    # TODO(synk): pad narrow channel counts (<128) to 128 lanes (zero weight
    # columns) for unmasked lane-dense stores on the output path.
    out = pl.pallas_call(
        _make_ir_kernel(expand, use_res, H, W, Hp, Wp),
        out_shape=jax.ShapeDtypeStruct((N, H * W, oup), jnp.float32),
        grid=(N,),
        in_specs=in_specs,
        out_specs=pl.BlockSpec((1, H * W, oup), lambda n: (n, 0, 0)),
        compiler_params=pltpu.CompilerParams(
            dimension_semantics=("parallel",),
            vmem_limit_bytes=32 * 1024 * 1024),
    )(*args)

    out = out.reshape(N, H, W, oup)
    if stride == 2:
        # TODO(synk): move the stride-2 subsample (and a row-tiled halo grid
        # for large spatial inputs) inside the kernel; done in XLA here for
        # robustness — the depthwise-at-stride-1 + subsample is exact.
        out = out[:, ::2, ::2, :]
    return jnp.transpose(out, (0, 3, 1, 2))


# --------------------------------------------------------------------------
# Parameter construction (BN folded into weights) and a pure-XLA reference
# --------------------------------------------------------------------------

def _bn_scale_bias(c):
    # Inference BatchNorm at PyTorch init state: gamma=1, beta=0, mean=0, var=1.
    gamma = jnp.ones((c,), jnp.float32)
    beta = jnp.zeros((c,), jnp.float32)
    mean = jnp.zeros((c,), jnp.float32)
    var = jnp.ones((c,), jnp.float32)
    scale = gamma / jnp.sqrt(var + BN_EPS)
    bias = beta - mean * scale
    return scale, bias


def make_inverted_residual_params(key, inp, oup, stride, expand_ratio=6,
                                  use_res_connect=True):
    assert stride in (1, 2)
    hidden = int(round(inp * expand_ratio))
    k1, k2, k3 = jax.random.split(key, 3)
    params = {
        'stride': stride,
        'expand_ratio': expand_ratio,
        'use_res': stride == 1 and inp == oup and use_res_connect,
    }
    if expand_ratio != 1:
        w1 = jax.random.normal(k1, (inp, hidden), jnp.float32) * math.sqrt(2.0 / hidden)
        s, b = _bn_scale_bias(hidden)
        params['w1'] = w1 * s[None, :]          # BN scale folded (f32 master copy)
        params['b1'] = b.reshape(1, hidden)
    wdw = jax.random.normal(k2, (3, 3, hidden), jnp.float32) * math.sqrt(2.0 / (9 * hidden))
    s, b = _bn_scale_bias(hidden)
    params['wdw'] = (wdw * s[None, None, :]).reshape(9, 1, hidden)
    params['b2'] = b.reshape(1, hidden)
    w3 = jax.random.normal(k3, (hidden, oup), jnp.float32) * math.sqrt(2.0 / oup)
    s, b = _bn_scale_bias(oup)
    params['w3'] = w3 * s[None, :]
    params['b3'] = b.reshape(1, oup)
    return params


def inverted_residual_reference(params, x_nchw):
    """Independent pure-XLA f32 reference (lax.conv) for validation."""
    stride = params['stride']
    x = jnp.transpose(x_nchw, (0, 2, 3, 1)).astype(jnp.float32)
    hidden = params['wdw'].shape[-1]
    h = x
    if params['expand_ratio'] != 1:
        h = jnp.clip(jnp.einsum('nhwc,cd->nhwd', x, params['w1']) + params['b1'],
                     0.0, 6.0)
    wdw = params['wdw'].reshape(3, 3, 1, hidden)
    h = lax.conv_general_dilated(h, wdw, window_strides=(stride, stride),
                                 padding=((1, 1), (1, 1)),
                                 dimension_numbers=('NHWC', 'HWIO', 'NHWC'),
                                 feature_group_count=hidden)
    h = jnp.clip(h + params['b2'], 0.0, 6.0)
    y = jnp.einsum('nhwc,cd->nhwd', h, params['w3']) + params['b3']
    if params['use_res']:
        y = y + x
    return jnp.transpose(y, (0, 3, 1, 2))


# --------------------------------------------------------------------------

if __name__ == "__main__":
    key = jax.random.PRNGKey(0)
    kx, kp1, kp2, kp3 = jax.random.split(key, 4)

    N, C, H, W = 4, 32, 16, 16
    x = jax.random.normal(kx, (N, C, H, W), jnp.float32)     # NCHW, as in PyTorch

    configs = [
        dict(inp=32, oup=32, stride=1, expand_ratio=6),      # expand + residual
        dict(inp=32, oup=48, stride=2, expand_ratio=6),      # expand, stride 2
        dict(inp=32, oup=32, stride=1, expand_ratio=1),      # expand_ratio == 1
    ]
    for cfg, kp in zip(configs, (kp1, kp2, kp3)):
        params = make_inverted_residual_params(kp, **cfg)
        out = jax.block_until_ready(inverted_residual_forward(params, x))
        Ho, Wo = H // cfg['stride'], W // cfg['stride']
        assert out.shape == (N, cfg['oup'], Ho, Wo), out.shape
        assert bool(jnp.all(jnp.isfinite(out)))
        ref = inverted_residual_reference(params, x)
        assert bool(jnp.allclose(out, ref, rtol=5e-2, atol=5e-2)), \
            float(jnp.max(jnp.abs(out - ref)))
    print("KERNEL_OK")
</pallas_src>

<mosaic_0001>
module attributes {stable_mosaic.version = 11 : i64} {
  func.func @kernel(%arg0: i32, %arg1: memref<1x432x32xbf16, #tpu.memory_space<vmem>>, %arg2: memref<432x1xf32, #tpu.memory_space<vmem>>, %arg3: memref<32x192xbf16, #tpu.memory_space<vmem>>, %arg4: memref<1x192xf32, #tpu.memory_space<vmem>>, %arg5: memref<9x1x192xf32, #tpu.memory_space<vmem>>, %arg6: memref<1x192xf32, #tpu.memory_space<vmem>>, %arg7: memref<192x32xbf16, #tpu.memory_space<vmem>>, %arg8: memref<1x32xf32, #tpu.memory_space<vmem>>, %arg9: memref<1x256x32xf32, #tpu.memory_space<vmem>>, %arg10: memref<1x256x32xf32, #tpu.memory_space<vmem>>) attributes {dimension_semantics = [#tpu.dimension_semantics<parallel>], iteration_bounds = array<i64: 4>, scalar_prefetch = 0 : i64, scratch_operands = 0 : i64, tpu.core_type = #tpu.core_type<tc>, window_params = [{transform_indices = @transform_0, window_bounds = array<i64: 1, 432, 32>}, {pipeline_mode = #tpu.pipeline_mode<synchronous>, transform_indices = @transform_1, window_bounds = array<i64: 432, 1>}, {pipeline_mode = #tpu.pipeline_mode<synchronous>, transform_indices = @transform_2, window_bounds = array<i64: 32, 192>}, {pipeline_mode = #tpu.pipeline_mode<synchronous>, transform_indices = @transform_3, window_bounds = array<i64: 1, 192>}, {pipeline_mode = #tpu.pipeline_mode<synchronous>, transform_indices = @transform_4, window_bounds = array<i64: 9, 1, 192>}, {pipeline_mode = #tpu.pipeline_mode<synchronous>, transform_indices = @transform_5, window_bounds = array<i64: 1, 192>}, {pipeline_mode = #tpu.pipeline_mode<synchronous>, transform_indices = @transform_6, window_bounds = array<i64: 192, 32>}, {pipeline_mode = #tpu.pipeline_mode<synchronous>, transform_indices = @transform_7, window_bounds = array<i64: 1, 32>}, {transform_indices = @transform_8, window_bounds = array<i64: 1, 256, 32>}, {transform_indices = @transform_9, window_bounds = array<i64: 1, 256, 32>}]} {
    %c0 = arith.constant 0 : index
    %c0_0 = arith.constant 0 : index
    %c0_1 = arith.constant 0 : index
    %0 = vector.load %arg1[%c0, %c0_0, %c0_1] : memref<1x432x32xbf16, #tpu.memory_space<vmem>>, vector<1x432x32xbf16>
    %1 = vector.shape_cast %0 : vector<1x432x32xbf16> to vector<432x32xbf16>
    %c0_2 = arith.constant 0 : index
    %c0_3 = arith.constant 0 : index
    %2 = vector.load %arg2[%c0_2, %c0_3] : memref<432x1xf32, #tpu.memory_space<vmem>>, vector<432x1xf32>
    %c0_4 = arith.constant 0 : index
    %c0_5 = arith.constant 0 : index
    %3 = vector.load %arg3[%c0_4, %c0_5] : memref<32x192xbf16, #tpu.memory_space<vmem>>, vector<32x192xbf16>
    %c0_6 = arith.constant 0 : index
    %c0_7 = arith.constant 0 : index
    %4 = vector.load %arg4[%c0_6, %c0_7] : memref<1x192xf32, #tpu.memory_space<vmem>>, vector<1x192xf32>
    %c0_8 = arith.constant 0 : index
    %c0_9 = arith.constant 0 : index
    %c0_10 = arith.constant 0 : index
    %5 = vector.load %arg5[%c0_8, %c0_9, %c0_10] : memref<9x1x192xf32, #tpu.memory_space<vmem>>, vector<9x1x192xf32>
    %c0_11 = arith.constant 0 : index
    %c0_12 = arith.constant 0 : index
    %6 = vector.load %arg6[%c0_11, %c0_12] : memref<1x192xf32, #tpu.memory_space<vmem>>, vector<1x192xf32>
    %c0_13 = arith.constant 0 : index
    %c0_14 = arith.constant 0 : index
    %7 = vector.load %arg7[%c0_13, %c0_14] : memref<192x32xbf16, #tpu.memory_space<vmem>>, vector<192x32xbf16>
    %c0_15 = arith.constant 0 : index
    %c0_16 = arith.constant 0 : index
    %8 = vector.load %arg8[%c0_15, %c0_16] : memref<1x32xf32, #tpu.memory_space<vmem>>, vector<1x32xf32>
    %c0_17 = arith.constant 0 : index
    %c0_18 = arith.constant 0 : index
    %c0_19 = arith.constant 0 : index
    %9 = vector.load %arg9[%c0_17, %c0_18, %c0_19] : memref<1x256x32xf32, #tpu.memory_space<vmem>>, vector<1x256x32xf32>
    %10 = vector.shape_cast %9 : vector<1x256x32xf32> to vector<256x32xf32>
    %cst = arith.constant dense<0.000000e+00> : vector<432x192xf32>
    %11 = tpu.matmul %1, %3, %cst {dimension_numbers = #tpu.dot_dimension_numbers<[1], [0], [0], [1], [0, 0, 1, 1], [], []>} : vector<432x32xbf16>, vector<32x192xbf16>, vector<432x192xf32> -> vector<432x192xf32>
    %12 = vector.broadcast %4 : vector<1x192xf32> to vector<432x192xf32>
    %13 = arith.addf %11, %12 : vector<432x192xf32>
    %cst_20 = arith.constant 0.000000e+00 : f32
    %cst_21 = arith.constant 6.000000e+00 : f32
    %14 = vector.broadcast %cst_20 : f32 to vector<432x192xf32>
    %15 = arith.maximumf %14, %13 : vector<432x192xf32>
    %16 = vector.broadcast %cst_21 : f32 to vector<432x192xf32>
    %17 = arith.minimumf %16, %15 : vector<432x192xf32>
    %18 = vector.broadcast %2 : vector<432x1xf32> to vector<432x192xf32>
    %19 = arith.mulf %17, %18 : vector<432x192xf32>
    %20 = vector.shape_cast %19 : vector<432x192xf32> to vector<18x24x192xf32>
    %21 = vector.extract_strided_slice %20 {offsets = [0, 0, 0], sizes = [16, 16, 192], strides = [1, 1, 1]} : vector<18x24x192xf32> to vector<16x16x192xf32>
    %22 = vector.extract_strided_slice %5 {offsets = [0, 0, 0], sizes = [1, 1, 192], strides = [1, 1, 1]} : vector<9x1x192xf32> to vector<1x1x192xf32>
    %23 = vector.shape_cast %22 : vector<1x1x192xf32> to vector<1x192xf32>
    %24 = vector.shape_cast %23 : vector<1x192xf32> to vector<1x1x192xf32>
    %25 = vector.broadcast %24 : vector<1x1x192xf32> to vector<16x16x192xf32>
    %26 = arith.mulf %21, %25 : vector<16x16x192xf32>
    %27 = vector.extract_strided_slice %20 {offsets = [0, 1, 0], sizes = [16, 16, 192], strides = [1, 1, 1]} : vector<18x24x192xf32> to vector<16x16x192xf32>
    %28 = vector.extract_strided_slice %5 {offsets = [1, 0, 0], sizes = [1, 1, 192], strides = [1, 1, 1]} : vector<9x1x192xf32> to vector<1x1x192xf32>
    %29 = vector.shape_cast %28 : vector<1x1x192xf32> to vector<1x192xf32>
    %30 = vector.shape_cast %29 : vector<1x192xf32> to vector<1x1x192xf32>
    %31 = vector.broadcast %30 : vector<1x1x192xf32> to vector<16x16x192xf32>
    %32 = arith.mulf %27, %31 : vector<16x16x192xf32>
    %33 = arith.addf %26, %32 : vector<16x16x192xf32>
    %34 = vector.extract_strided_slice %20 {offsets = [0, 2, 0], sizes = [16, 16, 192], strides = [1, 1, 1]} : vector<18x24x192xf32> to vector<16x16x192xf32>
    %35 = vector.extract_strided_slice %5 {offsets = [2, 0, 0], sizes = [1, 1, 192], strides = [1, 1, 1]} : vector<9x1x192xf32> to vector<1x1x192xf32>
    %36 = vector.shape_cast %35 : vector<1x1x192xf32> to vector<1x192xf32>
    %37 = vector.shape_cast %36 : vector<1x192xf32> to vector<1x1x192xf32>
    %38 = vector.broadcast %37 : vector<1x1x192xf32> to vector<16x16x192xf32>
    %39 = arith.mulf %34, %38 : vector<16x16x192xf32>
    %40 = arith.addf %33, %39 : vector<16x16x192xf32>
    %41 = vector.extract_strided_slice %20 {offsets = [1, 0, 0], sizes = [16, 16, 192], strides = [1, 1, 1]} : vector<18x24x192xf32> to vector<16x16x192xf32>
    %42 = vector.extract_strided_slice %5 {offsets = [3, 0, 0], sizes = [1, 1, 192], strides = [1, 1, 1]} : vector<9x1x192xf32> to vector<1x1x192xf32>
    %43 = vector.shape_cast %42 : vector<1x1x192xf32> to vector<1x192xf32>
    %44 = vector.shape_cast %43 : vector<1x192xf32> to vector<1x1x192xf32>
    %45 = vector.broadcast %44 : vector<1x1x192xf32> to vector<16x16x192xf32>
    %46 = arith.mulf %41, %45 : vector<16x16x192xf32>
    %47 = arith.addf %40, %46 : vector<16x16x192xf32>
    %48 = vector.extract_strided_slice %20 {offsets = [1, 1, 0], sizes = [16, 16, 192], strides = [1, 1, 1]} : vector<18x24x192xf32> to vector<16x16x192xf32>
    %49 = vector.extract_strided_slice %5 {offsets = [4, 0, 0], sizes = [1, 1, 192], strides = [1, 1, 1]} : vector<9x1x192xf32> to vector<1x1x192xf32>
    %50 = vector.shape_cast %49 : vector<1x1x192xf32> to vector<1x192xf32>
    %51 = vector.shape_cast %50 : vector<1x192xf32> to vector<1x1x192xf32>
    %52 = vector.broadcast %51 : vector<1x1x192xf32> to vector<16x16x192xf32>
    %53 = arith.mulf %48, %52 : vector<16x16x192xf32>
    %54 = arith.addf %47, %53 : vector<16x16x192xf32>
    %55 = vector.extract_strided_slice %20 {offsets = [1, 2, 0], sizes = [16, 16, 192], strides = [1, 1, 1]} : vector<18x24x192xf32> to vector<16x16x192xf32>
    %56 = vector.extract_strided_slice %5 {offsets = [5, 0, 0], sizes = [1, 1, 192], strides = [1, 1, 1]} : vector<9x1x192xf32> to vector<1x1x192xf32>
    %57 = vector.shape_cast %56 : vector<1x1x192xf32> to vector<1x192xf32>
    %58 = vector.shape_cast %57 : vector<1x192xf32> to vector<1x1x192xf32>
    %59 = vector.broadcast %58 : vector<1x1x192xf32> to vector<16x16x192xf32>
    %60 = arith.mulf %55, %59 : vector<16x16x192xf32>
    %61 = arith.addf %54, %60 : vector<16x16x192xf32>
    %62 = vector.extract_strided_slice %20 {offsets = [2, 0, 0], sizes = [16, 16, 192], strides = [1, 1, 1]} : vector<18x24x192xf32> to vector<16x16x192xf32>
    %63 = vector.extract_strided_slice %5 {offsets = [6, 0, 0], sizes = [1, 1, 192], strides = [1, 1, 1]} : vector<9x1x192xf32> to vector<1x1x192xf32>
    %64 = vector.shape_cast %63 : vector<1x1x192xf32> to vector<1x192xf32>
    %65 = vector.shape_cast %64 : vector<1x192xf32> to vector<1x1x192xf32>
    %66 = vector.broadcast %65 : vector<1x1x192xf32> to vector<16x16x192xf32>
    %67 = arith.mulf %62, %66 : vector<16x16x192xf32>
    %68 = arith.addf %61, %67 : vector<16x16x192xf32>
    %69 = vector.extract_strided_slice %20 {offsets = [2, 1, 0], sizes = [16, 16, 192], strides = [1, 1, 1]} : vector<18x24x192xf32> to vector<16x16x192xf32>
    %70 = vector.extract_strided_slice %5 {offsets = [7, 0, 0], sizes = [1, 1, 192], strides = [1, 1, 1]} : vector<9x1x192xf32> to vector<1x1x192xf32>
    %71 = vector.shape_cast %70 : vector<1x1x192xf32> to vector<1x192xf32>
    %72 = vector.shape_cast %71 : vector<1x192xf32> to vector<1x1x192xf32>
    %73 = vector.broadcast %72 : vector<1x1x192xf32> to vector<16x16x192xf32>
    %74 = arith.mulf %69, %73 : vector<16x16x192xf32>
    %75 = arith.addf %68, %74 : vector<16x16x192xf32>
    %76 = vector.extract_strided_slice %20 {offsets = [2, 2, 0], sizes = [16, 16, 192], strides = [1, 1, 1]} : vector<18x24x192xf32> to vector<16x16x192xf32>
    %77 = vector.extract_strided_slice %5 {offsets = [8, 0, 0], sizes = [1, 1, 192], strides = [1, 1, 1]} : vector<9x1x192xf32> to vector<1x1x192xf32>
    %78 = vector.shape_cast %77 : vector<1x1x192xf32> to vector<1x192xf32>
    %79 = vector.shape_cast %78 : vector<1x192xf32> to vector<1x1x192xf32>
    %80 = vector.broadcast %79 : vector<1x1x192xf32> to vector<16x16x192xf32>
    %81 = arith.mulf %76, %80 : vector<16x16x192xf32>
    %82 = arith.addf %75, %81 : vector<16x16x192xf32>
    %83 = vector.shape_cast %6 : vector<1x192xf32> to vector<1x1x192xf32>
    %84 = vector.broadcast %83 : vector<1x1x192xf32> to vector<16x16x192xf32>
    %85 = arith.addf %82, %84 : vector<16x16x192xf32>
    %cst_22 = arith.constant 0.000000e+00 : f32
    %cst_23 = arith.constant 6.000000e+00 : f32
    %86 = vector.broadcast %cst_22 : f32 to vector<16x16x192xf32>
    %87 = arith.maximumf %86, %85 : vector<16x16x192xf32>
    %88 = vector.broadcast %cst_23 : f32 to vector<16x16x192xf32>
    %89 = arith.minimumf %88, %87 : vector<16x16x192xf32>
    %90 = vector.shape_cast %89 : vector<16x16x192xf32> to vector<256x192xf32>
    %91 = arith.truncf %90 : vector<256x192xf32> to vector<256x192xbf16>
    %cst_24 = arith.constant dense<0.000000e+00> : vector<256x32xf32>
    %92 = tpu.matmul %91, %7, %cst_24 {dimension_numbers = #tpu.dot_dimension_numbers<[1], [0], [0], [1], [0, 0, 1, 1], [], []>} : vector<256x192xbf16>, vector<192x32xbf16>, vector<256x32xf32> -> vector<256x32xf32>
    %93 = vector.broadcast %8 : vector<1x32xf32> to vector<256x32xf32>
    %94 = arith.addf %92, %93 : vector<256x32xf32>
    %95 = arith.addf %94, %10 : vector<256x32xf32>
    %c0_25 = arith.constant 0 : index
    %c0_26 = arith.constant 0 : index
    %c0_27 = arith.constant 0 : index
    %96 = vector.load %arg10[%c0_25, %c0_26, %c0_27] : memref<1x256x32xf32, #tpu.memory_space<vmem>>, vector<1x256x32xf32>
    %97 = vector.shape_cast %96 : vector<1x256x32xf32> to vector<256x32xf32>
    %98 = vector.shape_cast %95 : vector<256x32xf32> to vector<1x256x32xf32>
    tpu.vector_store %arg10[%c0_25, %c0_26, %c0_27], %98 {strides = array<i32>} : memref<1x256x32xf32, #tpu.memory_space<vmem>>, vector<1x256x32xf32>,
    return
  }
  func.func @transform_0(%arg0: i32) -> (i32, i32, i32) {
    %c0_i32 = arith.constant 0 : i32
    %c0_i32_0 = arith.constant 0 : i32
    %c0_i32_1 = arith.constant 0 : i32
    return %arg0, %c0_i32, %c0_i32_0 : i32, i32, i32
  }
  func.func @transform_1(%arg0: i32) -> (i32, i32) {
    %c0_i32 = arith.constant 0 : i32
    %c0_i32_0 = arith.constant 0 : i32
    %c0_i32_1 = arith.constant 0 : i32
    return %c0_i32, %c0_i32_0 : i32, i32
  }
  func.func @transform_2(%arg0: i32) -> (i32, i32) {
    %c0_i32 = arith.constant 0 : i32
    %c0_i32_0 = arith.constant 0 : i32
    %c0_i32_1 = arith.constant 0 : i32
    return %c0_i32, %c0_i32_0 : i32, i32
  }
  func.func @transform_3(%arg0: i32) -> (i32, i32) {
    %c0_i32 = arith.constant 0 : i32
    %c0_i32_0 = arith.constant 0 : i32
    %c0_i32_1 = arith.constant 0 : i32
    return %c0_i32, %c0_i32_0 : i32, i32
  }
  func.func @transform_4(%arg0: i32) -> (i32, i32, i32) {
    %c0_i32 = arith.constant 0 : i32
    %c0_i32_0 = arith.constant 0 : i32
    %c0_i32_1 = arith.constant 0 : i32
    %c0_i32_2 = arith.constant 0 : i32
    return %c0_i32, %c0_i32_0, %c0_i32_1 : i32, i32, i32
  }
  func.func @transform_5(%arg0: i32) -> (i32, i32) {
    %c0_i32 = arith.constant 0 : i32
    %c0_i32_0 = arith.constant 0 : i32
    %c0_i32_1 = arith.constant 0 : i32
    return %c0_i32, %c0_i32_0 : i32, i32
  }
  func.func @transform_6(%arg0: i32) -> (i32, i32) {
    %c0_i32 = arith.constant 0 : i32
    %c0_i32_0 = arith.constant 0 : i32
    %c0_i32_1 = arith.constant 0 : i32
    return %c0_i32, %c0_i32_0 : i32, i32
  }
  func.func @transform_7(%arg0: i32) -> (i32, i32) {
    %c0_i32 = arith.constant 0 : i32
    %c0_i32_0 = arith.constant 0 : i32
    %c0_i32_1 = arith.constant 0 : i32
    return %c0_i32, %c0_i32_0 : i32, i32
  }
  func.func @transform_8(%arg0: i32) -> (i32, i32, i32) {
    %c0_i32 = arith.constant 0 : i32
    %c0_i32_0 = arith.constant 0 : i32
    %c0_i32_1 = arith.constant 0 : i32
    return %arg0, %c0_i32, %c0_i32_0 : i32, i32, i32
  }
  func.func @transform_9(%arg0: i32) -> (i32, i32, i32) {
    %c0_i32 = arith.constant 0 : i32
    %c0_i32_0 = arith.constant 0 : i32
    %c0_i32_1 = arith.constant 0 : i32
    return %arg0, %c0_i32, %c0_i32_0 : i32, i32, i32
  }
}

</mosaic_0001>

<llo_original>
// kernel: tpu_custom_call.1
$region0: #{tpu_custom_call.1}
  #allocation0 [shape = 'u32[]', space=smem, size = 0x4, offset = 0x4, fixed_abs, tag = 'smem constant byte address 0x4 - core index']
  #allocation1 [shape = 'u32[72,128]{1,0:T(1,128)}', space=vmem, size = 0x9000, scoped, tag = 'internal scratch']
  %s0 = inlined_call_operand.vmem [shape: bf16[4,432,32], index: 0, kind: input, shape index: {}]
  %s1 = inlined_call_operand.vmem [shape: f32[432,1], index: 1, kind: input, shape index: {}]
  %s2 = inlined_call_operand.vmem [shape: bf16[32,192], index: 2, kind: input, shape index: {}]
  %s3 = inlined_call_operand.vmem [shape: f32[1,192], index: 3, kind: input, shape index: {}]
  %s4 = inlined_call_operand.vmem [shape: f32[9,1,192], index: 4, kind: input, shape index: {}]
  %s5 = inlined_call_operand.vmem [shape: f32[1,192], index: 5, kind: input, shape index: {}]
  %s6 = inlined_call_operand.vmem [shape: bf16[192,32], index: 6, kind: input, shape index: {}]
  %s7 = inlined_call_operand.vmem [shape: f32[1,32], index: 7, kind: input, shape index: {}]
  %s8 = inlined_call_operand.vmem [shape: f32[4,256,32], index: 8, kind: input, shape index: {}]
  %s9 = inlined_call_operand.vmem [shape: f32[4,256,32], index: 9, kind: output, shape index: {}]
  %s10 = sld [smem:[#allocation0]]
  $region69: #{tpu_custom_call.1} parent=0
    _
  %s12 = ssub.s32 1, %s10
  %s13 = scalar_select 0, %s12, %s10
  loop: start=0, step=1, limit=6
  $region2: #{tpu_custom_call.1} parent=0 // loop_pre_header
    _
  $region3: #{tpu_custom_call.1} parent=0 // loop_header
    %s15 = sphi 0, %s19
    %p16 = scmp.ge.s32.totalorder %s15, 6
    %s25 = sphi 0, %s27
    %s28 = sphi 0, %s25
    %s29 = sphi 0, %s28
    %s45 = sphi 0, %s29
    %s49 = sphi 0, %s49
    %s51 = sphi 0, %s49
    %s52 = sphi 0, %s51
    %s66 = sphi 0, %s52
    %s70 = sphi 0, %s70
    %s72 = sphi 0, %s70
    %s73 = sphi 0, %s72
    %s87 = sphi 0, %s73
    %s91 = sphi 0, %s91
    %s93 = sphi 0, %s91
    %s94 = sphi 0, %s93
    %s108 = sphi 0, %s94
    %s112 = sphi 0, %s112
    %s114 = sphi 0, %s112
    %s115 = sphi 0, %s114
    %s129 = sphi 0, %s115
    %s133 = sphi 0, %s133
    %s135 = sphi 0, %s133
    %s136 = sphi 0, %s135
    %s150 = sphi 0, %s136
    %s154 = sphi 0, %s154
    %s156 = sphi 0, %s154
    %s157 = sphi 0, %s156
    %s171 = sphi 0, %s157
    %s175 = sphi 0, %s175
    %s177 = sphi 0, %s175
    %s178 = sphi 0, %s177
    %s192 = sphi 0, %s178
    %s198 = sphi 0, %s200
    %s201 = sphi 0, %s198
    %s202 = sphi 0, %s201
    %s218 = sphi 0, %s202
    %s224 = sphi 0, %s226
    %s227 = sphi 0, %s224
    %s228 = sphi 0, %s227
    %s244 = sphi 0, %s228
  $region4: #{tpu_custom_call.1} parent=0 // loop_header_branch
    %18 = sbr.rel (%p16) target = $region8
  $region5: #{tpu_custom_call.1} parent=0 // loop_body
    %s20 = ssub.s32 %s15, 1
    %s21 = ssub.s32 %s15, 2
    %s22 = sadd.s32 %s15, 1
    %s23 = ssub.s32 %s15, %s22
    %p24 = scmp.eq.s32.totalorder %s23, 0
    %s26 = sadd.s32 %s25, 1
    %s27 = scalar_select %p24, %s25, %s26
    %p30 = pneg %p24
    %p31 = scmp.eq.s32.totalorder %s15, 3
    %p32 = por %p30, %p31
    %p33 = scmp.ne.s32.totalorder %s25, %s28
    %p34 = scmp.eq.s32.totalorder %s15, 0
    %p35 = por %p33, %p34
    %p36 = scmp.ne.s32.totalorder %s25, %s28
    %p37 = scmp.eq.s32.totalorder %s20, 3
    %p38 = por %p36, %p37
    %p39 = scmp.ne.s32.totalorder %s28, %s29
    %p40 = scmp.eq.s32.totalorder %s20, 0
    %p41 = por %p39, %p40
    %p42 = scmp.ne.s32.totalorder %s28, %s29
    %p43 = scmp.eq.s32.totalorder %s21, 3
    %p44 = por %p42, %p43
    %p46 = scmp.ne.s32.totalorder %s29, %s45
    %p47 = scmp.eq.s32.totalorder %s21, 0
    %p48 = por %p46, %p47
    %s50 = sadd.s32 %s49, 1
    %p53 = scmp.eq.s32.totalorder %s15, 3
    %p54 = scmp.ne.s32.totalorder %s49, %s51
    %p55 = scmp.eq.s32.totalorder %s15, 0
    %p56 = por %p54, %p55
    %p57 = scmp.ne.s32.totalorder %s49, %s51
    %p58 = scmp.eq.s32.totalorder %s20, 3
    %p59 = por %p57, %p58
    %p60 = scmp.ne.s32.totalorder %s51, %s52
    %p61 = scmp.eq.s32.totalorder %s20, 0
    %p62 = por %p60, %p61
    %p63 = scmp.ne.s32.totalorder %s51, %s52
    %p64 = scmp.eq.s32.totalorder %s21, 3
    %p65 = por %p63, %p64
    %p67 = scmp.ne.s32.totalorder %s52, %s66
    %p68 = scmp.eq.s32.totalorder %s21, 0
    %p69 = por %p67, %p68
    %s71 = sadd.s32 %s70, 1
    %p74 = scmp.eq.s32.totalorder %s15, 3
    %p75 = scmp.ne.s32.totalorder %s70, %s72
    %p76 = scmp.eq.s32.totalorder %s15, 0
    %p77 = por %p75, %p76
    %p78 = scmp.ne.s32.totalorder %s70, %s72
    %p79 = scmp.eq.s32.totalorder %s20, 3
    %p80 = por %p78, %p79
    %p81 = scmp.ne.s32.totalorder %s72, %s73
    %p82 = scmp.eq.s32.totalorder %s20, 0
    %p83 = por %p81, %p82
    %p84 = scmp.ne.s32.totalorder %s72, %s73
    %p85 = scmp.eq.s32.totalorder %s21, 3
    %p86 = por %p84, %p85
    %p88 = scmp.ne.s32.totalorder %s73, %s87
    %p89 = scmp.eq.s32.totalorder %s21, 0
    %p90 = por %p88, %p89
    %s92 = sadd.s32 %s91, 1
    %p95 = scmp.eq.s32.totalorder %s15, 3
    %p96 = scmp.ne.s32.totalorder %s91, %s93
    %p97 = scmp.eq.s32.totalorder %s15, 0
    %p98 = por %p96, %p97
    %p99 = scmp.ne.s32.totalorder %s91, %s93
    %p100 = scmp.eq.s32.totalorder %s20, 3
    %p101 = por %p99, %p100
    %p102 = scmp.ne.s32.totalorder %s93, %s94
    %p103 = scmp.eq.s32.totalorder %s20, 0
    %p104 = por %p102, %p103
    %p105 = scmp.ne.s32.totalorder %s93, %s94
    %p106 = scmp.eq.s32.totalorder %s21, 3
    %p107 = por %p105, %p106
    %p109 = scmp.ne.s32.totalorder %s94, %s108
    %p110 = scmp.eq.s32.totalorder %s21, 0
    %p111 = por %p109, %p110
    %s113 = sadd.s32 %s112, 1
    %p116 = scmp.eq.s32.totalorder %s15, 3
    %p117 = scmp.ne.s32.totalorder %s112, %s114
    %p118 = scmp.eq.s32.totalorder %s15, 0
    %p119 = por %p117, %p118
    %p120 = scmp.ne.s32.totalorder %s112, %s114
    %p121 = scmp.eq.s32.totalorder %s20, 3
    %p122 = por %p120, %p121
    %p123 = scmp.ne.s32.totalorder %s114, %s115
    %p124 = scmp.eq.s32.totalorder %s20, 0
    %p125 = por %p123, %p124
    %p126 = scmp.ne.s32.totalorder %s114, %s115
    %p127 = scmp.eq.s32.totalorder %s21, 3
    %p128 = por %p126, %p127
    %p130 = scmp.ne.s32.totalorder %s115, %s129
    %p131 = scmp.eq.s32.totalorder %s21, 0
    %p132 = por %p130, %p131
    %s134 = sadd.s32 %s133, 1
    %p137 = scmp.eq.s32.totalorder %s15, 3
    %p138 = scmp.ne.s32.totalorder %s133, %s135
    %p139 = scmp.eq.s32.totalorder %s15, 0
    %p140 = por %p138, %p139
    %p141 = scmp.ne.s32.totalorder %s133, %s135
    %p142 = scmp.eq.s32.totalorder %s20, 3
    %p143 = por %p141, %p142
    %p144 = scmp.ne.s32.totalorder %s135, %s136
    %p145 = scmp.eq.s32.totalorder %s20, 0
    %p146 = por %p144, %p145
    %p147 = scmp.ne.s32.totalorder %s135, %s136
    %p148 = scmp.eq.s32.totalorder %s21, 3
    %p149 = por %p147, %p148
    %p151 = scmp.ne.s32.totalorder %s136, %s150
    %p152 = scmp.eq.s32.totalorder %s21, 0
    %p153 = por %p151, %p152
    %s155 = sadd.s32 %s154, 1
    %p158 = scmp.eq.s32.totalorder %s15, 3
    %p159 = scmp.ne.s32.totalorder %s154, %s156
    %p160 = scmp.eq.s32.totalorder %s15, 0
    %p161 = por %p159, %p160
    %p162 = scmp.ne.s32.totalorder %s154, %s156
    %p163 = scmp.eq.s32.totalorder %s20, 3
    %p164 = por %p162, %p163
    %p165 = scmp.ne.s32.totalorder %s156, %s157
    %p166 = scmp.eq.s32.totalorder %s20, 0
    %p167 = por %p165, %p166
    %p168 = scmp.ne.s32.totalorder %s156, %s157
    %p169 = scmp.eq.s32.totalorder %s21, 3
    %p170 = por %p168, %p169
    %p172 = scmp.ne.s32.totalorder %s157, %s171
    %p173 = scmp.eq.s32.totalorder %s21, 0
    %p174 = por %p172, %p173
    %s176 = sadd.s32 %s175, 1
    %p179 = scmp.eq.s32.totalorder %s15, 3
    %p180 = scmp.ne.s32.totalorder %s175, %s177
    %p181 = scmp.eq.s32.totalorder %s15, 0
    %p182 = por %p180, %p181
    %p183 = scmp.ne.s32.totalorder %s175, %s177
    %p184 = scmp.eq.s32.totalorder %s20, 3
    %p185 = por %p183, %p184
    %p186 = scmp.ne.s32.totalorder %s177, %s178
    %p187 = scmp.eq.s32.totalorder %s20, 0
    %p188 = por %p186, %p187
    %p189 = scmp.ne.s32.totalorder %s177, %s178
    %p190 = scmp.eq.s32.totalorder %s21, 3
    %p191 = por %p189, %p190
    %p193 = scmp.ne.s32.totalorder %s178, %s192
    %p194 = scmp.eq.s32.totalorder %s21, 0
    %p195 = por %p193, %p194
    %s196 = ssub.s32 %s15, %s22
    %p197 = scmp.eq.s32.totalorder %s196, 0
    %s199 = sadd.s32 %s198, 1
    %s200 = scalar_select %p197, %s198, %s199
    %p203 = pneg %p197
    %p204 = scmp.eq.s32.totalorder %s15, 3
    %p205 = por %p203, %p204
    %p206 = scmp.ne.s32.totalorder %s198, %s201
    %p207 = scmp.eq.s32.totalorder %s15, 0
    %p208 = por %p206, %p207
    %p209 = scmp.ne.s32.totalorder %s198, %s201
    %p210 = scmp.eq.s32.totalorder %s20, 3
    %p211 = por %p209, %p210
    %p212 = scmp.ne.s32.totalorder %s201, %s202
    %p213 = scmp.eq.s32.totalorder %s20, 0
    %p214 = por %p212, %p213
    %p215 = scmp.ne.s32.totalorder %s201, %s202
    %p216 = scmp.eq.s32.totalorder %s21, 3
    %p217 = por %p215, %p216
    %p219 = scmp.ne.s32.totalorder %s202, %s218
    %p220 = scmp.eq.s32.totalorder %s21, 0
    %p221 = por %p219, %p220
    %s222 = ssub.s32 %s15, %s22
    %p223 = scmp.eq.s32.totalorder %s222, 0
    %s225 = sadd.s32 %s224, 1
    %s226 = scalar_select %p223, %s224, %s225
    %p229 = pneg %p223
    %p230 = scmp.eq.s32.totalorder %s15, 3
    %p231 = por %p229, %p230
    %p232 = scmp.ne.s32.totalorder %s224, %s227
    %p233 = scmp.eq.s32.totalorder %s15, 0
    %p234 = por %p232, %p233
    %p235 = scmp.ne.s32.totalorder %s224, %s227
    %p236 = scmp.eq.s32.totalorder %s20, 3
    %p237 = por %p235, %p236
    %p238 = scmp.ne.s32.totalorder %s227, %s228
    %p239 = scmp.eq.s32.totalorder %s20, 0
    %p240 = por %p238, %p239
    %p241 = scmp.ne.s32.totalorder %s227, %s228
    %p242 = scmp.eq.s32.totalorder %s21, 3
    %p243 = por %p241, %p242
    %p245 = scmp.ne.s32.totalorder %s228, %s244
    %p246 = scmp.eq.s32.totalorder %s21, 0
    %p247 = por %p245, %p246
    %p248 = scmp.le.s32.totalorder 1, %s15
    %p249 = scmp.lt.s32.totalorder %s15, 5
    %p250 = pnand %p248, %p249
    %p251 = pneg %p250
    // Predicated region
    $region9: #{tpu_custom_call.1} parent=5 // pred_check
      _
    $region10: #{tpu_custom_call.1} parent=5 // pred_check_branch
      %253 = sbr.rel (%p250) target = $region12
    $region11: #{tpu_custom_call.1} parent=5 // pred_region
      %s254 = ssub.s32 %s15, 1
      // Predicated region
      $region13: #{tpu_custom_call.1} parent=11 // pred_check
        %p255 = pneg %p62
      $region14: #{tpu_custom_call.1} parent=11 // pred_check_branch
        %257 = sbr.rel (%p255) target = $region16
      $region15: #{tpu_custom_call.1} parent=11 // pred_region
        _
      $region16: #{tpu_custom_call.1} parent=11 // pred_fallthru
        _
      // Predicated region
      $region17: #{tpu_custom_call.1} parent=11 // pred_check
        %p258 = pneg %p83
      $region18: #{tpu_custom_call.1} parent=11 // pred_check_branch
        %260 = sbr.rel (%p258) target = $region20
      $region19: #{tpu_custom_call.1} parent=11 // pred_region
        _
      $region20: #{tpu_custom_call.1} parent=11 // pred_fallthru
        _
      // Predicated region
      $region21: #{tpu_custom_call.1} parent=11 // pred_check
        %p261 = pneg %p104
      $region22: #{tpu_custom_call.1} parent=11 // pred_check_branch
        %263 = sbr.rel (%p261) target = $region24
      $region23: #{tpu_custom_call.1} parent=11 // pred_region
        _
      $region24: #{tpu_custom_call.1} parent=11 // pred_fallthru
        _
      // Predicated region
      $region25: #{tpu_custom_call.1} parent=11 // pred_check
        %p264 = pneg %p125
      $region26: #{tpu_custom_call.1} parent=11 // pred_check_branch
        %266 = sbr.rel (%p264) target = $region28
      $region27: #{tpu_custom_call.1} parent=11 // pred_region
        _
      $region28: #{tpu_custom_call.1} parent=11 // pred_fallthru
        _
      // Predicated region
      $region29: #{tpu_custom_call.1} parent=11 // pred_check
        %p267 = pneg %p146
      $region30: #{tpu_custom_call.1} parent=11 // pred_check_branch
        %269 = sbr.rel (%p267) target = $region32
      $region31: #{tpu_custom_call.1} parent=11 // pred_region
        _
      $region32: #{tpu_custom_call.1} parent=11 // pred_fallthru
        _
      // Predicated region
      $region33: #{tpu_custom_call.1} parent=11 // pred_check
        %p270 = pneg %p167
      $region34: #{tpu_custom_call.1} parent=11 // pred_check_branch
        %272 = sbr.rel (%p270) target = $region36
      $region35: #{tpu_custom_call.1} parent=11 // pred_region
        _
      $region36: #{tpu_custom_call.1} parent=11 // pred_fallthru
        _
      // Predicated region
      $region37: #{tpu_custom_call.1} parent=11 // pred_check
        %p273 = pneg %p188
      $region38: #{tpu_custom_call.1} parent=11 // pred_check_branch
        %275 = sbr.rel (%p273) target = $region40
      $region39: #{tpu_custom_call.1} parent=11 // pred_region
        _
      $region40: #{tpu_custom_call.1} parent=11 // pred_fallthru
        _
    $region12: #{tpu_custom_call.1} parent=5 // pred_fallthru
      _
    %p276 = scmp.lt.s32.totalorder %s15, 4
    // Predicated region
    $region41: #{tpu_custom_call.1} parent=5 // pred_check
      %p277 = pneg %p276
    $region42: #{tpu_custom_call.1} parent=5 // pred_check_branch
      %279 = sbr.rel (%p277) target = $region44
    $region43: #{tpu_custom_call.1} parent=5 // pred_region
      // Predicated region
      $region45: #{tpu_custom_call.1} parent=43 // pred_check
        %p280 = pneg %p35
      $region46: #{tpu_custom_call.1} parent=43 // pred_check_branch
        %282 = sbr.rel (%p280) target = $region48
      $region47: #{tpu_custom_call.1} parent=43 // pred_region
        %p283 = scmp.lt.s32.totalorder %s15, 3
        %s284 = scalar_select %p283, %s15, 3
        %s285 = smul.addr %s284, 54
        %s286 = smul.addr %s285, 4
        %s287 = scalar_lea.vmem %s0, %s286
      $region48: #{tpu_custom_call.1} parent=43 // pred_fallthru
        _
      // Predicated region
      $region49: #{tpu_custom_call.1} parent=43 // pred_check
        %p288 = pneg %p208
      $region50: #{tpu_custom_call.1} parent=43 // pred_check_branch
        %290 = sbr.rel (%p288) target = $region52
      $region51: #{tpu_custom_call.1} parent=43 // pred_region
        %p291 = scmp.lt.s32.totalorder %s15, 3
        %s292 = scalar_select %p291, %s15, 3
        %s293 = smul.addr %s292, 32
        %s294 = smul.addr %s293, 8
        %s295 = scalar_lea.vmem %s8, %s294
      $region52: #{tpu_custom_call.1} parent=43 // pred_fallthru
        _
    $region44: #{tpu_custom_call.1} parent=5 // pred_fallthru
      _
    %p296 = scmp.le.s32.totalorder 1, %s15
    %p297 = scmp.lt.s32.totalorder %s15, 5
    %p298 = pnand %p296, %p297
    %p299 = pneg %p298
    // Predicated region
    $region53: #{tpu_custom_call.1} parent=5 // pred_check
      _
    $region54: #{tpu_custom_call.1} parent=5 // pred_check_branch
      %301 = sbr.rel (%p298) target = $region56
    $region55: #{tpu_custom_call.1} parent=5 // pred_region
      %s302 = ssub.s32 %s15, 1
      %p303 = scmp.lt.s32.totalorder %s20, 3
      %s304 = scalar_select %p303, %s20, 3
      %s305 = smul.addr %s304, 54
      %s306 = smul.addr %s305, 4
      %s307 = scalar_lea.vmem %s0, %s306
      %p308 = pneg %p41
      %p309 = pneg %p38
      %p310 = pneg %p62
      %p311 = pneg %p59
      %p312 = pneg %p83
      %p313 = pneg %p80
      %p314 = pneg %p104
      %p315 = pneg %p101
      %p316 = pneg %p125
      %p317 = pneg %p122
      %p318 = pneg %p146
      %p319 = pneg %p143
      %p320 = pneg %p167
      %p321 = pneg %p164
      %p322 = pneg %p188
      %p323 = pneg %p185
      %p324 = scmp.lt.s32.totalorder %s20, 3
      %s325 = scalar_select %p324, %s20, 3
      %s326 = smul.addr %s325, 32
      %s327 = smul.addr %s326, 8
      %s328 = scalar_lea.vmem %s8, %s327
      %p329 = pneg %p214
      %p330 = pneg %p211
      %p331 = pneg %p240
      %p332 = pneg %p237
      %p333 = scmp.lt.s32.totalorder %s20, 3
      %s334 = scalar_select %p333, %s20, 3
      %s335 = smul.addr %s334, 32
      %s336 = smul.addr %s335, 8
      %s337 = scalar_lea.vmem %s9, %s336
      %p338 = scmp.lt.s32.totalorder %s20, 3
      %s339 = scalar_select %p338, %s20, 3
      %s340 = smul.addr %s339, 54
      %s341 = smul.addr %s340, 4
      %s342 = scalar_lea.vmem %s0, %s341
      %p343 = scmp.lt.s32.totalorder %s20, 3
      %s344 = scalar_select %p343, %s20, 3
      %s345 = smul.addr %s344, 32
      %s346 = smul.addr %s345, 8
      %s347 = scalar_lea.vmem %s8, %s346
      %p348 = scmp.lt.s32.totalorder %s20, 3
      %s349 = scalar_select %p348, %s20, 3
      %s350 = smul.addr %s349, 32
      %s351 = smul.addr %s350, 8
      %s352 = scalar_lea.vmem %s9, %s351
      %v354 = vld [vmem:[%s342] sm:$0xf]
      %v355 = vld [vmem:[%s342 + $0x4] sm:$0xf]
      %v356 = vld [vmem:[%s342 + $0x8] sm:$0xf]
      %v357 = vld [vmem:[%s342 + $0xc] sm:$0xf]
      %v358 = vld [vmem:[%s342 + $0x10] sm:$0xf]
      %v359 = vld [vmem:[%s342 + $0x14] sm:$0xf]
      %v360 = vld [vmem:[%s342 + $0x18] sm:$0xf]
      %v361 = vld [vmem:[%s342 + $0x1c] sm:$0xf]
      %v362 = vld [vmem:[%s342 + $0x20] sm:$0xf]
      %v363 = vld [vmem:[%s342 + $0x24] sm:$0xf]
      %v364 = vld [vmem:[%s342 + $0x28] sm:$0xf]
      %v365 = vld [vmem:[%s342 + $0x2c] sm:$0xf]
      %v366 = vld [vmem:[%s342 + $0x30] sm:$0xf]
      %v367 = vld [vmem:[%s342 + $0x34] sm:$0xf]
      %v368 = vld [vmem:[%s342 + $0x38] sm:$0xf]
      %v369 = vld [vmem:[%s342 + $0x3c] sm:$0xf]
      %v370 = vld [vmem:[%s342 + $0x40] sm:$0xf]
      %v371 = vld [vmem:[%s342 + $0x44] sm:$0xf]
      %v372 = vld [vmem:[%s342 + $0x48] sm:$0xf]
      %v373 = vld [vmem:[%s342 + $0x4c] sm:$0xf]
      %v374 = vld [vmem:[%s342 + $0x50] sm:$0xf]
      %v375 = vld [vmem:[%s342 + $0x54] sm:$0xf]
      %v376 = vld [vmem:[%s342 + $0x58] sm:$0xf]
      %v377 = vld [vmem:[%s342 + $0x5c] sm:$0xf]
      %v378 = vld [vmem:[%s342 + $0x60] sm:$0xf]
      %v379 = vld [vmem:[%s342 + $0x64] sm:$0xf]
      %v380 = vld [vmem:[%s342 + $0x68] sm:$0xf]
      %v381 = vld [vmem:[%s342 + $0x6c] sm:$0xf]
      %v382 = vld [vmem:[%s342 + $0x70] sm:$0xf]
      %v383 = vld [vmem:[%s342 + $0x74] sm:$0xf]
      %v384 = vld [vmem:[%s342 + $0x78] sm:$0xf]
      %v385 = vld [vmem:[%s342 + $0x7c] sm:$0xf]
      %v386 = vld [vmem:[%s342 + $0x80] sm:$0xf]
      %v387 = vld [vmem:[%s342 + $0x84] sm:$0xf]
      %v388 = vld [vmem:[%s342 + $0x88] sm:$0xf]
      %v389 = vld [vmem:[%s342 + $0x8c] sm:$0xf]
      %v390 = vld [vmem:[%s342 + $0x90] sm:$0xf]
      %v391 = vld [vmem:[%s342 + $0x94] sm:$0xf]
      %v392 = vld [vmem:[%s342 + $0x98] sm:$0xf]
      %v393 = vld [vmem:[%s342 + $0x9c] sm:$0xf]
      %v394 = vld [vmem:[%s342 + $0xa0] sm:$0xf]
      %v395 = vld [vmem:[%s342 + $0xa4] sm:$0xf]
      %v396 = vld [vmem:[%s342 + $0xa8] sm:$0xf]
      %v397 = vld [vmem:[%s342 + $0xac] sm:$0xf]
      %v398 = vld [vmem:[%s342 + $0xb0] sm:$0xf]
      %v399 = vld [vmem:[%s342 + $0xb4] sm:$0xf]
      %v400 = vld [vmem:[%s342 + $0xb8] sm:$0xf]
      %v401 = vld [vmem:[%s342 + $0xbc] sm:$0xf]
      %v402 = vld [vmem:[%s342 + $0xc0] sm:$0xf]
      %v403 = vld [vmem:[%s342 + $0xc4] sm:$0xf]
      %v404 = vld [vmem:[%s342 + $0xc8] sm:$0xf]
      %v405 = vld [vmem:[%s342 + $0xcc] sm:$0xf]
      %v406 = vld [vmem:[%s342 + $0xd0] sm:$0xf]
      %v407 = vld [vmem:[%s342 + $0xd4] sm:$0xf]
      %v408 = vld [vmem:[%s1] sm:$0xff]
      %v409 = vld [vmem:[%s1 + $0x8] sm:$0xff]
      %v410 = vld [vmem:[%s1 + $0x10] sm:$0xff]
      %v411 = vld [vmem:[%s1 + $0x18] sm:$0xff]
      %v412 = vld [vmem:[%s1 + $0x20] sm:$0xff]
      %v413 = vld [vmem:[%s1 + $0x28] sm:$0xff]
      %v414 = vld [vmem:[%s1 + $0x30] sm:$0xff]
      %v415 = vld [vmem:[%s1 + $0x38] sm:$0xff]
      %v416 = vld [vmem:[%s1 + $0x40] sm:$0xff]
      %v417 = vld [vmem:[%s1 + $0x48] sm:$0xff]
      %v418 = vld [vmem:[%s1 + $0x50] sm:$0xff]
      %v419 = vld [vmem:[%s1 + $0x58] sm:$0xff]
      %v420 = vld [vmem:[%s1 + $0x60] sm:$0xff]
      %v421 = vld [vmem:[%s1 + $0x68] sm:$0xff]
      %v422 = vld [vmem:[%s1 + $0x70] sm:$0xff]
      %v423 = vld [vmem:[%s1 + $0x78] sm:$0xff]
      %v424 = vld [vmem:[%s1 + $0x80] sm:$0xff]
      %v425 = vld [vmem:[%s1 + $0x88] sm:$0xff]
      %v426 = vld [vmem:[%s1 + $0x90] sm:$0xff]
      %v427 = vld [vmem:[%s1 + $0x98] sm:$0xff]
      %v428 = vld [vmem:[%s1 + $0xa0] sm:$0xff]
      %v429 = vld [vmem:[%s1 + $0xa8] sm:$0xff]
      %v430 = vld [vmem:[%s1 + $0xb0] sm:$0xff]
      %v431 = vld [vmem:[%s1 + $0xb8] sm:$0xff]
      %v432 = vld [vmem:[%s1 + $0xc0] sm:$0xff]
      %v433 = vld [vmem:[%s1 + $0xc8] sm:$0xff]
      %v434 = vld [vmem:[%s1 + $0xd0] sm:$0xff]
      %v435 = vld [vmem:[%s1 + $0xd8] sm:$0xff]
      %v436 = vld [vmem:[%s1 + $0xe0] sm:$0xff]
      %v437 = vld [vmem:[%s1 + $0xe8] sm:$0xff]
      %v438 = vld [vmem:[%s1 + $0xf0] sm:$0xff]
      %v439 = vld [vmem:[%s1 + $0xf8] sm:$0xff]
      %v440 = vld [vmem:[%s1 + $0x100] sm:$0xff]
      %v441 = vld [vmem:[%s1 + $0x108] sm:$0xff]
      %v442 = vld [vmem:[%s1 + $0x110] sm:$0xff]
      %v443 = vld [vmem:[%s1 + $0x118] sm:$0xff]
      %v444 = vld [vmem:[%s1 + $0x120] sm:$0xff]
      %v445 = vld [vmem:[%s1 + $0x128] sm:$0xff]
      %v446 = vld [vmem:[%s1 + $0x130] sm:$0xff]
      %v447 = vld [vmem:[%s1 + $0x138] sm:$0xff]
      %v448 = vld [vmem:[%s1 + $0x140] sm:$0xff]
      %v449 = vld [vmem:[%s1 + $0x148] sm:$0xff]
      %v450 = vld [vmem:[%s1 + $0x150] sm:$0xff]
      %v451 = vld [vmem:[%s1 + $0x158] sm:$0xff]
      %v452 = vld [vmem:[%s1 + $0x160] sm:$0xff]
      %v453 = vld [vmem:[%s1 + $0x168] sm:$0xff]
      %v454 = vld [vmem:[%s1 + $0x170] sm:$0xff]
      %v455 = vld [vmem:[%s1 + $0x178] sm:$0xff]
      %v456 = vld [vmem:[%s1 + $0x180] sm:$0xff]
      %v457 = vld [vmem:[%s1 + $0x188] sm:$0xff]
      %v458 = vld [vmem:[%s1 + $0x190] sm:$0xff]
      %v459 = vld [vmem:[%s1 + $0x198] sm:$0xff]
      %v460 = vld [vmem:[%s1 + $0x1a0] sm:$0xff]
      %v461 = vld [vmem:[%s1 + $0x1a8] sm:$0xff]
      %v462 = vld [vmem:[%s2] sm:$0xff]
      %v463 = vld [vmem:[%s2 + $0x8] sm:$0xff]
      %v464 = vld [vmem:[%s2 + $0x10] sm:$0xff]
      %v465 = vld [vmem:[%s2 + $0x18] sm:$0xff]
      %v466 = vld [vmem:[%s3] sm:$0x3]
      %v467 = vld [vmem:[%s4] sm:$0x3]
      %v468 = vld [vmem:[%s4 + $0x2] sm:$0x3]
      %v469 = vld [vmem:[%s4 + $0x4] sm:$0x3]
      %v470 = vld [vmem:[%s4 + $0x6] sm:$0x3]
      %v471 = vld [vmem:[%s4 + $0x8] sm:$0x3]
      %v472 = vld [vmem:[%s4 + $0xa] sm:$0x3]
      %v473 = vld [vmem:[%s4 + $0xc] sm:$0x3]
      %v474 = vld [vmem:[%s4 + $0xe] sm:$0x3]
      %v475 = vld [vmem:[%s4 + $0x10] sm:$0x3]
      %v476 = vld [vmem:[%s5] sm:$0x3]
      %v477 = vld [vmem:[%s6] sm:$0xf]
      %v478 = vld [vmem:[%s6 + $0x4] sm:$0xf]
      %v479 = vld [vmem:[%s6 + $0x8] sm:$0xf]
      %v480 = vld [vmem:[%s6 + $0xc] sm:$0xf]
      %v481 = vld [vmem:[%s6 + $0x10] sm:$0xf]
      %v482 = vld [vmem:[%s6 + $0x14] sm:$0xf]
      %v483 = vld [vmem:[%s6 + $0x18] sm:$0xf]
      %v484 = vld [vmem:[%s6 + $0x1c] sm:$0xf]
      %v485 = vld [vmem:[%s6 + $0x20] sm:$0xf]
      %v486 = vld [vmem:[%s6 + $0x24] sm:$0xf]
      %v487 = vld [vmem:[%s6 + $0x28] sm:$0xf]
      %v488 = vld [vmem:[%s6 + $0x2c] sm:$0xf]
      %v489 = vld [vmem:[%s6 + $0x30] sm:$0xf]
      %v490 = vld [vmem:[%s6 + $0x34] sm:$0xf]
      %v491 = vld [vmem:[%s6 + $0x38] sm:$0xf]
      %v492 = vld [vmem:[%s6 + $0x3c] sm:$0xf]
      %v493 = vld [vmem:[%s6 + $0x40] sm:$0xf]
      %v494 = vld [vmem:[%s6 + $0x44] sm:$0xf]
      %v495 = vld [vmem:[%s6 + $0x48] sm:$0xf]
      %v496 = vld [vmem:[%s6 + $0x4c] sm:$0xf]
      %v497 = vld [vmem:[%s6 + $0x50] sm:$0xf]
      %v498 = vld [vmem:[%s6 + $0x54] sm:$0xf]
      %v499 = vld [vmem:[%s6 + $0x58] sm:$0xf]
      %v500 = vld [vmem:[%s6 + $0x5c] sm:$0xf]
      %v501 = vld [vmem:[%s7] sm:$0x1]
      %v502 = vld [vmem:[%s347] sm:$0xff]
      %v503 = vld [vmem:[%s347 + $0x8] sm:$0xff]
      %v504 = vld [vmem:[%s347 + $0x10] sm:$0xff]
      %v505 = vld [vmem:[%s347 + $0x18] sm:$0xff]
      %v506 = vld [vmem:[%s347 + $0x20] sm:$0xff]
      %v507 = vld [vmem:[%s347 + $0x28] sm:$0xff]
      %v508 = vld [vmem:[%s347 + $0x30] sm:$0xff]
      %v509 = vld [vmem:[%s347 + $0x38] sm:$0xff]
      %v510 = vld [vmem:[%s347 + $0x40] sm:$0xff]
      %v511 = vld [vmem:[%s347 + $0x48] sm:$0xff]
      %v512 = vld [vmem:[%s347 + $0x50] sm:$0xff]
      %v513 = vld [vmem:[%s347 + $0x58] sm:$0xff]
      %v514 = vld [vmem:[%s347 + $0x60] sm:$0xff]
      %v515 = vld [vmem:[%s347 + $0x68] sm:$0xff]
      %v516 = vld [vmem:[%s347 + $0x70] sm:$0xff]
      %v517 = vld [vmem:[%s347 + $0x78] sm:$0xff]
      %v518 = vld [vmem:[%s347 + $0x80] sm:$0xff]
      %v519 = vld [vmem:[%s347 + $0x88] sm:$0xff]
      %v520 = vld [vmem:[%s347 + $0x90] sm:$0xff]
      %v521 = vld [vmem:[%s347 + $0x98] sm:$0xff]
      %v522 = vld [vmem:[%s347 + $0xa0] sm:$0xff]
      %v523 = vld [vmem:[%s347 + $0xa8] sm:$0xff]
      %v524 = vld [vmem:[%s347 + $0xb0] sm:$0xff]
      %v525 = vld [vmem:[%s347 + $0xb8] sm:$0xff]
      %v526 = vld [vmem:[%s347 + $0xc0] sm:$0xff]
      %v527 = vld [vmem:[%s347 + $0xc8] sm:$0xff]
      %v528 = vld [vmem:[%s347 + $0xd0] sm:$0xff]
      %v529 = vld [vmem:[%s347 + $0xd8] sm:$0xff]
      %v530 = vld [vmem:[%s347 + $0xe0] sm:$0xff]
      %v531 = vld [vmem:[%s347 + $0xe8] sm:$0xff]
      %v532 = vld [vmem:[%s347 + $0xf0] sm:$0xff]
      %v533 = vld [vmem:[%s347 + $0xf8] sm:$0xff]
      %v535 = vperm.slane %v466, 0
      %v536 = vperm.slane %v466, 1
      %v593 = vunpack.c.l.b16 %v354
      %v594 = vunpack.c.l.b16 %v355
      %v595 = vunpack.c.l.b16 %v356
      %v596 = vunpack.c.l.b16 %v357
      %v597 = vunpack.c.l.b16 %v358
      %v598 = vunpack.c.l.b16 %v359
      %v599 = vunpack.c.l.b16 %v360
      %v600 = vunpack.c.l.b16 %v361
      %v601 = vunpack.c.l.b16 %v362
      %v602 = vunpack.c.l.b16 %v363
      %v603 = vunpack.c.l.b16 %v364
      %v604 = vunpack.c.l.b16 %v365
      %v605 = vunpack.c.l.b16 %v366
      %v606 = vunpack.c.l.b16 %v367
      %v607 = vunpack.c.l.b16 %v368
      %v608 = vunpack.c.l.b16 %v369
      %v609 = vunpack.c.l.b16 %v370
      %v610 = vunpack.c.l.b16 %v371
      %v611 = vunpack.c.l.b16 %v372
      %v612 = vunpack.c.l.b16 %v373
      %v613 = vunpack.c.l.b16 %v374
      %v614 = vunpack.c.l.b16 %v375
      %v615 = vunpack.c.l.b16 %v376
      %v616 = vunpack.c.l.b16 %v377
      %v617 = vunpack.c.l.b16 %v378
      %v618 = vunpack.c.l.b16 %v379
      %v619 = vunpack.c.l.b16 %v380
      %v620 = vunpack.c.l.b16 %v381
      %v621 = vunpack.c.l.b16 %v382
      %v622 = vunpack.c.l.b16 %v383
      %v623 = vunpack.c.l.b16 %v384
      %v624 = vunpack.c.l.b16 %v385
      %v625 = vunpack.c.l.b16 %v386
      %v626 = vunpack.c.l.b16 %v387
      %v627 = vunpack.c.l.b16 %v388
      %v628 = vunpack.c.l.b16 %v389
      %v629 = vunpack.c.l.b16 %v390
      %v630 = vunpack.c.l.b16 %v391
      %v631 = vunpack.c.l.b16 %v392
      %v632 = vunpack.c.l.b16 %v393
      %v633 = vunpack.c.l.b16 %v394
      %v634 = vunpack.c.l.b16 %v395
      %v635 = vunpack.c.l.b16 %v396
      %v636 = vunpack.c.l.b16 %v397
      %v637 = vunpack.c.l.b16 %v398
      %v638 = vunpack.c.l.b16 %v399
      %v639 = vunpack.c.l.b16 %v400
      %v640 = vunpack.c.l.b16 %v401
      %v641 = vunpack.c.l.b16 %v402
      %v642 = vunpack.c.l.b16 %v403
      %v643 = vunpack.c.l.b16 %v404
      %v644 = vunpack.c.l.b16 %v405
      %v645 = vunpack.c.l.b16 %v406
      %v646 = vunpack.c.l.b16 %v407
      %v647 = vpack.c.b16 %v594, %v593
      %v648 = vpack.c.b16 %v596, %v595
      %v649 = vpack.c.b16 %v598, %v597
      %v650 = vpack.c.b16 %v600, %v599
      %v651 = vpack.c.b16 %v602, %v601
      %v652 = vpack.c.b16 %v604, %v603
      %v653 = vpack.c.b16 %v606, %v605
      %v654 = vpack.c.b16 %v608, %v607
      %v655 = vpack.c.b16 %v610, %v609
      %v656 = vpack.c.b16 %v612, %v611
      %v657 = vpack.c.b16 %v614, %v613
      %v658 = vpack.c.b16 %v616, %v615
      %v659 = vpack.c.b16 %v618, %v617
      %v660 = vpack.c.b16 %v620, %v619
      %v661 = vpack.c.b16 %v622, %v621
      %v662 = vpack.c.b16 %v624, %v623
      %v663 = vpack.c.b16 %v626, %v625
      %v664 = vpack.c.b16 %v628, %v627
      %v665 = vpack.c.b16 %v630, %v629
      %v666 = vpack.c.b16 %v632, %v631
      %v667 = vpack.c.b16 %v634, %v633
      %v668 = vpack.c.b16 %v636, %v635
      %v669 = vpack.c.b16 %v638, %v637
      %v670 = vpack.c.b16 %v640, %v639
      %v671 = vpack.c.b16 %v642, %v641
      %v672 = vpack.c.b16 %v644, %v643
      %v673 = vpack.c.b16 %v646, %v645
      %v678 = vunpack.c.l.b16 %v462
      %v679 = vunpack.c.h.b16 %v462
      %v680 = vunpack.c.l.b16 %v463
      %v681 = vunpack.c.h.b16 %v463
      %v682 = vunpack.c.l.b16 %v464
      %v683 = vunpack.c.h.b16 %v464
      %v684 = vunpack.c.l.b16 %v465
      %v685 = vunpack.c.h.b16 %v465
      %v686 = vpack.c.b16 %v680, %v678
      %v687 = vpack.c.b16 %v681, %v679
      %v688 = vpack.c.b16 %v684, %v682
      %v689 = vpack.c.b16 %v685, %v683
      %vm694 = vcmask 261120
      %v696 = vsel %vm694, %v647, 0
      %v699 = vsel %vm694, %v648, 0
      %v702 = vsel %vm694, %v649, 0
      %v705 = vsel %vm694, %v650, 0
      %v708 = vsel %vm694, %v651, 0
      %v711 = vsel %vm694, %v652, 0
      %v714 = vsel %vm694, %v653, 0
      %v717 = vsel %vm694, %v654, 0
      %v720 = vsel %vm694, %v655, 0
      %v723 = vsel %vm694, %v656, 0
      %v726 = vsel %vm694, %v657, 0
      %v729 = vsel %vm694, %v658, 0
      %v732 = vsel %vm694, %v659, 0
      %v735 = vsel %vm694, %v660, 0
      %v738 = vsel %vm694, %v661, 0
      %v741 = vsel %vm694, %v662, 0
      %v744 = vsel %vm694, %v663, 0
      %v747 = vsel %vm694, %v664, 0
      %v750 = vsel %vm694, %v665, 0
      %v753 = vsel %vm694, %v666, 0
      %v756 = vsel %vm694, %v667, 0
      %v759 = vsel %vm694, %v668, 0
      %v762 = vsel %vm694, %v669, 0
      %v765 = vsel %vm694, %v670, 0
      %v768 = vsel %vm694, %v671, 0
      %v771 = vsel %vm694, %v672, 0
      %v774 = vsel %vm694, %v673, 0
      %776 = vmatpush.bf16.msra.mxu0 0
      %777 = vmatpush.bf16.msra.mxu0 0
      %778 = vmatpush.bf16.msra.mxu0 0
      %779 = vmatpush.bf16.msra.mxu0 0
      %780 = vmatpush.bf16.msra.mxu0 0
      %781 = vmatpush.bf16.msra.mxu0 0
      %782 = vmatpush.bf16.msra.mxu0 %v688
      %783 = vmatpush.bf16.msra.mxu0 %v686
      %784 = vmatmul.bf16.gmra.mxu0 %v696
      %v785 = vpop.f32.mrf.mxu0
      %v786 = vadd.f32 %v535, %v785
      %v787 = vpop.f32.mrf.mxu0
      %v788 = vadd.f32 %v535, %v787
      %789 = vmatmul.bf16.gmra.mxu0 %v699
      %v790 = vpop.f32.mrf.mxu0
      %v791 = vadd.f32 %v535, %v790
      %v792 = vpop.f32.mrf.mxu0
      %v793 = vadd.f32 %v535, %v792
      %794 = vmatmul.bf16.gmra.mxu0 %v702
      %v795 = vpop.f32.mrf.mxu0
      %v796 = vadd.f32 %v535, %v795
      %v797 = vpop.f32.mrf.mxu0
      %v798 = vadd.f32 %v535, %v797
      %799 = vmatmul.bf16.gmra.mxu0 %v705
      %v800 = vpop.f32.mrf.mxu0
      %v801 = vadd.f32 %v535, %v800
      %v802 = vpop.f32.mrf.mxu0
      %v803 = vadd.f32 %v535, %v802
      %804 = vmatmul.bf16.gmra.mxu0 %v708
      %v805 = vpop.f32.mrf.mxu0
      %v806 = vadd.f32 %v535, %v805
      %v807 = vpop.f32.mrf.mxu0
      %v808 = vadd.f32 %v535, %v807
      %809 = vmatmul.bf16.gmra.mxu0 %v711
      %v810 = vpop.f32.mrf.mxu0
      %v811 = vadd.f32 %v535, %v810
      %v812 = vpop.f32.mrf.mxu0
      %v813 = vadd.f32 %v535, %v812
      %814 = vmatmul.bf16.gmra.mxu0 %v714
      %v815 = vpop.f32.mrf.mxu0
      %v816 = vadd.f32 %v535, %v815
      %v817 = vpop.f32.mrf.mxu0
      %v818 = vadd.f32 %v535, %v817
      %819 = vmatmul.bf16.gmra.mxu0 %v717
      %v820 = vpop.f32.mrf.mxu0
      %v821 = vadd.f32 %v535, %v820
      %v822 = vpop.f32.mrf.mxu0
      %v823 = vadd.f32 %v535, %v822
      %824 = vmatmul.bf16.gmra.mxu0 %v720
      %v825 = vpop.f32.mrf.mxu0
      %v826 = vadd.f32 %v535, %v825
      %v827 = vpop.f32.mrf.mxu0
      %v828 = vadd.f32 %v535, %v827
      %829 = vmatmul.bf16.gmra.mxu0 %v723
      %v830 = vpop.f32.mrf.mxu0
      %v831 = vadd.f32 %v535, %v830
      %v832 = vpop.f32.mrf.mxu0
      %v833 = vadd.f32 %v535, %v832
      %834 = vmatmul.bf16.gmra.mxu0 %v726
      %v835 = vpop.f32.mrf.mxu0
      %v836 = vadd.f32 %v535, %v835
      %v837 = vpop.f32.mrf.mxu0
      %v838 = vadd.f32 %v535, %v837
      %839 = vmatmul.bf16.gmra.mxu0 %v729
      %v840 = vpop.f32.mrf.mxu0
      %v841 = vadd.f32 %v535, %v840
      %v842 = vpop.f32.mrf.mxu0
      %v843 = vadd.f32 %v535, %v842
      %844 = vmatmul.bf16.gmra.mxu0 %v732
      %v845 = vpop.f32.mrf.mxu0
      %v846 = vadd.f32 %v535, %v845
      %v847 = vpop.f32.mrf.mxu0
      %v848 = vadd.f32 %v535, %v847
      %849 = vmatmul.bf16.gmra.mxu0 %v735
      %v850 = vpop.f32.mrf.mxu0
      %v851 = vadd.f32 %v535, %v850
      %v852 = vpop.f32.mrf.mxu0
      %v853 = vadd.f32 %v535, %v852
      %854 = vmatmul.bf16.gmra.mxu0 %v738
      %v855 = vpop.f32.mrf.mxu0
      %v856 = vadd.f32 %v535, %v855
      %v857 = vpop.f32.mrf.mxu0
      %v858 = vadd.f32 %v535, %v857
      %859 = vmatmul.bf16.gmra.mxu0 %v741
      %v860 = vpop.f32.mrf.mxu0
      %v861 = vadd.f32 %v535, %v860
      %v862 = vpop.f32.mrf.mxu0
      %v863 = vadd.f32 %v535, %v862
      %864 = vmatmul.bf16.gmra.mxu0 %v744
      %v865 = vpop.f32.mrf.mxu0
      %v866 = vadd.f32 %v535, %v865
      %v867 = vpop.f32.mrf.mxu0
      %v868 = vadd.f32 %v535, %v867
      %869 = vmatmul.bf16.gmra.mxu0 %v747
      %v870 = vpop.f32.mrf.mxu0
      %v871 = vadd.f32 %v535, %v870
      %v872 = vpop.f32.mrf.mxu0
      %v873 = vadd.f32 %v535, %v872
      %874 = vmatmul.bf16.gmra.mxu0 %v750
      %v875 = vpop.f32.mrf.mxu0
      %v876 = vadd.f32 %v535, %v875
      %v877 = vpop.f32.mrf.mxu0
      %v878 = vadd.f32 %v535, %v877
      %879 = vmatmul.bf16.gmra.mxu0 %v753
      %v880 = vpop.f32.mrf.mxu0
      %v881 = vadd.f32 %v535, %v880
      %v882 = vpop.f32.mrf.mxu0
      %v883 = vadd.f32 %v535, %v882
      %884 = vmatmul.bf16.gmra.mxu0 %v756
      %v885 = vpop.f32.mrf.mxu0
      %v886 = vadd.f32 %v535, %v885
      %v887 = vpop.f32.mrf.mxu0
      %v888 = vadd.f32 %v535, %v887
      %889 = vmatmul.bf16.gmra.mxu0 %v759
      %v890 = vpop.f32.mrf.mxu0
      %v891 = vadd.f32 %v535, %v890
      %v892 = vpop.f32.mrf.mxu0
      %v893 = vadd.f32 %v535, %v892
      %894 = vmatmul.bf16.gmra.mxu0 %v762
      %v895 = vpop.f32.mrf.mxu0
      %v896 = vadd.f32 %v535, %v895
      %v897 = vpop.f32.mrf.mxu0
      %v898 = vadd.f32 %v535, %v897
      %899 = vmatmul.bf16.gmra.mxu0 %v765
      %v900 = vpop.f32.mrf.mxu0
      %v901 = vadd.f32 %v535, %v900
      %v902 = vpop.f32.mrf.mxu0
      %v903 = vadd.f32 %v535, %v902
      %904 = vmatmul.bf16.gmra.mxu0 %v768
      %v905 = vpop.f32.mrf.mxu0
      %v906 = vadd.f32 %v535, %v905
      %v907 = vpop.f32.mrf.mxu0
      %v908 = vadd.f32 %v535, %v907
      %909 = vmatmul.bf16.gmra.mxu0 %v771
      %v910 = vpop.f32.mrf.mxu0
      %v911 = vadd.f32 %v535, %v910
      %v912 = vpop.f32.mrf.mxu0
      %v913 = vadd.f32 %v535, %v912
      %914 = vmatmul.bf16.gmra.mxu0 %v774
      %v915 = vpop.f32.mrf.mxu0
      %v916 = vadd.f32 %v535, %v915
      %v917 = vpop.f32.mrf.mxu0
      %v918 = vadd.f32 %v535, %v917
      %919 = vdwg.mxu0
      %920 = vmatpush.bf16.msra.mxu0 0
      %921 = vmatpush.bf16.msra.mxu0 0
      %922 = vmatpush.bf16.msra.mxu0 0
      %923 = vmatpush.bf16.msra.mxu0 0
      %924 = vmatpush.bf16.msra.mxu0 0
      %925 = vmatpush.bf16.msra.mxu0 0
      %926 = vmatpush.bf16.msra.mxu0 %v689
      %927 = vmatpush.bf16.msra.mxu0 %v687
      %928 = vmatmul.bf16.gmra.mxu0 %v696
      %v929 = vpop.f32.mrf.mxu0
      %v930 = vadd.f32 %v536, %v929
      %v931 = vpop.f32.mrf.mxu0
      %v932 = vadd.f32 %v536, %v931
      %933 = vmatmul.bf16.gmra.mxu0 %v699
      %v934 = vpop.f32.mrf.mxu0
      %v935 = vadd.f32 %v536, %v934
      %v936 = vpop.f32.mrf.mxu0
      %v937 = vadd.f32 %v536, %v936
      %938 = vmatmul.bf16.gmra.mxu0 %v702
      %v939 = vpop.f32.mrf.mxu0
      %v940 = vadd.f32 %v536, %v939
      %v941 = vpop.f32.mrf.mxu0
      %v942 = vadd.f32 %v536, %v941
      %943 = vmatmul.bf16.gmra.mxu0 %v705
      %v944 = vpop.f32.mrf.mxu0
      %v945 = vadd.f32 %v536, %v944
      %v946 = vpop.f32.mrf.mxu0
      %v947 = vadd.f32 %v536, %v946
      %948 = vmatmul.bf16.gmra.mxu0 %v708
      %v949 = vpop.f32.mrf.mxu0
      %v950 = vadd.f32 %v536, %v949
      %v951 = vpop.f32.mrf.mxu0
      %v952 = vadd.f32 %v536, %v951
      %953 = vmatmul.bf16.gmra.mxu0 %v711
      %v954 = vpop.f32.mrf.mxu0
      %v955 = vadd.f32 %v536, %v954
      %v956 = vpop.f32.mrf.mxu0
      %v957 = vadd.f32 %v536, %v956
      %958 = vmatmul.bf16.gmra.mxu0 %v714
      %v959 = vpop.f32.mrf.mxu0
      %v960 = vadd.f32 %v536, %v959
      %v961 = vpop.f32.mrf.mxu0
      %v962 = vadd.f32 %v536, %v961
      %963 = vmatmul.bf16.gmra.mxu0 %v717
      %v964 = vpop.f32.mrf.mxu0
      %v965 = vadd.f32 %v536, %v964
      %v966 = vpop.f32.mrf.mxu0
      %v967 = vadd.f32 %v536, %v966
      %968 = vmatmul.bf16.gmra.mxu0 %v720
      %v969 = vpop.f32.mrf.mxu0
      %v970 = vadd.f32 %v536, %v969
      %v971 = vpop.f32.mrf.mxu0
      %v972 = vadd.f32 %v536, %v971
      %973 = vmatmul.bf16.gmra.mxu0 %v723
      %v974 = vpop.f32.mrf.mxu0
      %v975 = vadd.f32 %v536, %v974
      %v976 = vpop.f32.mrf.mxu0
      %v977 = vadd.f32 %v536, %v976
      %978 = vmatmul.bf16.gmra.mxu0 %v726
      %v979 = vpop.f32.mrf.mxu0
      %v980 = vadd.f32 %v536, %v979
      %v981 = vpop.f32.mrf.mxu0
      %v982 = vadd.f32 %v536, %v981
      %983 = vmatmul.bf16.gmra.mxu0 %v729
      %v984 = vpop.f32.mrf.mxu0
      %v985 = vadd.f32 %v536, %v984
      %v986 = vpop.f32.mrf.mxu0
      %v987 = vadd.f32 %v536, %v986
      %988 = vmatmul.bf16.gmra.mxu0 %v732
      %v989 = vpop.f32.mrf.mxu0
      %v990 = vadd.f32 %v536, %v989
      %v991 = vpop.f32.mrf.mxu0
      %v992 = vadd.f32 %v536, %v991
      %993 = vmatmul.bf16.gmra.mxu0 %v735
      %v994 = vpop.f32.mrf.mxu0
      %v995 = vadd.f32 %v536, %v994
      %v996 = vpop.f32.mrf.mxu0
      %v997 = vadd.f32 %v536, %v996
      %998 = vmatmul.bf16.gmra.mxu0 %v738
      %v999 = vpop.f32.mrf.mxu0
      %v1000 = vadd.f32 %v536, %v999
      %v1001 = vpop.f32.mrf.mxu0
      %v1002 = vadd.f32 %v536, %v1001
      %1003 = vmatmul.bf16.gmra.mxu0 %v741
      %v1004 = vpop.f32.mrf.mxu0
      %v1005 = vadd.f32 %v536, %v1004
      %v1006 = vpop.f32.mrf.mxu0
      %v1007 = vadd.f32 %v536, %v1006
      %1008 = vmatmul.bf16.gmra.mxu0 %v744
      %v1009 = vpop.f32.mrf.mxu0
      %v1010 = vadd.f32 %v536, %v1009
      %v1011 = vpop.f32.mrf.mxu0
      %v1012 = vadd.f32 %v536, %v1011
      %1013 = vmatmul.bf16.gmra.mxu0 %v747
      %v1014 = vpop.f32.mrf.mxu0
      %v1015 = vadd.f32 %v536, %v1014
      %v1016 = vpop.f32.mrf.mxu0
      %v1017 = vadd.f32 %v536, %v1016
      %1018 = vmatmul.bf16.gmra.mxu0 %v750
      %v1019 = vpop.f32.mrf.mxu0
      %v1020 = vadd.f32 %v536, %v1019
      %v1021 = vpop.f32.mrf.mxu0
      %v1022 = vadd.f32 %v536, %v1021
      %1023 = vmatmul.bf16.gmra.mxu0 %v753
      %v1024 = vpop.f32.mrf.mxu0
      %v1025 = vadd.f32 %v536, %v1024
      %v1026 = vpop.f32.mrf.mxu0
      %v1027 = vadd.f32 %v536, %v1026
      %1028 = vmatmul.bf16.gmra.mxu0 %v756
      %v1029 = vpop.f32.mrf.mxu0
      %v1030 = vadd.f32 %v536, %v1029
      %v1031 = vpop.f32.mrf.mxu0
      %v1032 = vadd.f32 %v536, %v1031
      %1033 = vmatmul.bf16.gmra.mxu0 %v759
      %v1034 = vpop.f32.mrf.mxu0
      %v1035 = vadd.f32 %v536, %v1034
      %v1036 = vpop.f32.mrf.mxu0
      %v1037 = vadd.f32 %v536, %v1036
      %1038 = vmatmul.bf16.gmra.mxu0 %v762
      %v1039 = vpop.f32.mrf.mxu0
      %v1040 = vadd.f32 %v536, %v1039
      %v1041 = vpop.f32.mrf.mxu0
      %v1042 = vadd.f32 %v536, %v1041
      %1043 = vmatmul.bf16.gmra.mxu0 %v765
      %v1044 = vpop.f32.mrf.mxu0
      %v1045 = vadd.f32 %v536, %v1044
      %v1046 = vpop.f32.mrf.mxu0
      %v1047 = vadd.f32 %v536, %v1046
      %1048 = vmatmul.bf16.gmra.mxu0 %v768
      %v1049 = vpop.f32.mrf.mxu0
      %v1050 = vadd.f32 %v536, %v1049
      %v1051 = vpop.f32.mrf.mxu0
      %v1052 = vadd.f32 %v536, %v1051
      %1053 = vmatmul.bf16.gmra.mxu0 %v771
      %v1054 = vpop.f32.mrf.mxu0
      %v1055 = vadd.f32 %v536, %v1054
      %v1056 = vpop.f32.mrf.mxu0
      %v1057 = vadd.f32 %v536, %v1056
      %1058 = vmatmul.bf16.gmra.mxu0 %v774
      %v1059 = vpop.f32.mrf.mxu0
      %v1060 = vadd.f32 %v536, %v1059
      %v1061 = vpop.f32.mrf.mxu0
      %v1062 = vadd.f32 %v536, %v1061
      %1063 = vdwg.mxu0
      %v1064 = vmax.f32 %v786, 0.0
      %v1065 = vmax.f32 %v930, 0.0
      %v1066 = vmax.f32 %v788, 0.0
      %v1067 = vmax.f32 %v932, 0.0
      %v1068 = vmax.f32 %v791, 0.0
      %v1069 = vmax.f32 %v935, 0.0
      %v1070 = vmax.f32 %v793, 0.0
      %v1071 = vmax.f32 %v937, 0.0
      %v1072 = vmax.f32 %v796, 0.0
      %v1073 = vmax.f32 %v940, 0.0
      %v1074 = vmax.f32 %v798, 0.0
      %v1075 = vmax.f32 %v942, 0.0
      %v1076 = vmax.f32 %v801, 0.0
      %v1077 = vmax.f32 %v945, 0.0
      %v1078 = vmax.f32 %v803, 0.0
      %v1079 = vmax.f32 %v947, 0.0
      %v1080 = vmax.f32 %v806, 0.0
      %v1081 = vmax.f32 %v950, 0.0
      %v1082 = vmax.f32 %v808, 0.0
      %v1083 = vmax.f32 %v952, 0.0
      %v1084 = vmax.f32 %v811, 0.0
      %v1085 = vmax.f32 %v955, 0.0
      %v1086 = vmax.f32 %v813, 0.0
      %v1087 = vmax.f32 %v957, 0.0
      %v1088 = vmax.f32 %v816, 0.0
      %v1089 = vmax.f32 %v960, 0.0
      %v1090 = vmax.f32 %v818, 0.0
      %v1091 = vmax.f32 %v962, 0.0
      %v1092 = vmax.f32 %v821, 0.0
      %v1093 = vmax.f32 %v965, 0.0
      %v1094 = vmax.f32 %v823, 0.0
      %v1095 = vmax.f32 %v967, 0.0
      %v1096 = vmax.f32 %v826, 0.0
      %v1097 = vmax.f32 %v970, 0.0
      %v1098 = vmax.f32 %v828, 0.0
      %v1099 = vmax.f32 %v972, 0.0
      %v1100 = vmax.f32 %v831, 0.0
      %v1101 = vmax.f32 %v975, 0.0
      %v1102 = vmax.f32 %v833, 0.0
      %v1103 = vmax.f32 %v977, 0.0
      %v1104 = vmax.f32 %v836, 0.0
      %v1105 = vmax.f32 %v980, 0.0
      %v1106 = vmax.f32 %v838, 0.0
      %v1107 = vmax.f32 %v982, 0.0
      %v1108 = vmax.f32 %v841, 0.0
      %v1109 = vmax.f32 %v985, 0.0
      %v1110 = vmax.f32 %v843, 0.0
      %v1111 = vmax.f32 %v987, 0.0
      %v1112 = vmax.f32 %v846, 0.0
      %v1113 = vmax.f32 %v990, 0.0
      %v1114 = vmax.f32 %v848, 0.0
      %v1115 = vmax.f32 %v992, 0.0
      %v1116 = vmax.f32 %v851, 0.0
      %v1117 = vmax.f32 %v995, 0.0
      %v1118 = vmax.f32 %v853, 0.0
      %v1119 = vmax.f32 %v997, 0.0
      %v1120 = vmax.f32 %v856, 0.0
      %v1121 = vmax.f32 %v1000, 0.0
      %v1122 = vmax.f32 %v858, 0.0
      %v1123 = vmax.f32 %v1002, 0.0
      %v1124 = vmax.f32 %v861, 0.0
      %v1125 = vmax.f32 %v1005, 0.0
      %v1126 = vmax.f32 %v863, 0.0
      %v1127 = vmax.f32 %v1007, 0.0
      %v1128 = vmax.f32 %v866, 0.0
      %v1129 = vmax.f32 %v1010, 0.0
      %v1130 = vmax.f32 %v868, 0.0
      %v1131 = vmax.f32 %v1012, 0.0
      %v1132 = vmax.f32 %v871, 0.0
      %v1133 = vmax.f32 %v1015, 0.0
      %v1134 = vmax.f32 %v873, 0.0
      %v1135 = vmax.f32 %v1017, 0.0
      %v1136 = vmax.f32 %v876, 0.0
      %v1137 = vmax.f32 %v1020, 0.0
      %v1138 = vmax.f32 %v878, 0.0
      %v1139 = vmax.f32 %v1022, 0.0
      %v1140 = vmax.f32 %v881, 0.0
      %v1141 = vmax.f32 %v1025, 0.0
      %v1142 = vmax.f32 %v883, 0.0
      %v1143 = vmax.f32 %v1027, 0.0
      %v1144 = vmax.f32 %v886, 0.0
      %v1145 = vmax.f32 %v1030, 0.0
      %v1146 = vmax.f32 %v888, 0.0
      %v1147 = vmax.f32 %v1032, 0.0
      %v1148 = vmax.f32 %v891, 0.0
      %v1149 = vmax.f32 %v1035, 0.0
      %v1150 = vmax.f32 %v893, 0.0
      %v1151 = vmax.f32 %v1037, 0.0
      %v1152 = vmax.f32 %v896, 0.0
      %v1153 = vmax.f32 %v1040, 0.0
      %v1154 = vmax.f32 %v898, 0.0
      %v1155 = vmax.f32 %v1042, 0.0
      %v1156 = vmax.f32 %v901, 0.0
      %v1157 = vmax.f32 %v1045, 0.0
      %v1158 = vmax.f32 %v903, 0.0
      %v1159 = vmax.f32 %v1047, 0.0
      %v1160 = vmax.f32 %v906, 0.0
      %v1161 = vmax.f32 %v1050, 0.0
      %v1162 = vmax.f32 %v908, 0.0
      %v1163 = vmax.f32 %v1052, 0.0
      %v1164 = vmax.f32 %v911, 0.0
      %v1165 = vmax.f32 %v1055, 0.0
      %v1166 = vmax.f32 %v913, 0.0
      %v1167 = vmax.f32 %v1057, 0.0
      %v1168 = vmax.f32 %v916, 0.0
      %v1169 = vmax.f32 %v1060, 0.0
      %v1170 = vmax.f32 %v918, 0.0
      %v1171 = vmax.f32 %v1062, 0.0
      %v1172 = vmin.f32 %v1064, 6.0
      %v1173 = vmin.f32 %v1065, 6.0
      %v1174 = vmin.f32 %v1066, 6.0
      %v1175 = vmin.f32 %v1067, 6.0
      %v1176 = vmin.f32 %v1068, 6.0
      %v1177 = vmin.f32 %v1069, 6.0
      %v1178 = vmin.f32 %v1070, 6.0
      %v1179 = vmin.f32 %v1071, 6.0
      %v1180 = vmin.f32 %v1072, 6.0
      %v1181 = vmin.f32 %v1073, 6.0
      %v1182 = vmin.f32 %v1074, 6.0
      %v1183 = vmin.f32 %v1075, 6.0
      %v1184 = vmin.f32 %v1076, 6.0
      %v1185 = vmin.f32 %v1077, 6.0
      %v1186 = vmin.f32 %v1078, 6.0
      %v1187 = vmin.f32 %v1079, 6.0
      %v1188 = vmin.f32 %v1080, 6.0
      %v1189 = vmin.f32 %v1081, 6.0
      %v1190 = vmin.f32 %v1082, 6.0
      %v1191 = vmin.f32 %v1083, 6.0
      %v1192 = vmin.f32 %v1084, 6.0
      %v1193 = vmin.f32 %v1085, 6.0
      %v1194 = vmin.f32 %v1086, 6.0
      %v1195 = vmin.f32 %v1087, 6.0
      %v1196 = vmin.f32 %v1088, 6.0
      %v1197 = vmin.f32 %v1089, 6.0
      %v1198 = vmin.f32 %v1090, 6.0
      %v1199 = vmin.f32 %v1091, 6.0
      %v1200 = vmin.f32 %v1092, 6.0
      %v1201 = vmin.f32 %v1093, 6.0
      %v1202 = vmin.f32 %v1094, 6.0
      %v1203 = vmin.f32 %v1095, 6.0
      %v1204 = vmin.f32 %v1096, 6.0
      %v1205 = vmin.f32 %v1097, 6.0
      %v1206 = vmin.f32 %v1098, 6.0
      %v1207 = vmin.f32 %v1099, 6.0
      %v1208 = vmin.f32 %v1100, 6.0
      %v1209 = vmin.f32 %v1101, 6.0
      %v1210 = vmin.f32 %v1102, 6.0
      %v1211 = vmin.f32 %v1103, 6.0
      %v1212 = vmin.f32 %v1104, 6.0
      %v1213 = vmin.f32 %v1105, 6.0
      %v1214 = vmin.f32 %v1106, 6.0
      %v1215 = vmin.f32 %v1107, 6.0
      %v1216 = vmin.f32 %v1108, 6.0
      %v1217 = vmin.f32 %v1109, 6.0
      %v1218 = vmin.f32 %v1110, 6.0
      %v1219 = vmin.f32 %v1111, 6.0
      %v1220 = vmin.f32 %v1112, 6.0
      %v1221 = vmin.f32 %v1113, 6.0
      %v1222 = vmin.f32 %v1114, 6.0
      %v1223 = vmin.f32 %v1115, 6.0
      %v1224 = vmin.f32 %v1116, 6.0
      %v1225 = vmin.f32 %v1117, 6.0
      %v1226 = vmin.f32 %v1118, 6.0
      %v1227 = vmin.f32 %v1119, 6.0
      %v1228 = vmin.f32 %v1120, 6.0
      %v1229 = vmin.f32 %v1121, 6.0
      %v1230 = vmin.f32 %v1122, 6.0
      %v1231 = vmin.f32 %v1123, 6.0
      %v1232 = vmin.f32 %v1124, 6.0
      %v1233 = vmin.f32 %v1125, 6.0
      %v1234 = vmin.f32 %v1126, 6.0
      %v1235 = vmin.f32 %v1127, 6.0
      %v1236 = vmin.f32 %v1128, 6.0
      %v1237 = vmin.f32 %v1129, 6.0
      %v1238 = vmin.f32 %v1130, 6.0
      %v1239 = vmin.f32 %v1131, 6.0
      %v1240 = vmin.f32 %v1132, 6.0
      %v1241 = vmin.f32 %v1133, 6.0
      %v1242 = vmin.f32 %v1134, 6.0
      %v1243 = vmin.f32 %v1135, 6.0
      %v1244 = vmin.f32 %v1136, 6.0
      %v1245 = vmin.f32 %v1137, 6.0
      %v1246 = vmin.f32 %v1138, 6.0
      %v1247 = vmin.f32 %v1139, 6.0
      %v1248 = vmin.f32 %v1140, 6.0
      %v1249 = vmin.f32 %v1141, 6.0
      %v1250 = vmin.f32 %v1142, 6.0
      %v1251 = vmin.f32 %v1143, 6.0
      %v1252 = vmin.f32 %v1144, 6.0
      %v1253 = vmin.f32 %v1145, 6.0
      %v1254 = vmin.f32 %v1146, 6.0
      %v1255 = vmin.f32 %v1147, 6.0
      %v1256 = vmin.f32 %v1148, 6.0
      %v1257 = vmin.f32 %v1149, 6.0
      %v1258 = vmin.f32 %v1150, 6.0
      %v1259 = vmin.f32 %v1151, 6.0
      %v1260 = vmin.f32 %v1152, 6.0
      %v1261 = vmin.f32 %v1153, 6.0
      %v1262 = vmin.f32 %v1154, 6.0
      %v1263 = vmin.f32 %v1155, 6.0
      %v1264 = vmin.f32 %v1156, 6.0
      %v1265 = vmin.f32 %v1157, 6.0
      %v1266 = vmin.f32 %v1158, 6.0
      %v1267 = vmin.f32 %v1159, 6.0
      %v1268 = vmin.f32 %v1160, 6.0
      %v1269 = vmin.f32 %v1161, 6.0
      %v1270 = vmin.f32 %v1162, 6.0
      %v1271 = vmin.f32 %v1163, 6.0
      %v1272 = vmin.f32 %v1164, 6.0
      %v1273 = vmin.f32 %v1165, 6.0
      %v1274 = vmin.f32 %v1166, 6.0
      %v1275 = vmin.f32 %v1167, 6.0
      %v1276 = vmin.f32 %v1168, 6.0
      %v1277 = vmin.f32 %v1169, 6.0
      %v1278 = vmin.f32 %v1170, 6.0
      %v1279 = vmin.f32 %v1171, 6.0
      %1281 = vset.pattern.permute.xlu0 0
      %1282 = vperm.xlu0 %1281, %v408
      %v1283 = vpop.permute.xlu0 %1282
      %1286 = vset.pattern.permute.xlu0 0
      %1287 = vperm.xlu0 %1286, %v409
      %v1288 = vpop.permute.xlu0 %1287
      %1291 = vset.pattern.permute.xlu0 0
      %1292 = vperm.xlu0 %1291, %v410
      %v1293 = vpop.permute.xlu0 %1292
      %1296 = vset.pattern.permute.xlu0 0
      %1297 = vperm.xlu0 %1296, %v411
      %v1298 = vpop.permute.xlu0 %1297
      %1301 = vset.pattern.permute.xlu0 0
      %1302 = vperm.xlu0 %1301, %v412
      %v1303 = vpop.permute.xlu0 %1302
      %1306 = vset.pattern.permute.xlu0 0
      %1307 = vperm.xlu0 %1306, %v413
      %v1308 = vpop.permute.xlu0 %1307
      %1311 = vset.pattern.permute.xlu0 0
      %1312 = vperm.xlu0 %1311, %v414
      %v1313 = vpop.permute.xlu0 %1312
      %1316 = vset.pattern.permute.xlu0 0
      %1317 = vperm.xlu0 %1316, %v415
      %v1318 = vpop.permute.xlu0 %1317
      %1321 = vset.pattern.permute.xlu0 0
      %1322 = vperm.xlu0 %1321, %v416
      %v1323 = vpop.permute.xlu0 %1322
      %1326 = vset.pattern.permute.xlu0 0
      %1327 = vperm.xlu0 %1326, %v417
      %v1328 = vpop.permute.xlu0 %1327
      %1331 = vset.pattern.permute.xlu0 0
      %1332 = vperm.xlu0 %1331, %v418
      %v1333 = vpop.permute.xlu0 %1332
      %1336 = vset.pattern.permute.xlu0 0
      %1337 = vperm.xlu0 %1336, %v419
      %v1338 = vpop.permute.xlu0 %1337
      %1341 = vset.pattern.permute.xlu0 0
      %1342 = vperm.xlu0 %1341, %v420
      %v1343 = vpop.permute.xlu0 %1342
      %1346 = vset.pattern.permute.xlu0 0
      %1347 = vperm.xlu0 %1346, %v421
      %v1348 = vpop.permute.xlu0 %1347
      %1351 = vset.pattern.permute.xlu0 0
      %1352 = vperm.xlu0 %1351, %v422
      %v1353 = vpop.permute.xlu0 %1352
      %1356 = vset.pattern.permute.xlu0 0
      %1357 = vperm.xlu0 %1356, %v423
      %v1358 = vpop.permute.xlu0 %1357
      %1361 = vset.pattern.permute.xlu0 0
      %1362 = vperm.xlu0 %1361, %v424
      %v1363 = vpop.permute.xlu0 %1362
      %1366 = vset.pattern.permute.xlu0 0
      %1367 = vperm.xlu0 %1366, %v425
      %v1368 = vpop.permute.xlu0 %1367
      %1371 = vset.pattern.permute.xlu0 0
      %1372 = vperm.xlu0 %1371, %v426
      %v1373 = vpop.permute.xlu0 %1372
      %1376 = vset.pattern.permute.xlu0 0
      %1377 = vperm.xlu0 %1376, %v427
      %v1378 = vpop.permute.xlu0 %1377
      %1381 = vset.pattern.permute.xlu0 0
      %1382 = vperm.xlu0 %1381, %v428
      %v1383 = vpop.permute.xlu0 %1382
      %1386 = vset.pattern.permute.xlu0 0
      %1387 = vperm.xlu0 %1386, %v429
      %v1388 = vpop.permute.xlu0 %1387
      %1391 = vset.pattern.permute.xlu0 0
      %1392 = vperm.xlu0 %1391, %v430
      %v1393 = vpop.permute.xlu0 %1392
      %1396 = vset.pattern.permute.xlu0 0
      %1397 = vperm.xlu0 %1396, %v431
      %v1398 = vpop.permute.xlu0 %1397
      %1401 = vset.pattern.permute.xlu0 0
      %1402 = vperm.xlu0 %1401, %v432
      %v1403 = vpop.permute.xlu0 %1402
      %1406 = vset.pattern.permute.xlu0 0
      %1407 = vperm.xlu0 %1406, %v433
      %v1408 = vpop.permute.xlu0 %1407
      %1411 = vset.pattern.permute.xlu0 0
      %1412 = vperm.xlu0 %1411, %v434
      %v1413 = vpop.permute.xlu0 %1412
      %1416 = vset.pattern.permute.xlu0 0
      %1417 = vperm.xlu0 %1416, %v435
      %v1418 = vpop.permute.xlu0 %1417
      %1421 = vset.pattern.permute.xlu0 0
      %1422 = vperm.xlu0 %1421, %v436
      %v1423 = vpop.permute.xlu0 %1422
      %1426 = vset.pattern.permute.xlu0 0
      %1427 = vperm.xlu0 %1426, %v437
      %v1428 = vpop.permute.xlu0 %1427
      %1431 = vset.pattern.permute.xlu0 0
      %1432 = vperm.xlu0 %1431, %v438
      %v1433 = vpop.permute.xlu0 %1432
      %1436 = vset.pattern.permute.xlu0 0
      %1437 = vperm.xlu0 %1436, %v439
      %v1438 = vpop.permute.xlu0 %1437
      %1441 = vset.pattern.permute.xlu0 0
      %1442 = vperm.xlu0 %1441, %v440
      %v1443 = vpop.permute.xlu0 %1442
      %1446 = vset.pattern.permute.xlu0 0
      %1447 = vperm.xlu0 %1446, %v441
      %v1448 = vpop.permute.xlu0 %1447
      %1451 = vset.pattern.permute.xlu0 0
      %1452 = vperm.xlu0 %1451, %v442
      %v1453 = vpop.permute.xlu0 %1452
      %1456 = vset.pattern.permute.xlu0 0
      %1457 = vperm.xlu0 %1456, %v443
      %v1458 = vpop.permute.xlu0 %1457
      %1461 = vset.pattern.permute.xlu0 0
      %1462 = vperm.xlu0 %1461, %v444
      %v1463 = vpop.permute.xlu0 %1462
      %1466 = vset.pattern.permute.xlu0 0
      %1467 = vperm.xlu0 %1466, %v445
      %v1468 = vpop.permute.xlu0 %1467
      %1471 = vset.pattern.permute.xlu0 0
      %1472 = vperm.xlu0 %1471, %v446
      %v1473 = vpop.permute.xlu0 %1472
      %1476 = vset.pattern.permute.xlu0 0
      %1477 = vperm.xlu0 %1476, %v447
      %v1478 = vpop.permute.xlu0 %1477
      %1481 = vset.pattern.permute.xlu0 0
      %1482 = vperm.xlu0 %1481, %v448
      %v1483 = vpop.permute.xlu0 %1482
      %1486 = vset.pattern.permute.xlu0 0
      %1487 = vperm.xlu0 %1486, %v449
      %v1488 = vpop.permute.xlu0 %1487
      %1491 = vset.pattern.permute.xlu0 0
      %1492 = vperm.xlu0 %1491, %v450
      %v1493 = vpop.permute.xlu0 %1492
      %1496 = vset.pattern.permute.xlu0 0
      %1497 = vperm.xlu0 %1496, %v451
      %v1498 = vpop.permute.xlu0 %1497
      %1501 = vset.pattern.permute.xlu0 0
      %1502 = vperm.xlu0 %1501, %v452
      %v1503 = vpop.permute.xlu0 %1502
      %1506 = vset.pattern.permute.xlu0 0
      %1507 = vperm.xlu0 %1506, %v453
      %v1508 = vpop.permute.xlu0 %1507
      %1511 = vset.pattern.permute.xlu0 0
      %1512 = vperm.xlu0 %1511, %v454
      %v1513 = vpop.permute.xlu0 %1512
      %1516 = vset.pattern.permute.xlu0 0
      %1517 = vperm.xlu0 %1516, %v455
      %v1518 = vpop.permute.xlu0 %1517
      %1521 = vset.pattern.permute.xlu0 0
      %1522 = vperm.xlu0 %1521, %v456
      %v1523 = vpop.permute.xlu0 %1522
      %1526 = vset.pattern.permute.xlu0 0
      %1527 = vperm.xlu0 %1526, %v457
      %v1528 = vpop.permute.xlu0 %1527
      %1531 = vset.pattern.permute.xlu0 0
      %1532 = vperm.xlu0 %1531, %v458
      %v1533 = vpop.permute.xlu0 %1532
      %1536 = vset.pattern.permute.xlu0 0
      %1537 = vperm.xlu0 %1536, %v459
      %v1538 = vpop.permute.xlu0 %1537
      %1541 = vset.pattern.permute.xlu0 0
      %1542 = vperm.xlu0 %1541, %v460
      %v1543 = vpop.permute.xlu0 %1542
      %1546 = vset.pattern.permute.xlu0 0
      %1547 = vperm.xlu0 %1546, %v461
      %v1548 = vpop.permute.xlu0 %1547
      %v1550 = vmul.f32 %v1172, %v1283
      %v1551 = vmul.f32 %v1173, %v1283
      %v1552 = vmul.f32 %v1174, %v1288
      %v1553 = vmul.f32 %v1175, %v1288
      %v1554 = vmul.f32 %v1176, %v1293
      %v1555 = vmul.f32 %v1177, %v1293
      %v1556 = vmul.f32 %v1178, %v1298
      %v1557 = vmul.f32 %v1179, %v1298
      %v1558 = vmul.f32 %v1180, %v1303
      %v1559 = vmul.f32 %v1181, %v1303
      %v1560 = vmul.f32 %v1182, %v1308
      %v1561 = vmul.f32 %v1183, %v1308
      %v1562 = vmul.f32 %v1184, %v1313
      %v1563 = vmul.f32 %v1185, %v1313
      %v1564 = vmul.f32 %v1186, %v1318
      %v1565 = vmul.f32 %v1187, %v1318
      %v1566 = vmul.f32 %v1188, %v1323
      %v1567 = vmul.f32 %v1189, %v1323
      %v1568 = vmul.f32 %v1190, %v1328
      %v1569 = vmul.f32 %v1191, %v1328
      %v1570 = vmul.f32 %v1192, %v1333
      %v1571 = vmul.f32 %v1193, %v1333
      %v1572 = vmul.f32 %v1194, %v1338
      %v1573 = vmul.f32 %v1195, %v1338
      %v1574 = vmul.f32 %v1196, %v1343
      %v1575 = vmul.f32 %v1197, %v1343
      %v1576 = vmul.f32 %v1198, %v1348
      %v1577 = vmul.f32 %v1199, %v1348
      %v1578 = vmul.f32 %v1200, %v1353
      %v1579 = vmul.f32 %v1201, %v1353
      %v1580 = vmul.f32 %v1202, %v1358
      %v1581 = vmul.f32 %v1203, %v1358
      %v1582 = vmul.f32 %v1204, %v1363
      %v1583 = vmul.f32 %v1205, %v1363
      %v1584 = vmul.f32 %v1206, %v1368
      %v1585 = vmul.f32 %v1207, %v1368
      %v1586 = vmul.f32 %v1208, %v1373
      %v1587 = vmul.f32 %v1209, %v1373
      %v1588 = vmul.f32 %v1210, %v1378
      %v1589 = vmul.f32 %v1211, %v1378
      %v1590 = vmul.f32 %v1212, %v1383
      %v1591 = vmul.f32 %v1213, %v1383
      %v1592 = vmul.f32 %v1214, %v1388
      %v1593 = vmul.f32 %v1215, %v1388
      %v1594 = vmul.f32 %v1216, %v1393
      %v1595 = vmul.f32 %v1217, %v1393
      %v1596 = vmul.f32 %v1218, %v1398
      %v1597 = vmul.f32 %v1219, %v1398
      %v1598 = vmul.f32 %v1220, %v1403
      %v1599 = vmul.f32 %v1221, %v1403
      %v1600 = vmul.f32 %v1222, %v1408
      %v1601 = vmul.f32 %v1223, %v1408
      %v1602 = vmul.f32 %v1224, %v1413
      %v1603 = vmul.f32 %v1225, %v1413
      %v1604 = vmul.f32 %v1226, %v1418
      %v1605 = vmul.f32 %v1227, %v1418
      %v1606 = vmul.f32 %v1228, %v1423
      %v1607 = vmul.f32 %v1229, %v1423
      %v1608 = vmul.f32 %v1230, %v1428
      %v1609 = vmul.f32 %v1231, %v1428
      %v1610 = vmul.f32 %v1232, %v1433
      %v1611 = vmul.f32 %v1233, %v1433
      %v1612 = vmul.f32 %v1234, %v1438
      %v1613 = vmul.f32 %v1235, %v1438
      %v1614 = vmul.f32 %v1236, %v1443
      %v1615 = vmul.f32 %v1237, %v1443
      %v1616 = vmul.f32 %v1238, %v1448
      %v1617 = vmul.f32 %v1239, %v1448
      %v1618 = vmul.f32 %v1240, %v1453
      %v1619 = vmul.f32 %v1241, %v1453
      %v1620 = vmul.f32 %v1242, %v1458
      %v1621 = vmul.f32 %v1243, %v1458
      %v1622 = vmul.f32 %v1244, %v1463
      %v1623 = vmul.f32 %v1245, %v1463
      %v1624 = vmul.f32 %v1246, %v1468
      %v1625 = vmul.f32 %v1247, %v1468
      %v1626 = vmul.f32 %v1248, %v1473
      %v1627 = vmul.f32 %v1249, %v1473
      %v1628 = vmul.f32 %v1250, %v1478
      %v1629 = vmul.f32 %v1251, %v1478
      %v1630 = vmul.f32 %v1252, %v1483
      %v1631 = vmul.f32 %v1253, %v1483
      %v1632 = vmul.f32 %v1254, %v1488
      %v1633 = vmul.f32 %v1255, %v1488
      %v1634 = vmul.f32 %v1256, %v1493
      %v1635 = vmul.f32 %v1257, %v1493
      %v1636 = vmul.f32 %v1258, %v1498
      %v1637 = vmul.f32 %v1259, %v1498
      %v1638 = vmul.f32 %v1260, %v1503
      %v1639 = vmul.f32 %v1261, %v1503
      %v1640 = vmul.f32 %v1262, %v1508
      %v1641 = vmul.f32 %v1263, %v1508
      %v1642 = vmul.f32 %v1264, %v1513
      %v1643 = vmul.f32 %v1265, %v1513
      %v1644 = vmul.f32 %v1266, %v1518
      %v1645 = vmul.f32 %v1267, %v1518
      %v1646 = vmul.f32 %v1268, %v1523
      %v1647 = vmul.f32 %v1269, %v1523
      %v1648 = vmul.f32 %v1270, %v1528
      %v1649 = vmul.f32 %v1271, %v1528
      %v1650 = vmul.f32 %v1272, %v1533
      %v1651 = vmul.f32 %v1273, %v1533
      %v1652 = vmul.f32 %v1274, %v1538
      %v1653 = vmul.f32 %v1275, %v1538
      %v1654 = vmul.f32 %v1276, %v1543
      %v1655 = vmul.f32 %v1277, %v1543
      %v1656 = vmul.f32 %v1278, %v1548
      %v1657 = vmul.f32 %v1279, %v1548
      %v1659 = vperm.slane %v467, 0
      %v1660 = vperm.slane %v467, 1
      %v1663 = vmul.f32 %v1550, %v1659
      %v1664 = vmul.f32 %v1551, %v1660
      %v1665 = vmul.f32 %v1552, %v1659
      %v1666 = vmul.f32 %v1553, %v1660
      %v1667 = vmul.f32 %v1556, %v1659
      %v1668 = vmul.f32 %v1557, %v1660
      %v1669 = vmul.f32 %v1558, %v1659
      %v1670 = vmul.f32 %v1559, %v1660
      %v1671 = vmul.f32 %v1562, %v1659
      %v1672 = vmul.f32 %v1563, %v1660
      %v1673 = vmul.f32 %v1564, %v1659
      %v1674 = vmul.f32 %v1565, %v1660
      %v1675 = vmul.f32 %v1568, %v1659
      %v1676 = vmul.f32 %v1569, %v1660
      %v1677 = vmul.f32 %v1570, %v1659
      %v1678 = vmul.f32 %v1571, %v1660
      %v1679 = vmul.f32 %v1574, %v1659
      %v1680 = vmul.f32 %v1575, %v1660
      %v1681 = vmul.f32 %v1576, %v1659
      %v1682 = vmul.f32 %v1577, %v1660
      %v1683 = vmul.f32 %v1580, %v1659
      %v1684 = vmul.f32 %v1581, %v1660
      %v1685 = vmul.f32 %v1582, %v1659
      %v1686 = vmul.f32 %v1583, %v1660
      %v1687 = vmul.f32 %v1586, %v1659
      %v1688 = vmul.f32 %v1587, %v1660
      %v1689 = vmul.f32 %v1588, %v1659
      %v1690 = vmul.f32 %v1589, %v1660
      %v1691 = vmul.f32 %v1592, %v1659
      %v1692 = vmul.f32 %v1593, %v1660
      %v1693 = vmul.f32 %v1594, %v1659
      %v1694 = vmul.f32 %v1595, %v1660
      %v1695 = vmul.f32 %v1598, %v1659
      %v1696 = vmul.f32 %v1599, %v1660
      %v1697 = vmul.f32 %v1600, %v1659
      %v1698 = vmul.f32 %v1601, %v1660
      %v1699 = vmul.f32 %v1604, %v1659
      %v1700 = vmul.f32 %v1605, %v1660
      %v1701 = vmul.f32 %v1606, %v1659
      %v1702 = vmul.f32 %v1607, %v1660
      %v1703 = vmul.f32 %v1610, %v1659
      %v1704 = vmul.f32 %v1611, %v1660
      %v1705 = vmul.f32 %v1612, %v1659
      %v1706 = vmul.f32 %v1613, %v1660
      %v1707 = vmul.f32 %v1616, %v1659
      %v1708 = vmul.f32 %v1617, %v1660
      %v1709 = vmul.f32 %v1618, %v1659
      %v1710 = vmul.f32 %v1619, %v1660
      %v1711 = vmul.f32 %v1622, %v1659
      %v1712 = vmul.f32 %v1623, %v1660
      %v1713 = vmul.f32 %v1624, %v1659
      %v1714 = vmul.f32 %v1625, %v1660
      %v1715 = vmul.f32 %v1628, %v1659
      %v1716 = vmul.f32 %v1629, %v1660
      %v1717 = vmul.f32 %v1630, %v1659
      %v1718 = vmul.f32 %v1631, %v1660
      %v1719 = vmul.f32 %v1634, %v1659
      %v1720 = vmul.f32 %v1635, %v1660
      %v1721 = vmul.f32 %v1636, %v1659
      %v1722 = vmul.f32 %v1637, %v1660
      %v1723 = vmul.f32 %v1640, %v1659
      %v1724 = vmul.f32 %v1641, %v1660
      %v1725 = vmul.f32 %v1642, %v1659
      %v1726 = vmul.f32 %v1643, %v1660
      %v1728 = vperm.slane %v468, 0
      %v1729 = vperm.slane %v468, 1
      %v1732 = vmul.f32 %v1550, %v1728
      %v1733 = vmul.f32 %v1551, %v1729
      %v1734 = vmul.f32 %v1552, %v1728
      %v1735 = vmul.f32 %v1553, %v1729
      %v1736 = vmul.f32 %v1554, %v1728
      %v1737 = vmul.f32 %v1555, %v1729
      %v1738 = vmul.f32 %v1556, %v1728
      %v1739 = vmul.f32 %v1557, %v1729
      %v1740 = vmul.f32 %v1558, %v1728
      %v1741 = vmul.f32 %v1559, %v1729
      %v1742 = vmul.f32 %v1560, %v1728
      %v1743 = vmul.f32 %v1561, %v1729
      %v1744 = vmul.f32 %v1562, %v1728
      %v1745 = vmul.f32 %v1563, %v1729
      %v1746 = vmul.f32 %v1564, %v1728
      %v1747 = vmul.f32 %v1565, %v1729
      %v1748 = vmul.f32 %v1566, %v1728
      %v1749 = vmul.f32 %v1567, %v1729
      %v1750 = vmul.f32 %v1568, %v1728
      %v1751 = vmul.f32 %v1569, %v1729
      %v1752 = vmul.f32 %v1570, %v1728
      %v1753 = vmul.f32 %v1571, %v1729
      %v1754 = vmul.f32 %v1572, %v1728
      %v1755 = vmul.f32 %v1573, %v1729
      %v1756 = vmul.f32 %v1574, %v1728
      %v1757 = vmul.f32 %v1575, %v1729
      %v1758 = vmul.f32 %v1576, %v1728
      %v1759 = vmul.f32 %v1577, %v1729
      %v1760 = vmul.f32 %v1578, %v1728
      %v1761 = vmul.f32 %v1579, %v1729
      %v1762 = vmul.f32 %v1580, %v1728
      %v1763 = vmul.f32 %v1581, %v1729
      %v1764 = vmul.f32 %v1582, %v1728
      %v1765 = vmul.f32 %v1583, %v1729
      %v1766 = vmul.f32 %v1584, %v1728
      %v1767 = vmul.f32 %v1585, %v1729
      %v1768 = vmul.f32 %v1586, %v1728
      %v1769 = vmul.f32 %v1587, %v1729
      %v1770 = vmul.f32 %v1588, %v1728
      %v1771 = vmul.f32 %v1589, %v1729
      %v1772 = vmul.f32 %v1590, %v1728
      %v1773 = vmul.f32 %v1591, %v1729
      %v1774 = vmul.f32 %v1592, %v1728
      %v1775 = vmul.f32 %v1593, %v1729
      %v1776 = vmul.f32 %v1594, %v1728
      %v1777 = vmul.f32 %v1595, %v1729
      %v1778 = vmul.f32 %v1596, %v1728
      %v1779 = vmul.f32 %v1597, %v1729
      %v1780 = vmul.f32 %v1598, %v1728
      %v1781 = vmul.f32 %v1599, %v1729
      %v1782 = vmul.f32 %v1600, %v1728
      %v1783 = vmul.f32 %v1601, %v1729
      %v1784 = vmul.f32 %v1602, %v1728
      %v1785 = vmul.f32 %v1603, %v1729
      %v1786 = vmul.f32 %v1604, %v1728
      %v1787 = vmul.f32 %v1605, %v1729
      %v1788 = vmul.f32 %v1606, %v1728
      %v1789 = vmul.f32 %v1607, %v1729
      %v1790 = vmul.f32 %v1608, %v1728
      %v1791 = vmul.f32 %v1609, %v1729
      %v1792 = vmul.f32 %v1610, %v1728
      %v1793 = vmul.f32 %v1611, %v1729
      %v1794 = vmul.f32 %v1612, %v1728
      %v1795 = vmul.f32 %v1613, %v1729
      %v1796 = vmul.f32 %v1614, %v1728
      %v1797 = vmul.f32 %v1615, %v1729
      %v1798 = vmul.f32 %v1616, %v1728
      %v1799 = vmul.f32 %v1617, %v1729
      %v1800 = vmul.f32 %v1618, %v1728
      %v1801 = vmul.f32 %v1619, %v1729
      %v1802 = vmul.f32 %v1620, %v1728
      %v1803 = vmul.f32 %v1621, %v1729
      %v1804 = vmul.f32 %v1622, %v1728
      %v1805 = vmul.f32 %v1623, %v1729
      %v1806 = vmul.f32 %v1624, %v1728
      %v1807 = vmul.f32 %v1625, %v1729
      %v1808 = vmul.f32 %v1626, %v1728
      %v1809 = vmul.f32 %v1627, %v1729
      %v1810 = vmul.f32 %v1628, %v1728
      %v1811 = vmul.f32 %v1629, %v1729
      %v1812 = vmul.f32 %v1630, %v1728
      %v1813 = vmul.f32 %v1631, %v1729
      %v1814 = vmul.f32 %v1632, %v1728
      %v1815 = vmul.f32 %v1633, %v1729
      %v1816 = vmul.f32 %v1634, %v1728
      %v1817 = vmul.f32 %v1635, %v1729
      %v1818 = vmul.f32 %v1636, %v1728
      %v1819 = vmul.f32 %v1637, %v1729
      %v1820 = vmul.f32 %v1638, %v1728
      %v1821 = vmul.f32 %v1639, %v1729
      %v1822 = vmul.f32 %v1640, %v1728
      %v1823 = vmul.f32 %v1641, %v1729
      %v1824 = vmul.f32 %v1642, %v1728
      %v1825 = vmul.f32 %v1643, %v1729
      %v1826 = vmul.f32 %v1644, %v1728
      %v1827 = vmul.f32 %v1645, %v1729
      %vm1924 = vcmask 1046528
      %v1925 = vrot.slane %v1732, 1
      %v1926 = vrot.slane %v1734, 1
      %v1927 = vsel %vm1924, %v1925, %v1926
      %v1928 = vrot.slane %v1733, 1
      %v1929 = vrot.slane %v1735, 1
      %v1930 = vsel %vm1924, %v1928, %v1929
      %v1931 = vrot.slane %v1736, 1
      %v1932 = vsel %vm1924, %v1926, %v1931
      %v1933 = vrot.slane %v1737, 1
      %v1934 = vsel %vm1924, %v1929, %v1933
      %v1935 = vrot.slane %v1738, 1
      %v1936 = vrot.slane %v1740, 1
      %v1937 = vsel %vm1924, %v1935, %v1936
      %v1938 = vrot.slane %v1739, 1
      %v1939 = vrot.slane %v1741, 1
      %v1940 = vsel %vm1924, %v1938, %v1939
      %v1941 = vrot.slane %v1742, 1
      %v1942 = vsel %vm1924, %v1936, %v1941
      %v1943 = vrot.slane %v1743, 1
      %v1944 = vsel %vm1924, %v1939, %v1943
      %v1945 = vrot.slane %v1744, 1
      %v1946 = vrot.slane %v1746, 1
      %v1947 = vsel %vm1924, %v1945, %v1946
      %v1948 = vrot.slane %v1745, 1
      %v1949 = vrot.slane %v1747, 1
      %v1950 = vsel %vm1924, %v1948, %v1949
      %v1951 = vrot.slane %v1748, 1
      %v1952 = vsel %vm1924, %v1946, %v1951
      %v1953 = vrot.slane %v1749, 1
      %v1954 = vsel %vm1924, %v1949, %v1953
      %v1955 = vrot.slane %v1750, 1
      %v1956 = vrot.slane %v1752, 1
      %v1957 = vsel %vm1924, %v1955, %v1956
      %v1958 = vrot.slane %v1751, 1
      %v1959 = vrot.slane %v1753, 1
      %v1960 = vsel %vm1924, %v1958, %v1959
      %v1961 = vrot.slane %v1754, 1
      %v1962 = vsel %vm1924, %v1956, %v1961
      %v1963 = vrot.slane %v1755, 1
      %v1964 = vsel %vm1924, %v1959, %v1963
      %v1965 = vrot.slane %v1756, 1
      %v1966 = vrot.slane %v1758, 1
      %v1967 = vsel %vm1924, %v1965, %v1966
      %v1968 = vrot.slane %v1757, 1
      %v1969 = vrot.slane %v1759, 1
      %v1970 = vsel %vm1924, %v1968, %v1969
      %v1971 = vrot.slane %v1760, 1
      %v1972 = vsel %vm1924, %v1966, %v1971
      %v1973 = vrot.slane %v1761, 1
      %v1974 = vsel %vm1924, %v1969, %v1973
      %v1975 = vrot.slane %v1762, 1
      %v1976 = vrot.slane %v1764, 1
      %v1977 = vsel %vm1924, %v1975, %v1976
      %v1978 = vrot.slane %v1763, 1
      %v1979 = vrot.slane %v1765, 1
      %v1980 = vsel %vm1924, %v1978, %v1979
      %v1981 = vrot.slane %v1766, 1
      %v1982 = vsel %vm1924, %v1976, %v1981
      %v1983 = vrot.slane %v1767, 1
      %v1984 = vsel %vm1924, %v1979, %v1983
      %v1985 = vrot.slane %v1768, 1
      %v1986 = vrot.slane %v1770, 1
      %v1987 = vsel %vm1924, %v1985, %v1986
      %v1988 = vrot.slane %v1769, 1
      %v1989 = vrot.slane %v1771, 1
      %v1990 = vsel %vm1924, %v1988, %v1989
      %v1991 = vrot.slane %v1772, 1
      %v1992 = vsel %vm1924, %v1986, %v1991
      %v1993 = vrot.slane %v1773, 1
      %v1994 = vsel %vm1924, %v1989, %v1993
      %v1995 = vrot.slane %v1774, 1
      %v1996 = vrot.slane %v1776, 1
      %v1997 = vsel %vm1924, %v1995, %v1996
      %v1998 = vrot.slane %v1775, 1
      %v1999 = vrot.slane %v1777, 1
      %v2000 = vsel %vm1924, %v1998, %v1999
      %v2001 = vrot.slane %v1778, 1
      %v2002 = vsel %vm1924, %v1996, %v2001
      %v2003 = vrot.slane %v1779, 1
      %v2004 = vsel %vm1924, %v1999, %v2003
      %v2005 = vrot.slane %v1780, 1
      %v2006 = vrot.slane %v1782, 1
      %v2007 = vsel %vm1924, %v2005, %v2006
      %v2008 = vrot.slane %v1781, 1
      %v2009 = vrot.slane %v1783, 1
      %v2010 = vsel %vm1924, %v2008, %v2009
      %v2011 = vrot.slane %v1784, 1
      %v2012 = vsel %vm1924, %v2006, %v2011
      %v2013 = vrot.slane %v1785, 1
      %v2014 = vsel %vm1924, %v2009, %v2013
      %v2015 = vrot.slane %v1786, 1
      %v2016 = vrot.slane %v1788, 1
      %v2017 = vsel %vm1924, %v2015, %v2016
      %v2018 = vrot.slane %v1787, 1
      %v2019 = vrot.slane %v1789, 1
      %v2020 = vsel %vm1924, %v2018, %v2019
      %v2021 = vrot.slane %v1790, 1
      %v2022 = vsel %vm1924, %v2016, %v2021
      %v2023 = vrot.slane %v1791, 1
      %v2024 = vsel %vm1924, %v2019, %v2023
      %v2025 = vrot.slane %v1792, 1
      %v2026 = vrot.slane %v1794, 1
      %v2027 = vsel %vm1924, %v2025, %v2026
      %v2028 = vrot.slane %v1793, 1
      %v2029 = vrot.slane %v1795, 1
      %v2030 = vsel %vm1924, %v2028, %v2029
      %v2031 = vrot.slane %v1796, 1
      %v2032 = vsel %vm1924, %v2026, %v2031
      %v2033 = vrot.slane %v1797, 1
      %v2034 = vsel %vm1924, %v2029, %v2033
      %v2035 = vrot.slane %v1798, 1
      %v2036 = vrot.slane %v1800, 1
      %v2037 = vsel %vm1924, %v2035, %v2036
      %v2038 = vrot.slane %v1799, 1
      %v2039 = vrot.slane %v1801, 1
      %v2040 = vsel %vm1924, %v2038, %v2039
      %v2041 = vrot.slane %v1802, 1
      %v2042 = vsel %vm1924, %v2036, %v2041
      %v2043 = vrot.slane %v1803, 1
      %v2044 = vsel %vm1924, %v2039, %v2043
      %v2045 = vrot.slane %v1804, 1
      %v2046 = vrot.slane %v1806, 1
      %v2047 = vsel %vm1924, %v2045, %v2046
      %v2048 = vrot.slane %v1805, 1
      %v2049 = vrot.slane %v1807, 1
      %v2050 = vsel %vm1924, %v2048, %v2049
      %v2051 = vrot.slane %v1808, 1
      %v2052 = vsel %vm1924, %v2046, %v2051
      %v2053 = vrot.slane %v1809, 1
      %v2054 = vsel %vm1924, %v2049, %v2053
      %v2055 = vrot.slane %v1810, 1
      %v2056 = vrot.slane %v1812, 1
      %v2057 = vsel %vm1924, %v2055, %v2056
      %v2058 = vrot.slane %v1811, 1
      %v2059 = vrot.slane %v1813, 1
      %v2060 = vsel %vm1924, %v2058, %v2059
      %v2061 = vrot.slane %v1814, 1
      %v2062 = vsel %vm1924, %v2056, %v2061
      %v2063 = vrot.slane %v1815, 1
      %v2064 = vsel %vm1924, %v2059, %v2063
      %v2065 = vrot.slane %v1816, 1
      %v2066 = vrot.slane %v1818, 1
      %v2067 = vsel %vm1924, %v2065, %v2066
      %v2068 = vrot.slane %v1817, 1
      %v2069 = vrot.slane %v1819, 1
      %v2070 = vsel %vm1924, %v2068, %v2069
      %v2071 = vrot.slane %v1820, 1
      %v2072 = vsel %vm1924, %v2066, %v2071
      %v2073 = vrot.slane %v1821, 1
      %v2074 = vsel %vm1924, %v2069, %v2073
      %v2075 = vrot.slane %v1822, 1
      %v2076 = vrot.slane %v1824, 1
      %v2077 = vsel %vm1924, %v2075, %v2076
      %v2078 = vrot.slane %v1823, 1
      %v2079 = vrot.slane %v1825, 1
      %v2080 = vsel %vm1924, %v2078, %v2079
      %v2081 = vrot.slane %v1826, 1
      %v2082 = vsel %vm1924, %v2076, %v2081
      %v2083 = vrot.slane %v1827, 1
      %v2084 = vsel %vm1924, %v2079, %v2083
      %v2149 = vadd.f32 %v1663, %v1927
      %v2150 = vadd.f32 %v1664, %v1930
      %v2151 = vadd.f32 %v1665, %v1932
      %v2152 = vadd.f32 %v1666, %v1934
      %v2153 = vadd.f32 %v1667, %v1937
      %v2154 = vadd.f32 %v1668, %v1940
      %v2155 = vadd.f32 %v1669, %v1942
      %v2156 = vadd.f32 %v1670, %v1944
      %v2157 = vadd.f32 %v1671, %v1947
      %v2158 = vadd.f32 %v1672, %v1950
      %v2159 = vadd.f32 %v1673, %v1952
      %v2160 = vadd.f32 %v1674, %v1954
      %v2161 = vadd.f32 %v1675, %v1957
      %v2162 = vadd.f32 %v1676, %v1960
      %v2163 = vadd.f32 %v1677, %v1962
      %v2164 = vadd.f32 %v1678, %v1964
      %v2165 = vadd.f32 %v1679, %v1967
      %v2166 = vadd.f32 %v1680, %v1970
      %v2167 = vadd.f32 %v1681, %v1972
      %v2168 = vadd.f32 %v1682, %v1974
      %v2169 = vadd.f32 %v1683, %v1977
      %v2170 = vadd.f32 %v1684, %v1980
      %v2171 = vadd.f32 %v1685, %v1982
      %v2172 = vadd.f32 %v1686, %v1984
      %v2173 = vadd.f32 %v1687, %v1987
      %v2174 = vadd.f32 %v1688, %v1990
      %v2175 = vadd.f32 %v1689, %v1992
      %v2176 = vadd.f32 %v1690, %v1994
      %v2177 = vadd.f32 %v1691, %v1997
      %v2178 = vadd.f32 %v1692, %v2000
      %v2179 = vadd.f32 %v1693, %v2002
      %v2180 = vadd.f32 %v1694, %v2004
      %v2181 = vadd.f32 %v1695, %v2007
      %v2182 = vadd.f32 %v1696, %v2010
      %v2183 = vadd.f32 %v1697, %v2012
      %v2184 = vadd.f32 %v1698, %v2014
      %v2185 = vadd.f32 %v1699, %v2017
      %v2186 = vadd.f32 %v1700, %v2020
      %v2187 = vadd.f32 %v1701, %v2022
      %v2188 = vadd.f32 %v1702, %v2024
      %v2189 = vadd.f32 %v1703, %v2027
      %v2190 = vadd.f32 %v1704, %v2030
      %v2191 = vadd.f32 %v1705, %v2032
      %v2192 = vadd.f32 %v1706, %v2034
      %v2193 = vadd.f32 %v1707, %v2037
      %v2194 = vadd.f32 %v1708, %v2040
      %v2195 = vadd.f32 %v1709, %v2042
      %v2196 = vadd.f32 %v1710, %v2044
      %v2197 = vadd.f32 %v1711, %v2047
      %v2198 = vadd.f32 %v1712, %v2050
      %v2199 = vadd.f32 %v1713, %v2052
      %v2200 = vadd.f32 %v1714, %v2054
      %v2201 = vadd.f32 %v1715, %v2057
      %v2202 = vadd.f32 %v1716, %v2060
      %v2203 = vadd.f32 %v1717, %v2062
      %v2204 = vadd.f32 %v1718, %v2064
      %v2205 = vadd.f32 %v1719, %v2067
      %v2206 = vadd.f32 %v1720, %v2070
      %v2207 = vadd.f32 %v1721, %v2072
      %v2208 = vadd.f32 %v1722, %v2074
      %v2209 = vadd.f32 %v1723, %v2077
      %v2210 = vadd.f32 %v1724, %v2080
      %v2211 = vadd.f32 %v1725, %v2082
      %v2212 = vadd.f32 %v1726, %v2084
      %v2214 = vperm.slane %v469, 0
      %v2215 = vperm.slane %v469, 1
      %v2218 = vmul.f32 %v1550, %v2214
      %v2219 = vmul.f32 %v1551, %v2215
      %v2220 = vmul.f32 %v1552, %v2214
      %v2221 = vmul.f32 %v1553, %v2215
      %v2222 = vmul.f32 %v1554, %v2214
      %v2223 = vmul.f32 %v1555, %v2215
      %v2224 = vmul.f32 %v1556, %v2214
      %v2225 = vmul.f32 %v1557, %v2215
      %v2226 = vmul.f32 %v1558, %v2214
      %v2227 = vmul.f32 %v1559, %v2215
      %v2228 = vmul.f32 %v1560, %v2214
      %v2229 = vmul.f32 %v1561, %v2215
      %v2230 = vmul.f32 %v1562, %v2214
      %v2231 = vmul.f32 %v1563, %v2215
      %v2232 = vmul.f32 %v1564, %v2214
      %v2233 = vmul.f32 %v1565, %v2215
      %v2234 = vmul.f32 %v1566, %v2214
      %v2235 = vmul.f32 %v1567, %v2215
      %v2236 = vmul.f32 %v1568, %v2214
      %v2237 = vmul.f32 %v1569, %v2215
      %v2238 = vmul.f32 %v1570, %v2214
      %v2239 = vmul.f32 %v1571, %v2215
      %v2240 = vmul.f32 %v1572, %v2214
      %v2241 = vmul.f32 %v1573, %v2215
      %v2242 = vmul.f32 %v1574, %v2214
      %v2243 = vmul.f32 %v1575, %v2215
      %v2244 = vmul.f32 %v1576, %v2214
      %v2245 = vmul.f32 %v1577, %v2215
      %v2246 = vmul.f32 %v1578, %v2214
      %v2247 = vmul.f32 %v1579, %v2215
      %v2248 = vmul.f32 %v1580, %v2214
      %v2249 = vmul.f32 %v1581, %v2215
      %v2250 = vmul.f32 %v1582, %v2214
      %v2251 = vmul.f32 %v1583, %v2215
      %v2252 = vmul.f32 %v1584, %v2214
      %v2253 = vmul.f32 %v1585, %v2215
      %v2254 = vmul.f32 %v1586, %v2214
      %v2255 = vmul.f32 %v1587, %v2215
      %v2256 = vmul.f32 %v1588, %v2214
      %v2257 = vmul.f32 %v1589, %v2215
      %v2258 = vmul.f32 %v1590, %v2214
      %v2259 = vmul.f32 %v1591, %v2215
      %v2260 = vmul.f32 %v1592, %v2214
      %v2261 = vmul.f32 %v1593, %v2215
      %v2262 = vmul.f32 %v1594, %v2214
      %v2263 = vmul.f32 %v1595, %v2215
      %v2264 = vmul.f32 %v1596, %v2214
      %v2265 = vmul.f32 %v1597, %v2215
      %v2266 = vmul.f32 %v1598, %v2214
      %v2267 = vmul.f32 %v1599, %v2215
      %v2268 = vmul.f32 %v1600, %v2214
      %v2269 = vmul.f32 %v1601, %v2215
      %v2270 = vmul.f32 %v1602, %v2214
      %v2271 = vmul.f32 %v1603, %v2215
      %v2272 = vmul.f32 %v1604, %v2214
      %v2273 = vmul.f32 %v1605, %v2215
      %v2274 = vmul.f32 %v1606, %v2214
      %v2275 = vmul.f32 %v1607, %v2215
      %v2276 = vmul.f32 %v1608, %v2214
      %v2277 = vmul.f32 %v1609, %v2215
      %v2278 = vmul.f32 %v1610, %v2214
      %v2279 = vmul.f32 %v1611, %v2215
      %v2280 = vmul.f32 %v1612, %v2214
      %v2281 = vmul.f32 %v1613, %v2215
      %v2282 = vmul.f32 %v1614, %v2214
      %v2283 = vmul.f32 %v1615, %v2215
      %v2284 = vmul.f32 %v1616, %v2214
      %v2285 = vmul.f32 %v1617, %v2215
      %v2286 = vmul.f32 %v1618, %v2214
      %v2287 = vmul.f32 %v1619, %v2215
      %v2288 = vmul.f32 %v1620, %v2214
      %v2289 = vmul.f32 %v1621, %v2215
      %v2290 = vmul.f32 %v1622, %v2214
      %v2291 = vmul.f32 %v1623, %v2215
      %v2292 = vmul.f32 %v1624, %v2214
      %v2293 = vmul.f32 %v1625, %v2215
      %v2294 = vmul.f32 %v1626, %v2214
      %v2295 = vmul.f32 %v1627, %v2215
      %v2296 = vmul.f32 %v1628, %v2214
      %v2297 = vmul.f32 %v1629, %v2215
      %v2298 = vmul.f32 %v1630, %v2214
      %v2299 = vmul.f32 %v1631, %v2215
      %v2300 = vmul.f32 %v1632, %v2214
      %v2301 = vmul.f32 %v1633, %v2215
      %v2302 = vmul.f32 %v1634, %v2214
      %v2303 = vmul.f32 %v1635, %v2215
      %v2304 = vmul.f32 %v1636, %v2214
      %v2305 = vmul.f32 %v1637, %v2215
      %v2306 = vmul.f32 %v1638, %v2214
      %v2307 = vmul.f32 %v1639, %v2215
      %v2308 = vmul.f32 %v1640, %v2214
      %v2309 = vmul.f32 %v1641, %v2215
      %v2310 = vmul.f32 %v1642, %v2214
      %v2311 = vmul.f32 %v1643, %v2215
      %v2312 = vmul.f32 %v1644, %v2214
      %v2313 = vmul.f32 %v1645, %v2215
      %vm2410 = vcmask 1045504
      %v2411 = vrot.slane %v2218, 2
      %v2412 = vrot.slane %v2220, 2
      %v2413 = vsel %vm2410, %v2411, %v2412
      %v2414 = vrot.slane %v2219, 2
      %v2415 = vrot.slane %v2221, 2
      %v2416 = vsel %vm2410, %v2414, %v2415
      %v2417 = vrot.slane %v2222, 2
      %v2418 = vsel %vm2410, %v2412, %v2417
      %v2419 = vrot.slane %v2223, 2
      %v2420 = vsel %vm2410, %v2415, %v2419
      %v2421 = vrot.slane %v2224, 2
      %v2422 = vrot.slane %v2226, 2
      %v2423 = vsel %vm2410, %v2421, %v2422
      %v2424 = vrot.slane %v2225, 2
      %v2425 = vrot.slane %v2227, 2
      %v2426 = vsel %vm2410, %v2424, %v2425
      %v2427 = vrot.slane %v2228, 2
      %v2428 = vsel %vm2410, %v2422, %v2427
      %v2429 = vrot.slane %v2229, 2
      %v2430 = vsel %vm2410, %v2425, %v2429
      %v2431 = vrot.slane %v2230, 2
      %v2432 = vrot.slane %v2232, 2
      %v2433 = vsel %vm2410, %v2431, %v2432
      %v2434 = vrot.slane %v2231, 2
      %v2435 = vrot.slane %v2233, 2
      %v2436 = vsel %vm2410, %v2434, %v2435
      %v2437 = vrot.slane %v2234, 2
      %v2438 = vsel %vm2410, %v2432, %v2437
      %v2439 = vrot.slane %v2235, 2
      %v2440 = vsel %vm2410, %v2435, %v2439
      %v2441 = vrot.slane %v2236, 2
      %v2442 = vrot.slane %v2238, 2
      %v2443 = vsel %vm2410, %v2441, %v2442
      %v2444 = vrot.slane %v2237, 2
      %v2445 = vrot.slane %v2239, 2
      %v2446 = vsel %vm2410, %v2444, %v2445
      %v2447 = vrot.slane %v2240, 2
      %v2448 = vsel %vm2410, %v2442, %v2447
      %v2449 = vrot.slane %v2241, 2
      %v2450 = vsel %vm2410, %v2445, %v2449
      %v2451 = vrot.slane %v2242, 2
      %v2452 = vrot.slane %v2244, 2
      %v2453 = vsel %vm2410, %v2451, %v2452
      %v2454 = vrot.slane %v2243, 2
      %v2455 = vrot.slane %v2245, 2
      %v2456 = vsel %vm2410, %v2454, %v2455
      %v2457 = vrot.slane %v2246, 2
      %v2458 = vsel %vm2410, %v2452, %v2457
      %v2459 = vrot.slane %v2247, 2
      %v2460 = vsel %vm2410, %v2455, %v2459
      %v2461 = vrot.slane %v2248, 2
      %v2462 = vrot.slane %v2250, 2
      %v2463 = vsel %vm2410, %v2461, %v2462
      %v2464 = vrot.slane %v2249, 2
      %v2465 = vrot.slane %v2251, 2
      %v2466 = vsel %vm2410, %v2464, %v2465
      %v2467 = vrot.slane %v2252, 2
      %v2468 = vsel %vm2410, %v2462, %v2467
      %v2469 = vrot.slane %v2253, 2
      %v2470 = vsel %vm2410, %v2465, %v2469
      %v2471 = vrot.slane %v2254, 2
      %v2472 = vrot.slane %v2256, 2
      %v2473 = vsel %vm2410, %v2471, %v2472
      %v2474 = vrot.slane %v2255, 2
      %v2475 = vrot.slane %v2257, 2
      %v2476 = vsel %vm2410, %v2474, %v2475
      %v2477 = vrot.slane %v2258, 2
      %v2478 = vsel %vm2410, %v2472, %v2477
      %v2479 = vrot.slane %v2259, 2
      %v2480 = vsel %vm2410, %v2475, %v2479
      %v2481 = vrot.slane %v2260, 2
      %v2482 = vrot.slane %v2262, 2
      %v2483 = vsel %vm2410, %v2481, %v2482
      %v2484 = vrot.slane %v2261, 2
      %v2485 = vrot.slane %v2263, 2
      %v2486 = vsel %vm2410, %v2484, %v2485
      %v2487 = vrot.slane %v2264, 2
      %v2488 = vsel %vm2410, %v2482, %v2487
      %v2489 = vrot.slane %v2265, 2
      %v2490 = vsel %vm2410, %v2485, %v2489
      %v2491 = vrot.slane %v2266, 2
      %v2492 = vrot.slane %v2268, 2
      %v2493 = vsel %vm2410, %v2491, %v2492
      %v2494 = vrot.slane %v2267, 2
      %v2495 = vrot.slane %v2269, 2
      %v2496 = vsel %vm2410, %v2494, %v2495
      %v2497 = vrot.slane %v2270, 2
      %v2498 = vsel %vm2410, %v2492, %v2497
      %v2499 = vrot.slane %v2271, 2
      %v2500 = vsel %vm2410, %v2495, %v2499
      %v2501 = vrot.slane %v2272, 2
      %v2502 = vrot.slane %v2274, 2
      %v2503 = vsel %vm2410, %v2501, %v2502
      %v2504 = vrot.slane %v2273, 2
      %v2505 = vrot.slane %v2275, 2
      %v2506 = vsel %vm2410, %v2504, %v2505
      %v2507 = vrot.slane %v2276, 2
      %v2508 = vsel %vm2410, %v2502, %v2507
      %v2509 = vrot.slane %v2277, 2
      %v2510 = vsel %vm2410, %v2505, %v2509
      %v2511 = vrot.slane %v2278, 2
      %v2512 = vrot.slane %v2280, 2
      %v2513 = vsel %vm2410, %v2511, %v2512
      %v2514 = vrot.slane %v2279, 2
      %v2515 = vrot.slane %v2281, 2
      %v2516 = vsel %vm2410, %v2514, %v2515
      %v2517 = vrot.slane %v2282, 2
      %v2518 = vsel %vm2410, %v2512, %v2517
      %v2519 = vrot.slane %v2283, 2
      %v2520 = vsel %vm2410, %v2515, %v2519
      %v2521 = vrot.slane %v2284, 2
      %v2522 = vrot.slane %v2286, 2
      %v2523 = vsel %vm2410, %v2521, %v2522
      %v2524 = vrot.slane %v2285, 2
      %v2525 = vrot.slane %v2287, 2
      %v2526 = vsel %vm2410, %v2524, %v2525
      %v2527 = vrot.slane %v2288, 2
      %v2528 = vsel %vm2410, %v2522, %v2527
      %v2529 = vrot.slane %v2289, 2
      %v2530 = vsel %vm2410, %v2525, %v2529
      %v2531 = vrot.slane %v2290, 2
      %v2532 = vrot.slane %v2292, 2
      %v2533 = vsel %vm2410, %v2531, %v2532
      %v2534 = vrot.slane %v2291, 2
      %v2535 = vrot.slane %v2293, 2
      %v2536 = vsel %vm2410, %v2534, %v2535
      %v2537 = vrot.slane %v2294, 2
      %v2538 = vsel %vm2410, %v2532, %v2537
      %v2539 = vrot.slane %v2295, 2
      %v2540 = vsel %vm2410, %v2535, %v2539
      %v2541 = vrot.slane %v2296, 2
      %v2542 = vrot.slane %v2298, 2
      %v2543 = vsel %vm2410, %v2541, %v2542
      %v2544 = vrot.slane %v2297, 2
      %v2545 = vrot.slane %v2299, 2
      %v2546 = vsel %vm2410, %v2544, %v2545
      %v2547 = vrot.slane %v2300, 2
      %v2548 = vsel %vm2410, %v2542, %v2547
      %v2549 = vrot.slane %v2301, 2
      %v2550 = vsel %vm2410, %v2545, %v2549
      %v2551 = vrot.slane %v2302, 2
      %v2552 = vrot.slane %v2304, 2
      %v2553 = vsel %vm2410, %v2551, %v2552
      %v2554 = vrot.slane %v2303, 2
      %v2555 = vrot.slane %v2305, 2
      %v2556 = vsel %vm2410, %v2554, %v2555
      %v2557 = vrot.slane %v2306, 2
      %v2558 = vsel %vm2410, %v2552, %v2557
      %v2559 = vrot.slane %v2307, 2
      %v2560 = vsel %vm2410, %v2555, %v2559
      %v2561 = vrot.slane %v2308, 2
      %v2562 = vrot.slane %v2310, 2
      %v2563 = vsel %vm2410, %v2561, %v2562
      %v2564 = vrot.slane %v2309, 2
      %v2565 = vrot.slane %v2311, 2
      %v2566 = vsel %vm2410, %v2564, %v2565
      %v2567 = vrot.slane %v2312, 2
      %v2568 = vsel %vm2410, %v2562, %v2567
      %v2569 = vrot.slane %v2313, 2
      %v2570 = vsel %vm2410, %v2565, %v2569
      %v2635 = vadd.f32 %v2149, %v2413
      %v2636 = vadd.f32 %v2150, %v2416
      %v2637 = vadd.f32 %v2151, %v2418
      %v2638 = vadd.f32 %v2152, %v2420
      %v2639 = vadd.f32 %v2153, %v2423
      %v2640 = vadd.f32 %v2154, %v2426
      %v2641 = vadd.f32 %v2155, %v2428
      %v2642 = vadd.f32 %v2156, %v2430
      %v2643 = vadd.f32 %v2157, %v2433
      %v2644 = vadd.f32 %v2158, %v2436
      %v2645 = vadd.f32 %v2159, %v2438
      %v2646 = vadd.f32 %v2160, %v2440
      %v2647 = vadd.f32 %v2161, %v2443
      %v2648 = vadd.f32 %v2162, %v2446
      %v2649 = vadd.f32 %v2163, %v2448
      %v2650 = vadd.f32 %v2164, %v2450
      %v2651 = vadd.f32 %v2165, %v2453
      %v2652 = vadd.f32 %v2166, %v2456
      %v2653 = vadd.f32 %v2167, %v2458
      %v2654 = vadd.f32 %v2168, %v2460
      %v2655 = vadd.f32 %v2169, %v2463
      %v2656 = vadd.f32 %v2170, %v2466
      %v2657 = vadd.f32 %v2171, %v2468
      %v2658 = vadd.f32 %v2172, %v2470
      %v2659 = vadd.f32 %v2173, %v2473
      %v2660 = vadd.f32 %v2174, %v2476
      %v2661 = vadd.f32 %v2175, %v2478
      %v2662 = vadd.f32 %v2176, %v2480
      %v2663 = vadd.f32 %v2177, %v2483
      %v2664 = vadd.f32 %v2178, %v2486
      %v2665 = vadd.f32 %v2179, %v2488
      %v2666 = vadd.f32 %v2180, %v2490
      %v2667 = vadd.f32 %v2181, %v2493
      %v2668 = vadd.f32 %v2182, %v2496
      %v2669 = vadd.f32 %v2183, %v2498
      %v2670 = vadd.f32 %v2184, %v2500
      %v2671 = vadd.f32 %v2185, %v2503
      %v2672 = vadd.f32 %v2186, %v2506
      %v2673 = vadd.f32 %v2187, %v2508
      %v2674 = vadd.f32 %v2188, %v2510
      %v2675 = vadd.f32 %v2189, %v2513
      %v2676 = vadd.f32 %v2190, %v2516
      %v2677 = vadd.f32 %v2191, %v2518
      %v2678 = vadd.f32 %v2192, %v2520
      %v2679 = vadd.f32 %v2193, %v2523
      %v2680 = vadd.f32 %v2194, %v2526
      %v2681 = vadd.f32 %v2195, %v2528
      %v2682 = vadd.f32 %v2196, %v2530
      %v2683 = vadd.f32 %v2197, %v2533
      %v2684 = vadd.f32 %v2198, %v2536
      %v2685 = vadd.f32 %v2199, %v2538
      %v2686 = vadd.f32 %v2200, %v2540
      %v2687 = vadd.f32 %v2201, %v2543
      %v2688 = vadd.f32 %v2202, %v2546
      %v2689 = vadd.f32 %v2203, %v2548
      %v2690 = vadd.f32 %v2204, %v2550
      %v2691 = vadd.f32 %v2205, %v2553
      %v2692 = vadd.f32 %v2206, %v2556
      %v2693 = vadd.f32 %v2207, %v2558
      %v2694 = vadd.f32 %v2208, %v2560
      %v2695 = vadd.f32 %v2209, %v2563
      %v2696 = vadd.f32 %v2210, %v2566
      %v2697 = vadd.f32 %v2211, %v2568
      %v2698 = vadd.f32 %v2212, %v2570
      %v2700 = vperm.slane %v470, 0
      %v2701 = vperm.slane %v470, 1
      %v2704 = vmul.f32 %v1556, %v2700
      %v2705 = vmul.f32 %v1557, %v2701
      %v2706 = vmul.f32 %v1558, %v2700
      %v2707 = vmul.f32 %v1559, %v2701
      %v2708 = vmul.f32 %v1562, %v2700
      %v2709 = vmul.f32 %v1563, %v2701
      %v2710 = vmul.f32 %v1564, %v2700
      %v2711 = vmul.f32 %v1565, %v2701
      %v2712 = vmul.f32 %v1568, %v2700
      %v2713 = vmul.f32 %v1569, %v2701
      %v2714 = vmul.f32 %v1570, %v2700
      %v2715 = vmul.f32 %v1571, %v2701
      %v2716 = vmul.f32 %v1574, %v2700
      %v2717 = vmul.f32 %v1575, %v2701
      %v2718 = vmul.f32 %v1576, %v2700
      %v2719 = vmul.f32 %v1577, %v2701
      %v2720 = vmul.f32 %v1580, %v2700
      %v2721 = vmul.f32 %v1581, %v2701
      %v2722 = vmul.f32 %v1582, %v2700
      %v2723 = vmul.f32 %v1583, %v2701
      %v2724 = vmul.f32 %v1586, %v2700
      %v2725 = vmul.f32 %v1587, %v2701
      %v2726 = vmul.f32 %v1588, %v2700
      %v2727 = vmul.f32 %v1589, %v2701
      %v2728 = vmul.f32 %v1592, %v2700
      %v2729 = vmul.f32 %v1593, %v2701
      %v2730 = vmul.f32 %v1594, %v2700
      %v2731 = vmul.f32 %v1595, %v2701
      %v2732 = vmul.f32 %v1598, %v2700
      %v2733 = vmul.f32 %v1599, %v2701
      %v2734 = vmul.f32 %v1600, %v2700
      %v2735 = vmul.f32 %v1601, %v2701
      %v2736 = vmul.f32 %v1604, %v2700
      %v2737 = vmul.f32 %v1605, %v2701
      %v2738 = vmul.f32 %v1606, %v2700
      %v2739 = vmul.f32 %v1607, %v2701
      %v2740 = vmul.f32 %v1610, %v2700
      %v2741 = vmul.f32 %v1611, %v2701
      %v2742 = vmul.f32 %v1612, %v2700
      %v2743 = vmul.f32 %v1613, %v2701
      %v2744 = vmul.f32 %v1616, %v2700
      %v2745 = vmul.f32 %v1617, %v2701
      %v2746 = vmul.f32 %v1618, %v2700
      %v2747 = vmul.f32 %v1619, %v2701
      %v2748 = vmul.f32 %v1622, %v2700
      %v2749 = vmul.f32 %v1623, %v2701
      %v2750 = vmul.f32 %v1624, %v2700
      %v2751 = vmul.f32 %v1625, %v2701
      %v2752 = vmul.f32 %v1628, %v2700
      %v2753 = vmul.f32 %v1629, %v2701
      %v2754 = vmul.f32 %v1630, %v2700
      %v2755 = vmul.f32 %v1631, %v2701
      %v2756 = vmul.f32 %v1634, %v2700
      %v2757 = vmul.f32 %v1635, %v2701
      %v2758 = vmul.f32 %v1636, %v2700
      %v2759 = vmul.f32 %v1637, %v2701
      %v2760 = vmul.f32 %v1640, %v2700
      %v2761 = vmul.f32 %v1641, %v2701
      %v2762 = vmul.f32 %v1642, %v2700
      %v2763 = vmul.f32 %v1643, %v2701
      %v2764 = vmul.f32 %v1646, %v2700
      %v2765 = vmul.f32 %v1647, %v2701
      %v2766 = vmul.f32 %v1648, %v2700
      %v2767 = vmul.f32 %v1649, %v2701
      %v2768 = vadd.f32 %v2635, %v2704
      %v2769 = vadd.f32 %v2636, %v2705
      %v2770 = vadd.f32 %v2637, %v2706
      %v2771 = vadd.f32 %v2638, %v2707
      %v2772 = vadd.f32 %v2639, %v2708
      %v2773 = vadd.f32 %v2640, %v2709
      %v2774 = vadd.f32 %v2641, %v2710
      %v2775 = vadd.f32 %v2642, %v2711
      %v2776 = vadd.f32 %v2643, %v2712
      %v2777 = vadd.f32 %v2644, %v2713
      %v2778 = vadd.f32 %v2645, %v2714
      %v2779 = vadd.f32 %v2646, %v2715
      %v2780 = vadd.f32 %v2647, %v2716
      %v2781 = vadd.f32 %v2648, %v2717
      %v2782 = vadd.f32 %v2649, %v2718
      %v2783 = vadd.f32 %v2650, %v2719
      %v2784 = vadd.f32 %v2651, %v2720
      %v2785 = vadd.f32 %v2652, %v2721
      %v2786 = vadd.f32 %v2653, %v2722
      %v2787 = vadd.f32 %v2654, %v2723
      %v2788 = vadd.f32 %v2655, %v2724
      %v2789 = vadd.f32 %v2656, %v2725
      %v2790 = vadd.f32 %v2657, %v2726
      %v2791 = vadd.f32 %v2658, %v2727
      %v2792 = vadd.f32 %v2659, %v2728
      %v2793 = vadd.f32 %v2660, %v2729
      %v2794 = vadd.f32 %v2661, %v2730
      %v2795 = vadd.f32 %v2662, %v2731
      %v2796 = vadd.f32 %v2663, %v2732
      %v2797 = vadd.f32 %v2664, %v2733
      %v2798 = vadd.f32 %v2665, %v2734
      %v2799 = vadd.f32 %v2666, %v2735
      %v2800 = vadd.f32 %v2667, %v2736
      %v2801 = vadd.f32 %v2668, %v2737
      %v2802 = vadd.f32 %v2669, %v2738
      %v2803 = vadd.f32 %v2670, %v2739
      %v2804 = vadd.f32 %v2671, %v2740
      %v2805 = vadd.f32 %v2672, %v2741
      %v2806 = vadd.f32 %v2673, %v2742
      %v2807 = vadd.f32 %v2674, %v2743
      %v2808 = vadd.f32 %v2675, %v2744
      %v2809 = vadd.f32 %v2676, %v2745
      %v2810 = vadd.f32 %v2677, %v2746
      %v2811 = vadd.f32 %v2678, %v2747
      %v2812 = vadd.f32 %v2679, %v2748
      %v2813 = vadd.f32 %v2680, %v2749
      %v2814 = vadd.f32 %v2681, %v2750
      %v2815 = vadd.f32 %v2682, %v2751
      %v2816 = vadd.f32 %v2683, %v2752
      %v2817 = vadd.f32 %v2684, %v2753
      %v2818 = vadd.f32 %v2685, %v2754
      %v2819 = vadd.f32 %v2686, %v2755
      %v2820 = vadd.f32 %v2687, %v2756
      %v2821 = vadd.f32 %v2688, %v2757
      %v2822 = vadd.f32 %v2689, %v2758
      %v2823 = vadd.f32 %v2690, %v2759
      %v2824 = vadd.f32 %v2691, %v2760
      %v2825 = vadd.f32 %v2692, %v2761
      %v2826 = vadd.f32 %v2693, %v2762
      %v2827 = vadd.f32 %v2694, %v2763
      %v2828 = vadd.f32 %v2695, %v2764
      %v2829 = vadd.f32 %v2696, %v2765
      %v2830 = vadd.f32 %v2697, %v2766
      %v2831 = vadd.f32 %v2698, %v2767
      %v2833 = vperm.slane %v471, 0
      %v2834 = vperm.slane %v471, 1
      %v2837 = vmul.f32 %v1556, %v2833
      %v2838 = vmul.f32 %v1557, %v2834
      %v2839 = vmul.f32 %v1558, %v2833
      %v2840 = vmul.f32 %v1559, %v2834
      %v2841 = vmul.f32 %v1560, %v2833
      %v2842 = vmul.f32 %v1561, %v2834
      %v2843 = vmul.f32 %v1562, %v2833
      %v2844 = vmul.f32 %v1563, %v2834
      %v2845 = vmul.f32 %v1564, %v2833
      %v2846 = vmul.f32 %v1565, %v2834
      %v2847 = vmul.f32 %v1566, %v2833
      %v2848 = vmul.f32 %v1567, %v2834
      %v2849 = vmul.f32 %v1568, %v2833
      %v2850 = vmul.f32 %v1569, %v2834
      %v2851 = vmul.f32 %v1570, %v2833
      %v2852 = vmul.f32 %v1571, %v2834
      %v2853 = vmul.f32 %v1572, %v2833
      %v2854 = vmul.f32 %v1573, %v2834
      %v2855 = vmul.f32 %v1574, %v2833
      %v2856 = vmul.f32 %v1575, %v2834
      %v2857 = vmul.f32 %v1576, %v2833
      %v2858 = vmul.f32 %v1577, %v2834
      %v2859 = vmul.f32 %v1578, %v2833
      %v2860 = vmul.f32 %v1579, %v2834
      %v2861 = vmul.f32 %v1580, %v2833
      %v2862 = vmul.f32 %v1581, %v2834
      %v2863 = vmul.f32 %v1582, %v2833
      %v2864 = vmul.f32 %v1583, %v2834
      %v2865 = vmul.f32 %v1584, %v2833
      %v2866 = vmul.f32 %v1585, %v2834
      %v2867 = vmul.f32 %v1586, %v2833
      %v2868 = vmul.f32 %v1587, %v2834
      %v2869 = vmul.f32 %v1588, %v2833
      %v2870 = vmul.f32 %v1589, %v2834
      %v2871 = vmul.f32 %v1590, %v2833
      %v2872 = vmul.f32 %v1591, %v2834
      %v2873 = vmul.f32 %v1592, %v2833
      %v2874 = vmul.f32 %v1593, %v2834
      %v2875 = vmul.f32 %v1594, %v2833
      %v2876 = vmul.f32 %v1595, %v2834
      %v2877 = vmul.f32 %v1596, %v2833
      %v2878 = vmul.f32 %v1597, %v2834
      %v2879 = vmul.f32 %v1598, %v2833
      %v2880 = vmul.f32 %v1599, %v2834
      %v2881 = vmul.f32 %v1600, %v2833
      %v2882 = vmul.f32 %v1601, %v2834
      %v2883 = vmul.f32 %v1602, %v2833
      %v2884 = vmul.f32 %v1603, %v2834
      %v2885 = vmul.f32 %v1604, %v2833
      %v2886 = vmul.f32 %v1605, %v2834
      %v2887 = vmul.f32 %v1606, %v2833
      %v2888 = vmul.f32 %v1607, %v2834
      %v2889 = vmul.f32 %v1608, %v2833
      %v2890 = vmul.f32 %v1609, %v2834
      %v2891 = vmul.f32 %v1610, %v2833
      %v2892 = vmul.f32 %v1611, %v2834
      %v2893 = vmul.f32 %v1612, %v2833
      %v2894 = vmul.f32 %v1613, %v2834
      %v2895 = vmul.f32 %v1614, %v2833
      %v2896 = vmul.f32 %v1615, %v2834
      %v2897 = vmul.f32 %v1616, %v2833
      %v2898 = vmul.f32 %v1617, %v2834
      %v2899 = vmul.f32 %v1618, %v2833
      %v2900 = vmul.f32 %v1619, %v2834
      %v2901 = vmul.f32 %v1620, %v2833
      %v2902 = vmul.f32 %v1621, %v2834
      %v2903 = vmul.f32 %v1622, %v2833
      %v2904 = vmul.f32 %v1623, %v2834
      %v2905 = vmul.f32 %v1624, %v2833
      %v2906 = vmul.f32 %v1625, %v2834
      %v2907 = vmul.f32 %v1626, %v2833
      %v2908 = vmul.f32 %v1627, %v2834
      %v2909 = vmul.f32 %v1628, %v2833
      %v2910 = vmul.f32 %v1629, %v2834
      %v2911 = vmul.f32 %v1630, %v2833
      %v2912 = vmul.f32 %v1631, %v2834
      %v2913 = vmul.f32 %v1632, %v2833
      %v2914 = vmul.f32 %v1633, %v2834
      %v2915 = vmul.f32 %v1634, %v2833
      %v2916 = vmul.f32 %v1635, %v2834
      %v2917 = vmul.f32 %v1636, %v2833
      %v2918 = vmul.f32 %v1637, %v2834
      %v2919 = vmul.f32 %v1638, %v2833
      %v2920 = vmul.f32 %v1639, %v2834
      %v2921 = vmul.f32 %v1640, %v2833
      %v2922 = vmul.f32 %v1641, %v2834
      %v2923 = vmul.f32 %v1642, %v2833
      %v2924 = vmul.f32 %v1643, %v2834
      %v2925 = vmul.f32 %v1644, %v2833
      %v2926 = vmul.f32 %v1645, %v2834
      %v2927 = vmul.f32 %v1646, %v2833
      %v2928 = vmul.f32 %v1647, %v2834
      %v2929 = vmul.f32 %v1648, %v2833
      %v2930 = vmul.f32 %v1649, %v2834
      %v2931 = vmul.f32 %v1650, %v2833
      %v2932 = vmul.f32 %v1651, %v2834
      %v3029 = vrot.slane %v2837, 1
      %v3030 = vrot.slane %v2839, 1
      %v3031 = vsel %vm1924, %v3029, %v3030
      %v3032 = vrot.slane %v2838, 1
      %v3033 = vrot.slane %v2840, 1
      %v3034 = vsel %vm1924, %v3032, %v3033
      %v3035 = vrot.slane %v2841, 1
      %v3036 = vsel %vm1924, %v3030, %v3035
      %v3037 = vrot.slane %v2842, 1
      %v3038 = vsel %vm1924, %v3033, %v3037
      %v3039 = vrot.slane %v2843, 1
      %v3040 = vrot.slane %v2845, 1
      %v3041 = vsel %vm1924, %v3039, %v3040
      %v3042 = vrot.slane %v2844, 1
      %v3043 = vrot.slane %v2846, 1
      %v3044 = vsel %vm1924, %v3042, %v3043
      %v3045 = vrot.slane %v2847, 1
      %v3046 = vsel %vm1924, %v3040, %v3045
      %v3047 = vrot.slane %v2848, 1
      %v3048 = vsel %vm1924, %v3043, %v3047
      %v3049 = vrot.slane %v2849, 1
      %v3050 = vrot.slane %v2851, 1
      %v3051 = vsel %vm1924, %v3049, %v3050
      %v3052 = vrot.slane %v2850, 1
      %v3053 = vrot.slane %v2852, 1
      %v3054 = vsel %vm1924, %v3052, %v3053
      %v3055 = vrot.slane %v2853, 1
      %v3056 = vsel %vm1924, %v3050, %v3055
      %v3057 = vrot.slane %v2854, 1
      %v3058 = vsel %vm1924, %v3053, %v3057
      %v3059 = vrot.slane %v2855, 1
      %v3060 = vrot.slane %v2857, 1
      %v3061 = vsel %vm1924, %v3059, %v3060
      %v3062 = vrot.slane %v2856, 1
      %v3063 = vrot.slane %v2858, 1
      %v3064 = vsel %vm1924, %v3062, %v3063
      %v3065 = vrot.slane %v2859, 1
      %v3066 = vsel %vm1924, %v3060, %v3065
      %v3067 = vrot.slane %v2860, 1
      %v3068 = vsel %vm1924, %v3063, %v3067
      %v3069 = vrot.slane %v2861, 1
      %v3070 = vrot.slane %v2863, 1
      %v3071 = vsel %vm1924, %v3069, %v3070
      %v3072 = vrot.slane %v2862, 1
      %v3073 = vrot.slane %v2864, 1
      %v3074 = vsel %vm1924, %v3072, %v3073
      %v3075 = vrot.slane %v2865, 1
      %v3076 = vsel %vm1924, %v3070, %v3075
      %v3077 = vrot.slane %v2866, 1
      %v3078 = vsel %vm1924, %v3073, %v3077
      %v3079 = vrot.slane %v2867, 1
      %v3080 = vrot.slane %v2869, 1
      %v3081 = vsel %vm1924, %v3079, %v3080
      %v3082 = vrot.slane %v2868, 1
      %v3083 = vrot.slane %v2870, 1
      %v3084 = vsel %vm1924, %v3082, %v3083
      %v3085 = vrot.slane %v2871, 1
      %v3086 = vsel %vm1924, %v3080, %v3085
      %v3087 = vrot.slane %v2872, 1
      %v3088 = vsel %vm1924, %v3083, %v3087
      %v3089 = vrot.slane %v2873, 1
      %v3090 = vrot.slane %v2875, 1
      %v3091 = vsel %vm1924, %v3089, %v3090
      %v3092 = vrot.slane %v2874, 1
      %v3093 = vrot.slane %v2876, 1
      %v3094 = vsel %vm1924, %v3092, %v3093
      %v3095 = vrot.slane %v2877, 1
      %v3096 = vsel %vm1924, %v3090, %v3095
      %v3097 = vrot.slane %v2878, 1
      %v3098 = vsel %vm1924, %v3093, %v3097
      %v3099 = vrot.slane %v2879, 1
      %v3100 = vrot.slane %v2881, 1
      %v3101 = vsel %vm1924, %v3099, %v3100
      %v3102 = vrot.slane %v2880, 1
      %v3103 = vrot.slane %v2882, 1
      %v3104 = vsel %vm1924, %v3102, %v3103
      %v3105 = vrot.slane %v2883, 1
      %v3106 = vsel %vm1924, %v3100, %v3105
      %v3107 = vrot.slane %v2884, 1
      %v3108 = vsel %vm1924, %v3103, %v3107
      %v3109 = vrot.slane %v2885, 1
      %v3110 = vrot.slane %v2887, 1
      %v3111 = vsel %vm1924, %v3109, %v3110
      %v3112 = vrot.slane %v2886, 1
      %v3113 = vrot.slane %v2888, 1
      %v3114 = vsel %vm1924, %v3112, %v3113
      %v3115 = vrot.slane %v2889, 1
      %v3116 = vsel %vm1924, %v3110, %v3115
      %v3117 = vrot.slane %v2890, 1
      %v3118 = vsel %vm1924, %v3113, %v3117
      %v3119 = vrot.slane %v2891, 1
      %v3120 = vrot.slane %v2893, 1
      %v3121 = vsel %vm1924, %v3119, %v3120
      %v3122 = vrot.slane %v2892, 1
      %v3123 = vrot.slane %v2894, 1
      %v3124 = vsel %vm1924, %v3122, %v3123
      %v3125 = vrot.slane %v2895, 1
      %v3126 = vsel %vm1924, %v3120, %v3125
      %v3127 = vrot.slane %v2896, 1
      %v3128 = vsel %vm1924, %v3123, %v3127
      %v3129 = vrot.slane %v2897, 1
      %v3130 = vrot.slane %v2899, 1
      %v3131 = vsel %vm1924, %v3129, %v3130
      %v3132 = vrot.slane %v2898, 1
      %v3133 = vrot.slane %v2900, 1
      %v3134 = vsel %vm1924, %v3132, %v3133
      %v3135 = vrot.slane %v2901, 1
      %v3136 = vsel %vm1924, %v3130, %v3135
      %v3137 = vrot.slane %v2902, 1
      %v3138 = vsel %vm1924, %v3133, %v3137
      %v3139 = vrot.slane %v2903, 1
      %v3140 = vrot.slane %v2905, 1
      %v3141 = vsel %vm1924, %v3139, %v3140
      %v3142 = vrot.slane %v2904, 1
      %v3143 = vrot.slane %v2906, 1
      %v3144 = vsel %vm1924, %v3142, %v3143
      %v3145 = vrot.slane %v2907, 1
      %v3146 = vsel %vm1924, %v3140, %v3145
      %v3147 = vrot.slane %v2908, 1
      %v3148 = vsel %vm1924, %v3143, %v3147
      %v3149 = vrot.slane %v2909, 1
      %v3150 = vrot.slane %v2911, 1
      %v3151 = vsel %vm1924, %v3149, %v3150
      %v3152 = vrot.slane %v2910, 1
      %v3153 = vrot.slane %v2912, 1
      %v3154 = vsel %vm1924, %v3152, %v3153
      %v3155 = vrot.slane %v2913, 1
      %v3156 = vsel %vm1924, %v3150, %v3155
      %v3157 = vrot.slane %v2914, 1
      %v3158 = vsel %vm1924, %v3153, %v3157
      %v3159 = vrot.slane %v2915, 1
      %v3160 = vrot.slane %v2917, 1
      %v3161 = vsel %vm1924, %v3159, %v3160
      %v3162 = vrot.slane %v2916, 1
      %v3163 = vrot.slane %v2918, 1
      %v3164 = vsel %vm1924, %v3162, %v3163
      %v3165 = vrot.slane %v2919, 1
      %v3166 = vsel %vm1924, %v3160, %v3165
      %v3167 = vrot.slane %v2920, 1
      %v3168 = vsel %vm1924, %v3163, %v3167
      %v3169 = vrot.slane %v2921, 1
      %v3170 = vrot.slane %v2923, 1
      %v3171 = vsel %vm1924, %v3169, %v3170
      %v3172 = vrot.slane %v2922, 1
      %v3173 = vrot.slane %v2924, 1
      %v3174 = vsel %vm1924, %v3172, %v3173
      %v3175 = vrot.slane %v2925, 1
      %v3176 = vsel %vm1924, %v3170, %v3175
      %v3177 = vrot.slane %v2926, 1
      %v3178 = vsel %vm1924, %v3173, %v3177
      %v3179 = vrot.slane %v2927, 1
      %v3180 = vrot.slane %v2929, 1
      %v3181 = vsel %vm1924, %v3179, %v3180
      %v3182 = vrot.slane %v2928, 1
      %v3183 = vrot.slane %v2930, 1
      %v3184 = vsel %vm1924, %v3182, %v3183
      %v3185 = vrot.slane %v2931, 1
      %v3186 = vsel %vm1924, %v3180, %v3185
      %v3187 = vrot.slane %v2932, 1
      %v3188 = vsel %vm1924, %v3183, %v3187
      %v3253 = vadd.f32 %v2768, %v3031
      %v3254 = vadd.f32 %v2769, %v3034
      %v3255 = vadd.f32 %v2770, %v3036
      %v3256 = vadd.f32 %v2771, %v3038
      %v3257 = vadd.f32 %v2772, %v3041
      %v3258 = vadd.f32 %v2773, %v3044
      %v3259 = vadd.f32 %v2774, %v3046
      %v3260 = vadd.f32 %v2775, %v3048
      %v3261 = vadd.f32 %v2776, %v3051
      %v3262 = vadd.f32 %v2777, %v3054
      %v3263 = vadd.f32 %v2778, %v3056
      %v3264 = vadd.f32 %v2779, %v3058
      %v3265 = vadd.f32 %v2780, %v3061
      %v3266 = vadd.f32 %v2781, %v3064
      %v3267 = vadd.f32 %v2782, %v3066
      %v3268 = vadd.f32 %v2783, %v3068
      %v3269 = vadd.f32 %v2784, %v3071
      %v3270 = vadd.f32 %v2785, %v3074
      %v3271 = vadd.f32 %v2786, %v3076
      %v3272 = vadd.f32 %v2787, %v3078
      %v3273 = vadd.f32 %v2788, %v3081
      %v3274 = vadd.f32 %v2789, %v3084
      %v3275 = vadd.f32 %v2790, %v3086
      %v3276 = vadd.f32 %v2791, %v3088
      %v3277 = vadd.f32 %v2792, %v3091
      %v3278 = vadd.f32 %v2793, %v3094
      %v3279 = vadd.f32 %v2794, %v3096
      %v3280 = vadd.f32 %v2795, %v3098
      %v3281 = vadd.f32 %v2796, %v3101
      %v3282 = vadd.f32 %v2797, %v3104
      %v3283 = vadd.f32 %v2798, %v3106
      %v3284 = vadd.f32 %v2799, %v3108
      %v3285 = vadd.f32 %v2800, %v3111
      %v3286 = vadd.f32 %v2801, %v3114
      %v3287 = vadd.f32 %v2802, %v3116
      %v3288 = vadd.f32 %v2803, %v3118
      %v3289 = vadd.f32 %v2804, %v3121
      %v3290 = vadd.f32 %v2805, %v3124
      %v3291 = vadd.f32 %v2806, %v3126
      %v3292 = vadd.f32 %v2807, %v3128
      %v3293 = vadd.f32 %v2808, %v3131
      %v3294 = vadd.f32 %v2809, %v3134
      %v3295 = vadd.f32 %v2810, %v3136
      %v3296 = vadd.f32 %v2811, %v3138
      %v3297 = vadd.f32 %v2812, %v3141
      %v3298 = vadd.f32 %v2813, %v3144
      %v3299 = vadd.f32 %v2814, %v3146
      %v3300 = vadd.f32 %v2815, %v3148
      %v3301 = vadd.f32 %v2816, %v3151
      %v3302 = vadd.f32 %v2817, %v3154
      %v3303 = vadd.f32 %v2818, %v3156
      %v3304 = vadd.f32 %v2819, %v3158
      %v3305 = vadd.f32 %v2820, %v3161
      %v3306 = vadd.f32 %v2821, %v3164
      %v3307 = vadd.f32 %v2822, %v3166
      %v3308 = vadd.f32 %v2823, %v3168
      %v3309 = vadd.f32 %v2824, %v3171
      %v3310 = vadd.f32 %v2825, %v3174
      %v3311 = vadd.f32 %v2826, %v3176
      %v3312 = vadd.f32 %v2827, %v3178
      %v3313 = vadd.f32 %v2828, %v3181
      %v3314 = vadd.f32 %v2829, %v3184
      %v3315 = vadd.f32 %v2830, %v3186
      %v3316 = vadd.f32 %v2831, %v3188
      %v3318 = vperm.slane %v472, 0
      %v3319 = vperm.slane %v472, 1
      %v3322 = vmul.f32 %v1556, %v3318
      %v3323 = vmul.f32 %v1557, %v3319
      %v3324 = vmul.f32 %v1558, %v3318
      %v3325 = vmul.f32 %v1559, %v3319
      %v3326 = vmul.f32 %v1560, %v3318
      %v3327 = vmul.f32 %v1561, %v3319
      %v3328 = vmul.f32 %v1562, %v3318
      %v3329 = vmul.f32 %v1563, %v3319
      %v3330 = vmul.f32 %v1564, %v3318
      %v3331 = vmul.f32 %v1565, %v3319
      %v3332 = vmul.f32 %v1566, %v3318
      %v3333 = vmul.f32 %v1567, %v3319
      %v3334 = vmul.f32 %v1568, %v3318
      %v3335 = vmul.f32 %v1569, %v3319
      %v3336 = vmul.f32 %v1570, %v3318
      %v3337 = vmul.f32 %v1571, %v3319
      %v3338 = vmul.f32 %v1572, %v3318
      %v3339 = vmul.f32 %v1573, %v3319
      %v3340 = vmul.f32 %v1574, %v3318
      %v3341 = vmul.f32 %v1575, %v3319
      %v3342 = vmul.f32 %v1576, %v3318
      %v3343 = vmul.f32 %v1577, %v3319
      %v3344 = vmul.f32 %v1578, %v3318
      %v3345 = vmul.f32 %v1579, %v3319
      %v3346 = vmul.f32 %v1580, %v3318
      %v3347 = vmul.f32 %v1581, %v3319
      %v3348 = vmul.f32 %v1582, %v3318
      %v3349 = vmul.f32 %v1583, %v3319
      %v3350 = vmul.f32 %v1584, %v3318
      %v3351 = vmul.f32 %v1585, %v3319
      %v3352 = vmul.f32 %v1586, %v3318
      %v3353 = vmul.f32 %v1587, %v3319
      %v3354 = vmul.f32 %v1588, %v3318
      %v3355 = vmul.f32 %v1589, %v3319
      %v3356 = vmul.f32 %v1590, %v3318
      %v3357 = vmul.f32 %v1591, %v3319
      %v3358 = vmul.f32 %v1592, %v3318
      %v3359 = vmul.f32 %v1593, %v3319
      %v3360 = vmul.f32 %v1594, %v3318
      %v3361 = vmul.f32 %v1595, %v3319
      %v3362 = vmul.f32 %v1596, %v3318
      %v3363 = vmul.f32 %v1597, %v3319
      %v3364 = vmul.f32 %v1598, %v3318
      %v3365 = vmul.f32 %v1599, %v3319
      %v3366 = vmul.f32 %v1600, %v3318
      %v3367 = vmul.f32 %v1601, %v3319
      %v3368 = vmul.f32 %v1602, %v3318
      %v3369 = vmul.f32 %v1603, %v3319
      %v3370 = vmul.f32 %v1604, %v3318
      %v3371 = vmul.f32 %v1605, %v3319
      %v3372 = vmul.f32 %v1606, %v3318
      %v3373 = vmul.f32 %v1607, %v3319
      %v3374 = vmul.f32 %v1608, %v3318
      %v3375 = vmul.f32 %v1609, %v3319
      %v3376 = vmul.f32 %v1610, %v3318
      %v3377 = vmul.f32 %v1611, %v3319
      %v3378 = vmul.f32 %v1612, %v3318
      %v3379 = vmul.f32 %v1613, %v3319
      %v3380 = vmul.f32 %v1614, %v3318
      %v3381 = vmul.f32 %v1615, %v3319
      %v3382 = vmul.f32 %v1616, %v3318
      %v3383 = vmul.f32 %v1617, %v3319
      %v3384 = vmul.f32 %v1618, %v3318
      %v3385 = vmul.f32 %v1619, %v3319
      %v3386 = vmul.f32 %v1620, %v3318
      %v3387 = vmul.f32 %v1621, %v3319
      %v3388 = vmul.f32 %v1622, %v3318
      %v3389 = vmul.f32 %v1623, %v3319
      %v3390 = vmul.f32 %v1624, %v3318
      %v3391 = vmul.f32 %v1625, %v3319
      %v3392 = vmul.f32 %v1626, %v3318
      %v3393 = vmul.f32 %v1627, %v3319
      %v3394 = vmul.f32 %v1628, %v3318
      %v3395 = vmul.f32 %v1629, %v3319
      %v3396 = vmul.f32 %v1630, %v3318
      %v3397 = vmul.f32 %v1631, %v3319
      %v3398 = vmul.f32 %v1632, %v3318
      %v3399 = vmul.f32 %v1633, %v3319
      %v3400 = vmul.f32 %v1634, %v3318
      %v3401 = vmul.f32 %v1635, %v3319
      %v3402 = vmul.f32 %v1636, %v3318
      %v3403 = vmul.f32 %v1637, %v3319
      %v3404 = vmul.f32 %v1638, %v3318
      %v3405 = vmul.f32 %v1639, %v3319
      %v3406 = vmul.f32 %v1640, %v3318
      %v3407 = vmul.f32 %v1641, %v3319
      %v3408 = vmul.f32 %v1642, %v3318
      %v3409 = vmul.f32 %v1643, %v3319
      %v3410 = vmul.f32 %v1644, %v3318
      %v3411 = vmul.f32 %v1645, %v3319
      %v3412 = vmul.f32 %v1646, %v3318
      %v3413 = vmul.f32 %v1647, %v3319
      %v3414 = vmul.f32 %v1648, %v3318
      %v3415 = vmul.f32 %v1649, %v3319
      %v3416 = vmul.f32 %v1650, %v3318
      %v3417 = vmul.f32 %v1651, %v3319
      %v3514 = vrot.slane %v3322, 2
      %v3515 = vrot.slane %v3324, 2
      %v3516 = vsel %vm2410, %v3514, %v3515
      %v3517 = vrot.slane %v3323, 2
      %v3518 = vrot.slane %v3325, 2
      %v3519 = vsel %vm2410, %v3517, %v3518
      %v3520 = vrot.slane %v3326, 2
      %v3521 = vsel %vm2410, %v3515, %v3520
      %v3522 = vrot.slane %v3327, 2
      %v3523 = vsel %vm2410, %v3518, %v3522
      %v3524 = vrot.slane %v3328, 2
      %v3525 = vrot.slane %v3330, 2
      %v3526 = vsel %vm2410, %v3524, %v3525
      %v3527 = vrot.slane %v3329, 2
      %v3528 = vrot.slane %v3331, 2
      %v3529 = vsel %vm2410, %v3527, %v3528
      %v3530 = vrot.slane %v3332, 2
      %v3531 = vsel %vm2410, %v3525, %v3530
      %v3532 = vrot.slane %v3333, 2
      %v3533 = vsel %vm2410, %v3528, %v3532
      %v3534 = vrot.slane %v3334, 2
      %v3535 = vrot.slane %v3336, 2
      %v3536 = vsel %vm2410, %v3534, %v3535
      %v3537 = vrot.slane %v3335, 2
      %v3538 = vrot.slane %v3337, 2
      %v3539 = vsel %vm2410, %v3537, %v3538
      %v3540 = vrot.slane %v3338, 2
      %v3541 = vsel %vm2410, %v3535, %v3540
      %v3542 = vrot.slane %v3339, 2
      %v3543 = vsel %vm2410, %v3538, %v3542
      %v3544 = vrot.slane %v3340, 2
      %v3545 = vrot.slane %v3342, 2
      %v3546 = vsel %vm2410, %v3544, %v3545
      %v3547 = vrot.slane %v3341, 2
      %v3548 = vrot.slane %v3343, 2
      %v3549 = vsel %vm2410, %v3547, %v3548
      %v3550 = vrot.slane %v3344, 2
      %v3551 = vsel %vm2410, %v3545, %v3550
      %v3552 = vrot.slane %v3345, 2
      %v3553 = vsel %vm2410, %v3548, %v3552
      %v3554 = vrot.slane %v3346, 2
      %v3555 = vrot.slane %v3348, 2
      %v3556 = vsel %vm2410, %v3554, %v3555
      %v3557 = vrot.slane %v3347, 2
      %v3558 = vrot.slane %v3349, 2
      %v3559 = vsel %vm2410, %v3557, %v3558
      %v3560 = vrot.slane %v3350, 2
      %v3561 = vsel %vm2410, %v3555, %v3560
      %v3562 = vrot.slane %v3351, 2
      %v3563 = vsel %vm2410, %v3558, %v3562
      %v3564 = vrot.slane %v3352, 2
      %v3565 = vrot.slane %v3354, 2
      %v3566 = vsel %vm2410, %v3564, %v3565
      %v3567 = vrot.slane %v3353, 2
      %v3568 = vrot.slane %v3355, 2
      %v3569 = vsel %vm2410, %v3567, %v3568
      %v3570 = vrot.slane %v3356, 2
      %v3571 = vsel %vm2410, %v3565, %v3570
      %v3572 = vrot.slane %v3357, 2
      %v3573 = vsel %vm2410, %v3568, %v3572
      %v3574 = vrot.slane %v3358, 2
      %v3575 = vrot.slane %v3360, 2
      %v3576 = vsel %vm2410, %v3574, %v3575
      %v3577 = vrot.slane %v3359, 2
      %v3578 = vrot.slane %v3361, 2
      %v3579 = vsel %vm2410, %v3577, %v3578
      %v3580 = vrot.slane %v3362, 2
      %v3581 = vsel %vm2410, %v3575, %v3580
      %v3582 = vrot.slane %v3363, 2
      %v3583 = vsel %vm2410, %v3578, %v3582
      %v3584 = vrot.slane %v3364, 2
      %v3585 = vrot.slane %v3366, 2
      %v3586 = vsel %vm2410, %v3584, %v3585
      %v3587 = vrot.slane %v3365, 2
      %v3588 = vrot.slane %v3367, 2
      %v3589 = vsel %vm2410, %v3587, %v3588
      %v3590 = vrot.slane %v3368, 2
      %v3591 = vsel %vm2410, %v3585, %v3590
      %v3592 = vrot.slane %v3369, 2
      %v3593 = vsel %vm2410, %v3588, %v3592
      %v3594 = vrot.slane %v3370, 2
      %v3595 = vrot.slane %v3372, 2
      %v3596 = vsel %vm2410, %v3594, %v3595
      %v3597 = vrot.slane %v3371, 2
      %v3598 = vrot.slane %v3373, 2
      %v3599 = vsel %vm2410, %v3597, %v3598
      %v3600 = vrot.slane %v3374, 2
      %v3601 = vsel %vm2410, %v3595, %v3600
      %v3602 = vrot.slane %v3375, 2
      %v3603 = vsel %vm2410, %v3598, %v3602
      %v3604 = vrot.slane %v3376, 2
      %v3605 = vrot.slane %v3378, 2
      %v3606 = vsel %vm2410, %v3604, %v3605
      %v3607 = vrot.slane %v3377, 2
      %v3608 = vrot.slane %v3379, 2
      %v3609 = vsel %vm2410, %v3607, %v3608
      %v3610 = vrot.slane %v3380, 2
      %v3611 = vsel %vm2410, %v3605, %v3610
      %v3612 = vrot.slane %v3381, 2
      %v3613 = vsel %vm2410, %v3608, %v3612
      %v3614 = vrot.slane %v3382, 2
      %v3615 = vrot.slane %v3384, 2
      %v3616 = vsel %vm2410, %v3614, %v3615
      %v3617 = vrot.slane %v3383, 2
      %v3618 = vrot.slane %v3385, 2
      %v3619 = vsel %vm2410, %v3617, %v3618
      %v3620 = vrot.slane %v3386, 2
      %v3621 = vsel %vm2410, %v3615, %v3620
      %v3622 = vrot.slane %v3387, 2
      %v3623 = vsel %vm2410, %v3618, %v3622
      %v3624 = vrot.slane %v3388, 2
      %v3625 = vrot.slane %v3390, 2
      %v3626 = vsel %vm2410, %v3624, %v3625
      %v3627 = vrot.slane %v3389, 2
      %v3628 = vrot.slane %v3391, 2
      %v3629 = vsel %vm2410, %v3627, %v3628
      %v3630 = vrot.slane %v3392, 2
      %v3631 = vsel %vm2410, %v3625, %v3630
      %v3632 = vrot.slane %v3393, 2
      %v3633 = vsel %vm2410, %v3628, %v3632
      %v3634 = vrot.slane %v3394, 2
      %v3635 = vrot.slane %v3396, 2
      %v3636 = vsel %vm2410, %v3634, %v3635
      %v3637 = vrot.slane %v3395, 2
      %v3638 = vrot.slane %v3397, 2
      %v3639 = vsel %vm2410, %v3637, %v3638
      %v3640 = vrot.slane %v3398, 2
      %v3641 = vsel %vm2410, %v3635, %v3640
      %v3642 = vrot.slane %v3399, 2
      %v3643 = vsel %vm2410, %v3638, %v3642
      %v3644 = vrot.slane %v3400, 2
      %v3645 = vrot.slane %v3402, 2
      %v3646 = vsel %vm2410, %v3644, %v3645
      %v3647 = vrot.slane %v3401, 2
      %v3648 = vrot.slane %v3403, 2
      %v3649 = vsel %vm2410, %v3647, %v3648
      %v3650 = vrot.slane %v3404, 2
      %v3651 = vsel %vm2410, %v3645, %v3650
      %v3652 = vrot.slane %v3405, 2
      %v3653 = vsel %vm2410, %v3648, %v3652
      %v3654 = vrot.slane %v3406, 2
      %v3655 = vrot.slane %v3408, 2
      %v3656 = vsel %vm2410, %v3654, %v3655
      %v3657 = vrot.slane %v3407, 2
      %v3658 = vrot.slane %v3409, 2
      %v3659 = vsel %vm2410, %v3657, %v3658
      %v3660 = vrot.slane %v3410, 2
      %v3661 = vsel %vm2410, %v3655, %v3660
      %v3662 = vrot.slane %v3411, 2
      %v3663 = vsel %vm2410, %v3658, %v3662
      %v3664 = vrot.slane %v3412, 2
      %v3665 = vrot.slane %v3414, 2
      %v3666 = vsel %vm2410, %v3664, %v3665
      %v3667 = vrot.slane %v3413, 2
      %v3668 = vrot.slane %v3415, 2
      %v3669 = vsel %vm2410, %v3667, %v3668
      %v3670 = vrot.slane %v3416, 2
      %v3671 = vsel %vm2410, %v3665, %v3670
      %v3672 = vrot.slane %v3417, 2
      %v3673 = vsel %vm2410, %v3668, %v3672
      %v3738 = vadd.f32 %v3253, %v3516
      %v3739 = vadd.f32 %v3254, %v3519
      %v3740 = vadd.f32 %v3255, %v3521
      %v3741 = vadd.f32 %v3256, %v3523
      %v3742 = vadd.f32 %v3257, %v3526
      %v3743 = vadd.f32 %v3258, %v3529
      %v3744 = vadd.f32 %v3259, %v3531
      %v3745 = vadd.f32 %v3260, %v3533
      %v3746 = vadd.f32 %v3261, %v3536
      %v3747 = vadd.f32 %v3262, %v3539
      %v3748 = vadd.f32 %v3263, %v3541
      %v3749 = vadd.f32 %v3264, %v3543
      %v3750 = vadd.f32 %v3265, %v3546
      %v3751 = vadd.f32 %v3266, %v3549
      %v3752 = vadd.f32 %v3267, %v3551
      %v3753 = vadd.f32 %v3268, %v3553
      %v3754 = vadd.f32 %v3269, %v3556
      %v3755 = vadd.f32 %v3270, %v3559
      %v3756 = vadd.f32 %v3271, %v3561
      %v3757 = vadd.f32 %v3272, %v3563
      %v3758 = vadd.f32 %v3273, %v3566
      %v3759 = vadd.f32 %v3274, %v3569
      %v3760 = vadd.f32 %v3275, %v3571
      %v3761 = vadd.f32 %v3276, %v3573
      %v3762 = vadd.f32 %v3277, %v3576
      %v3763 = vadd.f32 %v3278, %v3579
      %v3764 = vadd.f32 %v3279, %v3581
      %v3765 = vadd.f32 %v3280, %v3583
      %v3766 = vadd.f32 %v3281, %v3586
      %v3767 = vadd.f32 %v3282, %v3589
      %v3768 = vadd.f32 %v3283, %v3591
      %v3769 = vadd.f32 %v3284, %v3593
      %v3770 = vadd.f32 %v3285, %v3596
      %v3771 = vadd.f32 %v3286, %v3599
      %v3772 = vadd.f32 %v3287, %v3601
      %v3773 = vadd.f32 %v3288, %v3603
      %v3774 = vadd.f32 %v3289, %v3606
      %v3775 = vadd.f32 %v3290, %v3609
      %v3776 = vadd.f32 %v3291, %v3611
      %v3777 = vadd.f32 %v3292, %v3613
      %v3778 = vadd.f32 %v3293, %v3616
      %v3779 = vadd.f32 %v3294, %v3619
      %v3780 = vadd.f32 %v3295, %v3621
      %v3781 = vadd.f32 %v3296, %v3623
      %v3782 = vadd.f32 %v3297, %v3626
      %v3783 = vadd.f32 %v3298, %v3629
      %v3784 = vadd.f32 %v3299, %v3631
      %v3785 = vadd.f32 %v3300, %v3633
      %v3786 = vadd.f32 %v3301, %v3636
      %v3787 = vadd.f32 %v3302, %v3639
      %v3788 = vadd.f32 %v3303, %v3641
      %v3789 = vadd.f32 %v3304, %v3643
      %v3790 = vadd.f32 %v3305, %v3646
      %v3791 = vadd.f32 %v3306, %v3649
      %v3792 = vadd.f32 %v3307, %v3651
      %v3793 = vadd.f32 %v3308, %v3653
      %v3794 = vadd.f32 %v3309, %v3656
      %v3795 = vadd.f32 %v3310, %v3659
      %v3796 = vadd.f32 %v3311, %v3661
      %v3797 = vadd.f32 %v3312, %v3663
      %v3798 = vadd.f32 %v3313, %v3666
      %v3799 = vadd.f32 %v3314, %v3669
      %v3800 = vadd.f32 %v3315, %v3671
      %v3801 = vadd.f32 %v3316, %v3673
      %v3803 = vperm.slane %v473, 0
      %v3804 = vperm.slane %v473, 1
      %v3807 = vmul.f32 %v1562, %v3803
      %v3808 = vmul.f32 %v1563, %v3804
      %v3809 = vmul.f32 %v1564, %v3803
      %v3810 = vmul.f32 %v1565, %v3804
      %v3811 = vmul.f32 %v1568, %v3803
      %v3812 = vmul.f32 %v1569, %v3804
      %v3813 = vmul.f32 %v1570, %v3803
      %v3814 = vmul.f32 %v1571, %v3804
      %v3815 = vmul.f32 %v1574, %v3803
      %v3816 = vmul.f32 %v1575, %v3804
      %v3817 = vmul.f32 %v1576, %v3803
      %v3818 = vmul.f32 %v1577, %v3804
      %v3819 = vmul.f32 %v1580, %v3803
      %v3820 = vmul.f32 %v1581, %v3804
      %v3821 = vmul.f32 %v1582, %v3803
      %v3822 = vmul.f32 %v1583, %v3804
      %v3823 = vmul.f32 %v1586, %v3803
      %v3824 = vmul.f32 %v1587, %v3804
      %v3825 = vmul.f32 %v1588, %v3803
      %v3826 = vmul.f32 %v1589, %v3804
      %v3827 = vmul.f32 %v1592, %v3803
      %v3828 = vmul.f32 %v1593, %v3804
      %v3829 = vmul.f32 %v1594, %v3803
      %v3830 = vmul.f32 %v1595, %v3804
      %v3831 = vmul.f32 %v1598, %v3803
      %v3832 = vmul.f32 %v1599, %v3804
      %v3833 = vmul.f32 %v1600, %v3803
      %v3834 = vmul.f32 %v1601, %v3804
      %v3835 = vmul.f32 %v1604, %v3803
      %v3836 = vmul.f32 %v1605, %v3804
      %v3837 = vmul.f32 %v1606, %v3803
      %v3838 = vmul.f32 %v1607, %v3804
      %v3839 = vmul.f32 %v1610, %v3803
      %v3840 = vmul.f32 %v1611, %v3804
      %v3841 = vmul.f32 %v1612, %v3803
      %v3842 = vmul.f32 %v1613, %v3804
      %v3843 = vmul.f32 %v1616, %v3803
      %v3844 = vmul.f32 %v1617, %v3804
      %v3845 = vmul.f32 %v1618, %v3803
      %v3846 = vmul.f32 %v1619, %v3804
      %v3847 = vmul.f32 %v1622, %v3803
      %v3848 = vmul.f32 %v1623, %v3804
      %v3849 = vmul.f32 %v1624, %v3803
      %v3850 = vmul.f32 %v1625, %v3804
      %v3851 = vmul.f32 %v1628, %v3803
      %v3852 = vmul.f32 %v1629, %v3804
      %v3853 = vmul.f32 %v1630, %v3803
      %v3854 = vmul.f32 %v1631, %v3804
      %v3855 = vmul.f32 %v1634, %v3803
      %v3856 = vmul.f32 %v1635, %v3804
      %v3857 = vmul.f32 %v1636, %v3803
      %v3858 = vmul.f32 %v1637, %v3804
      %v3859 = vmul.f32 %v1640, %v3803
      %v3860 = vmul.f32 %v1641, %v3804
      %v3861 = vmul.f32 %v1642, %v3803
      %v3862 = vmul.f32 %v1643, %v3804
      %v3863 = vmul.f32 %v1646, %v3803
      %v3864 = vmul.f32 %v1647, %v3804
      %v3865 = vmul.f32 %v1648, %v3803
      %v3866 = vmul.f32 %v1649, %v3804
      %v3867 = vmul.f32 %v1652, %v3803
      %v3868 = vmul.f32 %v1653, %v3804
      %v3869 = vmul.f32 %v1654, %v3803
      %v3870 = vmul.f32 %v1655, %v3804
      %v3871 = vadd.f32 %v3738, %v3807
      %v3872 = vadd.f32 %v3739, %v3808
      %v3873 = vadd.f32 %v3740, %v3809
      %v3874 = vadd.f32 %v3741, %v3810
      %v3875 = vadd.f32 %v3742, %v3811
      %v3876 = vadd.f32 %v3743, %v3812
      %v3877 = vadd.f32 %v3744, %v3813
      %v3878 = vadd.f32 %v3745, %v3814
      %v3879 = vadd.f32 %v3746, %v3815
      %v3880 = vadd.f32 %v3747, %v3816
      %v3881 = vadd.f32 %v3748, %v3817
      %v3882 = vadd.f32 %v3749, %v3818
      %v3883 = vadd.f32 %v3750, %v3819
      %v3884 = vadd.f32 %v3751, %v3820
      %v3885 = vadd.f32 %v3752, %v3821
      %v3886 = vadd.f32 %v3753, %v3822
      %v3887 = vadd.f32 %v3754, %v3823
      %v3888 = vadd.f32 %v3755, %v3824
      %v3889 = vadd.f32 %v3756, %v3825
      %v3890 = vadd.f32 %v3757, %v3826
      %v3891 = vadd.f32 %v3758, %v3827
      %v3892 = vadd.f32 %v3759, %v3828
      %v3893 = vadd.f32 %v3760, %v3829
      %v3894 = vadd.f32 %v3761, %v3830
      %v3895 = vadd.f32 %v3762, %v3831
      %v3896 = vadd.f32 %v3763, %v3832
      %v3897 = vadd.f32 %v3764, %v3833
      %v3898 = vadd.f32 %v3765, %v3834
      %v3899 = vadd.f32 %v3766, %v3835
      %v3900 = vadd.f32 %v3767, %v3836
      %v3901 = vadd.f32 %v3768, %v3837
      %v3902 = vadd.f32 %v3769, %v3838
      %v3903 = vadd.f32 %v3770, %v3839
      %v3904 = vadd.f32 %v3771, %v3840
      %v3905 = vadd.f32 %v3772, %v3841
      %v3906 = vadd.f32 %v3773, %v3842
      %v3907 = vadd.f32 %v3774, %v3843
      %v3908 = vadd.f32 %v3775, %v3844
      %v3909 = vadd.f32 %v3776, %v3845
      %v3910 = vadd.f32 %v3777, %v3846
      %v3911 = vadd.f32 %v3778, %v3847
      %v3912 = vadd.f32 %v3779, %v3848
      %v3913 = vadd.f32 %v3780, %v3849
      %v3914 = vadd.f32 %v3781, %v3850
      %v3915 = vadd.f32 %v3782, %v3851
      %v3916 = vadd.f32 %v3783, %v3852
      %v3917 = vadd.f32 %v3784, %v3853
      %v3918 = vadd.f32 %v3785, %v3854
      %v3919 = vadd.f32 %v3786, %v3855
      %v3920 = vadd.f32 %v3787, %v3856
      %v3921 = vadd.f32 %v3788, %v3857
      %v3922 = vadd.f32 %v3789, %v3858
      %v3923 = vadd.f32 %v3790, %v3859
      %v3924 = vadd.f32 %v3791, %v3860
      %v3925 = vadd.f32 %v3792, %v3861
      %v3926 = vadd.f32 %v3793, %v3862
      %v3927 = vadd.f32 %v3794, %v3863
      %v3928 = vadd.f32 %v3795, %v3864
      %v3929 = vadd.f32 %v3796, %v3865
      %v3930 = vadd.f32 %v3797, %v3866
      %v3931 = vadd.f32 %v3798, %v3867
      %v3932 = vadd.f32 %v3799, %v3868
      %v3933 = vadd.f32 %v3800, %v3869
      %v3934 = vadd.f32 %v3801, %v3870
      %v3936 = vperm.slane %v474, 0
      %v3937 = vperm.slane %v474, 1
      %v3940 = vmul.f32 %v1562, %v3936
      %v3941 = vmul.f32 %v1563, %v3937
      %v3942 = vmul.f32 %v1564, %v3936
      %v3943 = vmul.f32 %v1565, %v3937
      %v3944 = vmul.f32 %v1566, %v3936
      %v3945 = vmul.f32 %v1567, %v3937
      %v3946 = vmul.f32 %v1568, %v3936
      %v3947 = vmul.f32 %v1569, %v3937
      %v3948 = vmul.f32 %v1570, %v3936
      %v3949 = vmul.f32 %v1571, %v3937
      %v3950 = vmul.f32 %v1572, %v3936
      %v3951 = vmul.f32 %v1573, %v3937
      %v3952 = vmul.f32 %v1574, %v3936
      %v3953 = vmul.f32 %v1575, %v3937
      %v3954 = vmul.f32 %v1576, %v3936
      %v3955 = vmul.f32 %v1577, %v3937
      %v3956 = vmul.f32 %v1578, %v3936
      %v3957 = vmul.f32 %v1579, %v3937
      %v3958 = vmul.f32 %v1580, %v3936
      %v3959 = vmul.f32 %v1581, %v3937
      %v3960 = vmul.f32 %v1582, %v3936
      %v3961 = vmul.f32 %v1583, %v3937
      %v3962 = vmul.f32 %v1584, %v3936
      %v3963 = vmul.f32 %v1585, %v3937
      %v3964 = vmul.f32 %v1586, %v3936
      %v3965 = vmul.f32 %v1587, %v3937
      %v3966 = vmul.f32 %v1588, %v3936
      %v3967 = vmul.f32 %v1589, %v3937
      %v3968 = vmul.f32 %v1590, %v3936
      %v3969 = vmul.f32 %v1591, %v3937
      %v3970 = vmul.f32 %v1592, %v3936
      %v3971 = vmul.f32 %v1593, %v3937
      %v3972 = vmul.f32 %v1594, %v3936
      %v3973 = vmul.f32 %v1595, %v3937
      %v3974 = vmul.f32 %v1596, %v3936
      %v3975 = vmul.f32 %v1597, %v3937
      %v3976 = vmul.f32 %v1598, %v3936
      %v3977 = vmul.f32 %v1599, %v3937
      %v3978 = vmul.f32 %v1600, %v3936
      %v3979 = vmul.f32 %v1601, %v3937
      %v3980 = vmul.f32 %v1602, %v3936
      %v3981 = vmul.f32 %v1603, %v3937
      %v3982 = vmul.f32 %v1604, %v3936
      %v3983 = vmul.f32 %v1605, %v3937
      %v3984 = vmul.f32 %v1606, %v3936
      %v3985 = vmul.f32 %v1607, %v3937
      %v3986 = vmul.f32 %v1608, %v3936
      %v3987 = vmul.f32 %v1609, %v3937
      %v3988 = vmul.f32 %v1610, %v3936
      %v3989 = vmul.f32 %v1611, %v3937
      %v3990 = vmul.f32 %v1612, %v3936
      %v3991 = vmul.f32 %v1613, %v3937
      %v3992 = vmul.f32 %v1614, %v3936
      %v3993 = vmul.f32 %v1615, %v3937
      %v3994 = vmul.f32 %v1616, %v3936
      %v3995 = vmul.f32 %v1617, %v3937
      %v3996 = vmul.f32 %v1618, %v3936
      %v3997 = vmul.f32 %v1619, %v3937
      %v3998 = vmul.f32 %v1620, %v3936
      %v3999 = vmul.f32 %v1621, %v3937
      %v4000 = vmul.f32 %v1622, %v3936
      %v4001 = vmul.f32 %v1623, %v3937
      %v4002 = vmul.f32 %v1624, %v3936
      %v4003 = vmul.f32 %v1625, %v3937
      %v4004 = vmul.f32 %v1626, %v3936
      %v4005 = vmul.f32 %v1627, %v3937
      %v4006 = vmul.f32 %v1628, %v3936
      %v4007 = vmul.f32 %v1629, %v3937
      %v4008 = vmul.f32 %v1630, %v3936
      %v4009 = vmul.f32 %v1631, %v3937
      %v4010 = vmul.f32 %v1632, %v3936
      %v4011 = vmul.f32 %v1633, %v3937
      %v4012 = vmul.f32 %v1634, %v3936
      %v4013 = vmul.f32 %v1635, %v3937
      %v4014 = vmul.f32 %v1636, %v3936
      %v4015 = vmul.f32 %v1637, %v3937
      %v4016 = vmul.f32 %v1638, %v3936
      %v4017 = vmul.f32 %v1639, %v3937
      %v4018 = vmul.f32 %v1640, %v3936
      %v4019 = vmul.f32 %v1641, %v3937
      %v4020 = vmul.f32 %v1642, %v3936
      %v4021 = vmul.f32 %v1643, %v3937
      %v4022 = vmul.f32 %v1644, %v3936
      %v4023 = vmul.f32 %v1645, %v3937
      %v4024 = vmul.f32 %v1646, %v3936
      %v4025 = vmul.f32 %v1647, %v3937
      %v4026 = vmul.f32 %v1648, %v3936
      %v4027 = vmul.f32 %v1649, %v3937
      %v4028 = vmul.f32 %v1650, %v3936
      %v4029 = vmul.f32 %v1651, %v3937
      %v4030 = vmul.f32 %v1652, %v3936
      %v4031 = vmul.f32 %v1653, %v3937
      %v4032 = vmul.f32 %v1654, %v3936
      %v4033 = vmul.f32 %v1655, %v3937
      %v4034 = vmul.f32 %v1656, %v3936
      %v4035 = vmul.f32 %v1657, %v3937
      %v4132 = vrot.slane %v3940, 1
      %v4133 = vrot.slane %v3942, 1
      %v4134 = vsel %vm1924, %v4132, %v4133
      %v4135 = vrot.slane %v3941, 1
      %v4136 = vrot.slane %v3943, 1
      %v4137 = vsel %vm1924, %v4135, %v4136
      %v4138 = vrot.slane %v3944, 1
      %v4139 = vsel %vm1924, %v4133, %v4138
      %v4140 = vrot.slane %v3945, 1
      %v4141 = vsel %vm1924, %v4136, %v4140
      %v4142 = vrot.slane %v3946, 1
      %v4143 = vrot.slane %v3948, 1
      %v4144 = vsel %vm1924, %v4142, %v4143
      %v4145 = vrot.slane %v3947, 1
      %v4146 = vrot.slane %v3949, 1
      %v4147 = vsel %vm1924, %v4145, %v4146
      %v4148 = vrot.slane %v3950, 1
      %v4149 = vsel %vm1924, %v4143, %v4148
      %v4150 = vrot.slane %v3951, 1
      %v4151 = vsel %vm1924, %v4146, %v4150
      %v4152 = vrot.slane %v3952, 1
      %v4153 = vrot.slane %v3954, 1
      %v4154 = vsel %vm1924, %v4152, %v4153
      %v4155 = vrot.slane %v3953, 1
      %v4156 = vrot.slane %v3955, 1
      %v4157 = vsel %vm1924, %v4155, %v4156
      %v4158 = vrot.slane %v3956, 1
      %v4159 = vsel %vm1924, %v4153, %v4158
      %v4160 = vrot.slane %v3957, 1
      %v4161 = vsel %vm1924, %v4156, %v4160
      %v4162 = vrot.slane %v3958, 1
      %v4163 = vrot.slane %v3960, 1
      %v4164 = vsel %vm1924, %v4162, %v4163
      %v4165 = vrot.slane %v3959, 1
      %v4166 = vrot.slane %v3961, 1
      %v4167 = vsel %vm1924, %v4165, %v4166
      %v4168 = vrot.slane %v3962, 1
      %v4169 = vsel %vm1924, %v4163, %v4168
      %v4170 = vrot.slane %v3963, 1
      %v4171 = vsel %vm1924, %v4166, %v4170
      %v4172 = vrot.slane %v3964, 1
      %v4173 = vrot.slane %v3966, 1
      %v4174 = vsel %vm1924, %v4172, %v4173
      %v4175 = vrot.slane %v3965, 1
      %v4176 = vrot.slane %v3967, 1
      %v4177 = vsel %vm1924, %v4175, %v4176
      %v4178 = vrot.slane %v3968, 1
      %v4179 = vsel %vm1924, %v4173, %v4178
      %v4180 = vrot.slane %v3969, 1
      %v4181 = vsel %vm1924, %v4176, %v4180
      %v4182 = vrot.slane %v3970, 1
      %v4183 = vrot.slane %v3972, 1
      %v4184 = vsel %vm1924, %v4182, %v4183
      %v4185 = vrot.slane %v3971, 1
      %v4186 = vrot.slane %v3973, 1
      %v4187 = vsel %vm1924, %v4185, %v4186
      %v4188 = vrot.slane %v3974, 1
      %v4189 = vsel %vm1924, %v4183, %v4188
      %v4190 = vrot.slane %v3975, 1
      %v4191 = vsel %vm1924, %v4186, %v4190
      %v4192 = vrot.slane %v3976, 1
      %v4193 = vrot.slane %v3978, 1
      %v4194 = vsel %vm1924, %v4192, %v4193
      %v4195 = vrot.slane %v3977, 1
      %v4196 = vrot.slane %v3979, 1
      %v4197 = vsel %vm1924, %v4195, %v4196
      %v4198 = vrot.slane %v3980, 1
      %v4199 = vsel %vm1924, %v4193, %v4198
      %v4200 = vrot.slane %v3981, 1
      %v4201 = vsel %vm1924, %v4196, %v4200
      %v4202 = vrot.slane %v3982, 1
      %v4203 = vrot.slane %v3984, 1
      %v4204 = vsel %vm1924, %v4202, %v4203
      %v4205 = vrot.slane %v3983, 1
      %v4206 = vrot.slane %v3985, 1
      %v4207 = vsel %vm1924, %v4205, %v4206
      %v4208 = vrot.slane %v3986, 1
      %v4209 = vsel %vm1924, %v4203, %v4208
      %v4210 = vrot.slane %v3987, 1
      %v4211 = vsel %vm1924, %v4206, %v4210
      %v4212 = vrot.slane %v3988, 1
      %v4213 = vrot.slane %v3990, 1
      %v4214 = vsel %vm1924, %v4212, %v4213
      %v4215 = vrot.slane %v3989, 1
      %v4216 = vrot.slane %v3991, 1
      %v4217 = vsel %vm1924, %v4215, %v4216
      %v4218 = vrot.slane %v3992, 1
      %v4219 = vsel %vm1924, %v4213, %v4218
      %v4220 = vrot.slane %v3993, 1
      %v4221 = vsel %vm1924, %v4216, %v4220
      %v4222 = vrot.slane %v3994, 1
      %v4223 = vrot.slane %v3996, 1
      %v4224 = vsel %vm1924, %v4222, %v4223
      %v4225 = vrot.slane %v3995, 1
      %v4226 = vrot.slane %v3997, 1
      %v4227 = vsel %vm1924, %v4225, %v4226
      %v4228 = vrot.slane %v3998, 1
      %v4229 = vsel %vm1924, %v4223, %v4228
      %v4230 = vrot.slane %v3999, 1
      %v4231 = vsel %vm1924, %v4226, %v4230
      %v4232 = vrot.slane %v4000, 1
      %v4233 = vrot.slane %v4002, 1
      %v4234 = vsel %vm1924, %v4232, %v4233
      %v4235 = vrot.slane %v4001, 1
      %v4236 = vrot.slane %v4003, 1
      %v4237 = vsel %vm1924, %v4235, %v4236
      %v4238 = vrot.slane %v4004, 1
      %v4239 = vsel %vm1924, %v4233, %v4238
      %v4240 = vrot.slane %v4005, 1
      %v4241 = vsel %vm1924, %v4236, %v4240
      %v4242 = vrot.slane %v4006, 1
      %v4243 = vrot.slane %v4008, 1
      %v4244 = vsel %vm1924, %v4242, %v4243
      %v4245 = vrot.slane %v4007, 1
      %v4246 = vrot.slane %v4009, 1
      %v4247 = vsel %vm1924, %v4245, %v4246
      %v4248 = vrot.slane %v4010, 1
      %v4249 = vsel %vm1924, %v4243, %v4248
      %v4250 = vrot.slane %v4011, 1
      %v4251 = vsel %vm1924, %v4246, %v4250
      %v4252 = vrot.slane %v4012, 1
      %v4253 = vrot.slane %v4014, 1
      %v4254 = vsel %vm1924, %v4252, %v4253
      %v4255 = vrot.slane %v4013, 1
      %v4256 = vrot.slane %v4015, 1
      %v4257 = vsel %vm1924, %v4255, %v4256
      %v4258 = vrot.slane %v4016, 1
      %v4259 = vsel %vm1924, %v4253, %v4258
      %v4260 = vrot.slane %v4017, 1
      %v4261 = vsel %vm1924, %v4256, %v4260
      %v4262 = vrot.slane %v4018, 1
      %v4263 = vrot.slane %v4020, 1
      %v4264 = vsel %vm1924, %v4262, %v4263
      %v4265 = vrot.slane %v4019, 1
      %v4266 = vrot.slane %v4021, 1
      %v4267 = vsel %vm1924, %v4265, %v4266
      %v4268 = vrot.slane %v4022, 1
      %v4269 = vsel %vm1924, %v4263, %v4268
      %v4270 = vrot.slane %v4023, 1
      %v4271 = vsel %vm1924, %v4266, %v4270
      %v4272 = vrot.slane %v4024, 1
      %v4273 = vrot.slane %v4026, 1
      %v4274 = vsel %vm1924, %v4272, %v4273
      %v4275 = vrot.slane %v4025, 1
      %v4276 = vrot.slane %v4027, 1
      %v4277 = vsel %vm1924, %v4275, %v4276
      %v4278 = vrot.slane %v4028, 1
      %v4279 = vsel %vm1924, %v4273, %v4278
      %v4280 = vrot.slane %v4029, 1
      %v4281 = vsel %vm1924, %v4276, %v4280
      %v4282 = vrot.slane %v4030, 1
      %v4283 = vrot.slane %v4032, 1
      %v4284 = vsel %vm1924, %v4282, %v4283
      %v4285 = vrot.slane %v4031, 1
      %v4286 = vrot.slane %v4033, 1
      %v4287 = vsel %vm1924, %v4285, %v4286
      %v4288 = vrot.slane %v4034, 1
      %v4289 = vsel %vm1924, %v4283, %v4288
      %v4290 = vrot.slane %v4035, 1
      %v4291 = vsel %vm1924, %v4286, %v4290
      %v4356 = vadd.f32 %v3871, %v4134
      %v4357 = vadd.f32 %v3872, %v4137
      %v4358 = vadd.f32 %v3873, %v4139
      %v4359 = vadd.f32 %v3874, %v4141
      %v4360 = vadd.f32 %v3875, %v4144
      %v4361 = vadd.f32 %v3876, %v4147
      %v4362 = vadd.f32 %v3877, %v4149
      %v4363 = vadd.f32 %v3878, %v4151
      %v4364 = vadd.f32 %v3879, %v4154
      %v4365 = vadd.f32 %v3880, %v4157
      %v4366 = vadd.f32 %v3881, %v4159
      %v4367 = vadd.f32 %v3882, %v4161
      %v4368 = vadd.f32 %v3883, %v4164
      %v4369 = vadd.f32 %v3884, %v4167
      %v4370 = vadd.f32 %v3885, %v4169
      %v4371 = vadd.f32 %v3886, %v4171
      %v4372 = vadd.f32 %v3887, %v4174
      %v4373 = vadd.f32 %v3888, %v4177
      %v4374 = vadd.f32 %v3889, %v4179
      %v4375 = vadd.f32 %v3890, %v4181
      %v4376 = vadd.f32 %v3891, %v4184
      %v4377 = vadd.f32 %v3892, %v4187
      %v4378 = vadd.f32 %v3893, %v4189
      %v4379 = vadd.f32 %v3894, %v4191
      %v4380 = vadd.f32 %v3895, %v4194
      %v4381 = vadd.f32 %v3896, %v4197
      %v4382 = vadd.f32 %v3897, %v4199
      %v4383 = vadd.f32 %v3898, %v4201
      %v4384 = vadd.f32 %v3899, %v4204
      %v4385 = vadd.f32 %v3900, %v4207
      %v4386 = vadd.f32 %v3901, %v4209
      %v4387 = vadd.f32 %v3902, %v4211
      %v4388 = vadd.f32 %v3903, %v4214
      %v4389 = vadd.f32 %v3904, %v4217
      %v4390 = vadd.f32 %v3905, %v4219
      %v4391 = vadd.f32 %v3906, %v4221
      %v4392 = vadd.f32 %v3907, %v4224
      %v4393 = vadd.f32 %v3908, %v4227
      %v4394 = vadd.f32 %v3909, %v4229
      %v4395 = vadd.f32 %v3910, %v4231
      %v4396 = vadd.f32 %v3911, %v4234
      %v4397 = vadd.f32 %v3912, %v4237
      %v4398 = vadd.f32 %v3913, %v4239
      %v4399 = vadd.f32 %v3914, %v4241
      %v4400 = vadd.f32 %v3915, %v4244
      %v4401 = vadd.f32 %v3916, %v4247
      %v4402 = vadd.f32 %v3917, %v4249
      %v4403 = vadd.f32 %v3918, %v4251
      %v4404 = vadd.f32 %v3919, %v4254
      %v4405 = vadd.f32 %v3920, %v4257
      %v4406 = vadd.f32 %v3921, %v4259
      %v4407 = vadd.f32 %v3922, %v4261
      %v4408 = vadd.f32 %v3923, %v4264
      %v4409 = vadd.f32 %v3924, %v4267
      %v4410 = vadd.f32 %v3925, %v4269
      %v4411 = vadd.f32 %v3926, %v4271
      %v4412 = vadd.f32 %v3927, %v4274
      %v4413 = vadd.f32 %v3928, %v4277
      %v4414 = vadd.f32 %v3929, %v4279
      %v4415 = vadd.f32 %v3930, %v4281
      %v4416 = vadd.f32 %v3931, %v4284
      %v4417 = vadd.f32 %v3932, %v4287
      %v4418 = vadd.f32 %v3933, %v4289
      %v4419 = vadd.f32 %v3934, %v4291
      %v4421 = vperm.slane %v475, 0
      %v4422 = vperm.slane %v475, 1
      %v4425 = vmul.f32 %v1562, %v4421
      %v4426 = vmul.f32 %v1563, %v4422
      %v4427 = vmul.f32 %v1564, %v4421
      %v4428 = vmul.f32 %v1565, %v4422
      %v4429 = vmul.f32 %v1566, %v4421
      %v4430 = vmul.f32 %v1567, %v4422
      %v4431 = vmul.f32 %v1568, %v4421
      %v4432 = vmul.f32 %v1569, %v4422
      %v4433 = vmul.f32 %v1570, %v4421
      %v4434 = vmul.f32 %v1571, %v4422
      %v4435 = vmul.f32 %v1572, %v4421
      %v4436 = vmul.f32 %v1573, %v4422
      %v4437 = vmul.f32 %v1574, %v4421
      %v4438 = vmul.f32 %v1575, %v4422
      %v4439 = vmul.f32 %v1576, %v4421
      %v4440 = vmul.f32 %v1577, %v4422
      %v4441 = vmul.f32 %v1578, %v4421
      %v4442 = vmul.f32 %v1579, %v4422
      %v4443 = vmul.f32 %v1580, %v4421
      %v4444 = vmul.f32 %v1581, %v4422
      %v4445 = vmul.f32 %v1582, %v4421
      %v4446 = vmul.f32 %v1583, %v4422
      %v4447 = vmul.f32 %v1584, %v4421
      %v4448 = vmul.f32 %v1585, %v4422
      %v4449 = vmul.f32 %v1586, %v4421
      %v4450 = vmul.f32 %v1587, %v4422
      %v4451 = vmul.f32 %v1588, %v4421
      %v4452 = vmul.f32 %v1589, %v4422
      %v4453 = vmul.f32 %v1590, %v4421
      %v4454 = vmul.f32 %v1591, %v4422
      %v4455 = vmul.f32 %v1592, %v4421
      %v4456 = vmul.f32 %v1593, %v4422
      %v4457 = vmul.f32 %v1594, %v4421
      %v4458 = vmul.f32 %v1595, %v4422
      %v4459 = vmul.f32 %v1596, %v4421
      %v4460 = vmul.f32 %v1597, %v4422
      %v4461 = vmul.f32 %v1598, %v4421
      %v4462 = vmul.f32 %v1599, %v4422
      %v4463 = vmul.f32 %v1600, %v4421
      %v4464 = vmul.f32 %v1601, %v4422
      %v4465 = vmul.f32 %v1602, %v4421
      %v4466 = vmul.f32 %v1603, %v4422
      %v4467 = vmul.f32 %v1604, %v4421
      %v4468 = vmul.f32 %v1605, %v4422
      %v4469 = vmul.f32 %v1606, %v4421
      %v4470 = vmul.f32 %v1607, %v4422
      %v4471 = vmul.f32 %v1608, %v4421
      %v4472 = vmul.f32 %v1609, %v4422
      %v4473 = vmul.f32 %v1610, %v4421
      %v4474 = vmul.f32 %v1611, %v4422
      %v4475 = vmul.f32 %v1612, %v4421
      %v4476 = vmul.f32 %v1613, %v4422
      %v4477 = vmul.f32 %v1614, %v4421
      %v4478 = vmul.f32 %v1615, %v4422
      %v4479 = vmul.f32 %v1616, %v4421
      %v4480 = vmul.f32 %v1617, %v4422
      %v4481 = vmul.f32 %v1618, %v4421
      %v4482 = vmul.f32 %v1619, %v4422
      %v4483 = vmul.f32 %v1620, %v4421
      %v4484 = vmul.f32 %v1621, %v4422
      %v4485 = vmul.f32 %v1622, %v4421
      %v4486 = vmul.f32 %v1623, %v4422
      %v4487 = vmul.f32 %v1624, %v4421
      %v4488 = vmul.f32 %v1625, %v4422
      %v4489 = vmul.f32 %v1626, %v4421
      %v4490 = vmul.f32 %v1627, %v4422
      %v4491 = vmul.f32 %v1628, %v4421
      %v4492 = vmul.f32 %v1629, %v4422
      %v4493 = vmul.f32 %v1630, %v4421
      %v4494 = vmul.f32 %v1631, %v4422
      %v4495 = vmul.f32 %v1632, %v4421
      %v4496 = vmul.f32 %v1633, %v4422
      %v4497 = vmul.f32 %v1634, %v4421
      %v4498 = vmul.f32 %v1635, %v4422
      %v4499 = vmul.f32 %v1636, %v4421
      %v4500 = vmul.f32 %v1637, %v4422
      %v4501 = vmul.f32 %v1638, %v4421
      %v4502 = vmul.f32 %v1639, %v4422
      %v4503 = vmul.f32 %v1640, %v4421
      %v4504 = vmul.f32 %v1641, %v4422
      %v4505 = vmul.f32 %v1642, %v4421
      %v4506 = vmul.f32 %v1643, %v4422
      %v4507 = vmul.f32 %v1644, %v4421
      %v4508 = vmul.f32 %v1645, %v4422
      %v4509 = vmul.f32 %v1646, %v4421
      %v4510 = vmul.f32 %v1647, %v4422
      %v4511 = vmul.f32 %v1648, %v4421
      %v4512 = vmul.f32 %v1649, %v4422
      %v4513 = vmul.f32 %v1650, %v4421
      %v4514 = vmul.f32 %v1651, %v4422
      %v4515 = vmul.f32 %v1652, %v4421
      %v4516 = vmul.f32 %v1653, %v4422
      %v4517 = vmul.f32 %v1654, %v4421
      %v4518 = vmul.f32 %v1655, %v4422
      %v4519 = vmul.f32 %v1656, %v4421
      %v4520 = vmul.f32 %v1657, %v4422
      %v4617 = vrot.slane %v4425, 2
      %v4618 = vrot.slane %v4427, 2
      %v4619 = vsel %vm2410, %v4617, %v4618
      %v4620 = vrot.slane %v4426, 2
      %v4621 = vrot.slane %v4428, 2
      %v4622 = vsel %vm2410, %v4620, %v4621
      %v4623 = vrot.slane %v4429, 2
      %v4624 = vsel %vm2410, %v4618, %v4623
      %v4625 = vrot.slane %v4430, 2
      %v4626 = vsel %vm2410, %v4621, %v4625
      %v4627 = vrot.slane %v4431, 2
      %v4628 = vrot.slane %v4433, 2
      %v4629 = vsel %vm2410, %v4627, %v4628
      %v4630 = vrot.slane %v4432, 2
      %v4631 = vrot.slane %v4434, 2
      %v4632 = vsel %vm2410, %v4630, %v4631
      %v4633 = vrot.slane %v4435, 2
      %v4634 = vsel %vm2410, %v4628, %v4633
      %v4635 = vrot.slane %v4436, 2
      %v4636 = vsel %vm2410, %v4631, %v4635
      %v4637 = vrot.slane %v4437, 2
      %v4638 = vrot.slane %v4439, 2
      %v4639 = vsel %vm2410, %v4637, %v4638
      %v4640 = vrot.slane %v4438, 2
      %v4641 = vrot.slane %v4440, 2
      %v4642 = vsel %vm2410, %v4640, %v4641
      %v4643 = vrot.slane %v4441, 2
      %v4644 = vsel %vm2410, %v4638, %v4643
      %v4645 = vrot.slane %v4442, 2
      %v4646 = vsel %vm2410, %v4641, %v4645
      %v4647 = vrot.slane %v4443, 2
      %v4648 = vrot.slane %v4445, 2
      %v4649 = vsel %vm2410, %v4647, %v4648
      %v4650 = vrot.slane %v4444, 2
      %v4651 = vrot.slane %v4446, 2
      %v4652 = vsel %vm2410, %v4650, %v4651
      %v4653 = vrot.slane %v4447, 2
      %v4654 = vsel %vm2410, %v4648, %v4653
      %v4655 = vrot.slane %v4448, 2
      %v4656 = vsel %vm2410, %v4651, %v4655
      %v4657 = vrot.slane %v4449, 2
      %v4658 = vrot.slane %v4451, 2
      %v4659 = vsel %vm2410, %v4657, %v4658
      %v4660 = vrot.slane %v4450, 2
      %v4661 = vrot.slane %v4452, 2
      %v4662 = vsel %vm2410, %v4660, %v4661
      %v4663 = vrot.slane %v4453, 2
      %v4664 = vsel %vm2410, %v4658, %v4663
      %v4665 = vrot.slane %v4454, 2
      %v4666 = vsel %vm2410, %v4661, %v4665
      %v4667 = vrot.slane %v4455, 2
      %v4668 = vrot.slane %v4457, 2
      %v4669 = vsel %vm2410, %v4667, %v4668
      %v4670 = vrot.slane %v4456, 2
      %v4671 = vrot.slane %v4458, 2
      %v4672 = vsel %vm2410, %v4670, %v4671
      %v4673 = vrot.slane %v4459, 2
      %v4674 = vsel %vm2410, %v4668, %v4673
      %v4675 = vrot.slane %v4460, 2
      %v4676 = vsel %vm2410, %v4671, %v4675
      %v4677 = vrot.slane %v4461, 2
      %v4678 = vrot.slane %v4463, 2
      %v4679 = vsel %vm2410, %v4677, %v4678
      %v4680 = vrot.slane %v4462, 2
      %v4681 = vrot.slane %v4464, 2
      %v4682 = vsel %vm2410, %v4680, %v4681
      %v4683 = vrot.slane %v4465, 2
      %v4684 = vsel %vm2410, %v4678, %v4683
      %v4685 = vrot.slane %v4466, 2
      %v4686 = vsel %vm2410, %v4681, %v4685
      %v4687 = vrot.slane %v4467, 2
      %v4688 = vrot.slane %v4469, 2
      %v4689 = vsel %vm2410, %v4687, %v4688
      %v4690 = vrot.slane %v4468, 2
      %v4691 = vrot.slane %v4470, 2
      %v4692 = vsel %vm2410, %v4690, %v4691
      %v4693 = vrot.slane %v4471, 2
      %v4694 = vsel %vm2410, %v4688, %v4693
      %v4695 = vrot.slane %v4472, 2
      %v4696 = vsel %vm2410, %v4691, %v4695
      %v4697 = vrot.slane %v4473, 2
      %v4698 = vrot.slane %v4475, 2
      %v4699 = vsel %vm2410, %v4697, %v4698
      %v4700 = vrot.slane %v4474, 2
      %v4701 = vrot.slane %v4476, 2
      %v4702 = vsel %vm2410, %v4700, %v4701
      %v4703 = vrot.slane %v4477, 2
      %v4704 = vsel %vm2410, %v4698, %v4703
      %v4705 = vrot.slane %v4478, 2
      %v4706 = vsel %vm2410, %v4701, %v4705
      %v4707 = vrot.slane %v4479, 2
      %v4708 = vrot.slane %v4481, 2
      %v4709 = vsel %vm2410, %v4707, %v4708
      %v4710 = vrot.slane %v4480, 2
      %v4711 = vrot.slane %v4482, 2
      %v4712 = vsel %vm2410, %v4710, %v4711
      %v4713 = vrot.slane %v4483, 2
      %v4714 = vsel %vm2410, %v4708, %v4713
      %v4715 = vrot.slane %v4484, 2
      %v4716 = vsel %vm2410, %v4711, %v4715
      %v4717 = vrot.slane %v4485, 2
      %v4718 = vrot.slane %v4487, 2
      %v4719 = vsel %vm2410, %v4717, %v4718
      %v4720 = vrot.slane %v4486, 2
      %v4721 = vrot.slane %v4488, 2
      %v4722 = vsel %vm2410, %v4720, %v4721
      %v4723 = vrot.slane %v4489, 2
      %v4724 = vsel %vm2410, %v4718, %v4723
      %v4725 = vrot.slane %v4490, 2
      %v4726 = vsel %vm2410, %v4721, %v4725
      %v4727 = vrot.slane %v4491, 2
      %v4728 = vrot.slane %v4493, 2
      %v4729 = vsel %vm2410, %v4727, %v4728
      %v4730 = vrot.slane %v4492, 2
      %v4731 = vrot.slane %v4494, 2
      %v4732 = vsel %vm2410, %v4730, %v4731
      %v4733 = vrot.slane %v4495, 2
      %v4734 = vsel %vm2410, %v4728, %v4733
      %v4735 = vrot.slane %v4496, 2
      %v4736 = vsel %vm2410, %v4731, %v4735
      %v4737 = vrot.slane %v4497, 2
      %v4738 = vrot.slane %v4499, 2
      %v4739 = vsel %vm2410, %v4737, %v4738
      %v4740 = vrot.slane %v4498, 2
      %v4741 = vrot.slane %v4500, 2
      %v4742 = vsel %vm2410, %v4740, %v4741
      %v4743 = vrot.slane %v4501, 2
      %v4744 = vsel %vm2410, %v4738, %v4743
      %v4745 = vrot.slane %v4502, 2
      %v4746 = vsel %vm2410, %v4741, %v4745
      %v4747 = vrot.slane %v4503, 2
      %v4748 = vrot.slane %v4505, 2
      %v4749 = vsel %vm2410, %v4747, %v4748
      %v4750 = vrot.slane %v4504, 2
      %v4751 = vrot.slane %v4506, 2
      %v4752 = vsel %vm2410, %v4750, %v4751
      %v4753 = vrot.slane %v4507, 2
      %v4754 = vsel %vm2410, %v4748, %v4753
      %v4755 = vrot.slane %v4508, 2
      %v4756 = vsel %vm2410, %v4751, %v4755
      %v4757 = vrot.slane %v4509, 2
      %v4758 = vrot.slane %v4511, 2
      %v4759 = vsel %vm2410, %v4757, %v4758
      %v4760 = vrot.slane %v4510, 2
      %v4761 = vrot.slane %v4512, 2
      %v4762 = vsel %vm2410, %v4760, %v4761
      %v4763 = vrot.slane %v4513, 2
      %v4764 = vsel %vm2410, %v4758, %v4763
      %v4765 = vrot.slane %v4514, 2
      %v4766 = vsel %vm2410, %v4761, %v4765
      %v4767 = vrot.slane %v4515, 2
      %v4768 = vrot.slane %v4517, 2
      %v4769 = vsel %vm2410, %v4767, %v4768
      %v4770 = vrot.slane %v4516, 2
      %v4771 = vrot.slane %v4518, 2
      %v4772 = vsel %vm2410, %v4770, %v4771
      %v4773 = vrot.slane %v4519, 2
      %v4774 = vsel %vm2410, %v4768, %v4773
      %v4775 = vrot.slane %v4520, 2
      %v4776 = vsel %vm2410, %v4771, %v4775
      %v4841 = vadd.f32 %v4356, %v4619
      %v4842 = vadd.f32 %v4357, %v4622
      %v4843 = vadd.f32 %v4358, %v4624
      %v4844 = vadd.f32 %v4359, %v4626
      %v4845 = vadd.f32 %v4360, %v4629
      %v4846 = vadd.f32 %v4361, %v4632
      %v4847 = vadd.f32 %v4362, %v4634
      %v4848 = vadd.f32 %v4363, %v4636
      %v4849 = vadd.f32 %v4364, %v4639
      %v4850 = vadd.f32 %v4365, %v4642
      %v4851 = vadd.f32 %v4366, %v4644
      %v4852 = vadd.f32 %v4367, %v4646
      %v4853 = vadd.f32 %v4368, %v4649
      %v4854 = vadd.f32 %v4369, %v4652
      %v4855 = vadd.f32 %v4370, %v4654
      %v4856 = vadd.f32 %v4371, %v4656
      %v4857 = vadd.f32 %v4372, %v4659
      %v4858 = vadd.f32 %v4373, %v4662
      %v4859 = vadd.f32 %v4374, %v4664
      %v4860 = vadd.f32 %v4375, %v4666
      %v4861 = vadd.f32 %v4376, %v4669
      %v4862 = vadd.f32 %v4377, %v4672
      %v4863 = vadd.f32 %v4378, %v4674
      %v4864 = vadd.f32 %v4379, %v4676
      %v4865 = vadd.f32 %v4380, %v4679
      %v4866 = vadd.f32 %v4381, %v4682
      %v4867 = vadd.f32 %v4382, %v4684
      %v4868 = vadd.f32 %v4383, %v4686
      %v4869 = vadd.f32 %v4384, %v4689
      %v4870 = vadd.f32 %v4385, %v4692
      %v4871 = vadd.f32 %v4386, %v4694
      %v4872 = vadd.f32 %v4387, %v4696
      %v4873 = vadd.f32 %v4388, %v4699
      %v4874 = vadd.f32 %v4389, %v4702
      %v4875 = vadd.f32 %v4390, %v4704
      %v4876 = vadd.f32 %v4391, %v4706
      %v4877 = vadd.f32 %v4392, %v4709
      %v4878 = vadd.f32 %v4393, %v4712
      %v4879 = vadd.f32 %v4394, %v4714
      %v4880 = vadd.f32 %v4395, %v4716
      %v4881 = vadd.f32 %v4396, %v4719
      %v4882 = vadd.f32 %v4397, %v4722
      %v4883 = vadd.f32 %v4398, %v4724
      %v4884 = vadd.f32 %v4399, %v4726
      %v4885 = vadd.f32 %v4400, %v4729
      %v4886 = vadd.f32 %v4401, %v4732
      %v4887 = vadd.f32 %v4402, %v4734
      %v4888 = vadd.f32 %v4403, %v4736
      %v4889 = vadd.f32 %v4404, %v4739
      %v4890 = vadd.f32 %v4405, %v4742
      %v4891 = vadd.f32 %v4406, %v4744
      %v4892 = vadd.f32 %v4407, %v4746
      %v4893 = vadd.f32 %v4408, %v4749
      %v4894 = vadd.f32 %v4409, %v4752
      %v4895 = vadd.f32 %v4410, %v4754
      %v4896 = vadd.f32 %v4411, %v4756
      %v4897 = vadd.f32 %v4412, %v4759
      %v4898 = vadd.f32 %v4413, %v4762
      %v4899 = vadd.f32 %v4414, %v4764
      %v4900 = vadd.f32 %v4415, %v4766
      %v4901 = vadd.f32 %v4416, %v4769
      %v4902 = vadd.f32 %v4417, %v4772
      %v4903 = vadd.f32 %v4418, %v4774
      %v4904 = vadd.f32 %v4419, %v4776
      %v4906 = vperm.slane %v476, 0
      %v4907 = vperm.slane %v476, 1
      %v4910 = vadd.f32 %v4841, %v4906
      %v4911 = vadd.f32 %v4842, %v4907
      %v4912 = vadd.f32 %v4843, %v4906
      %v4913 = vadd.f32 %v4844, %v4907
      %v4914 = vadd.f32 %v4845, %v4906
      %v4915 = vadd.f32 %v4846, %v4907
      %v4916 = vadd.f32 %v4847, %v4906
      %v4917 = vadd.f32 %v4848, %v4907
      %v4918 = vadd.f32 %v4849, %v4906
      %v4919 = vadd.f32 %v4850, %v4907
      %v4920 = vadd.f32 %v4851, %v4906
      %v4921 = vadd.f32 %v4852, %v4907
      %v4922 = vadd.f32 %v4853, %v4906
      %v4923 = vadd.f32 %v4854, %v4907
      %v4924 = vadd.f32 %v4855, %v4906
      %v4925 = vadd.f32 %v4856, %v4907
      %v4926 = vadd.f32 %v4857, %v4906
      %v4927 = vadd.f32 %v4858, %v4907
      %v4928 = vadd.f32 %v4859, %v4906
      %v4929 = vadd.f32 %v4860, %v4907
      %v4930 = vadd.f32 %v4861, %v4906
      %v4931 = vadd.f32 %v4862, %v4907
      %v4932 = vadd.f32 %v4863, %v4906
      %v4933 = vadd.f32 %v4864, %v4907
      %v4934 = vadd.f32 %v4865, %v4906
      %v4935 = vadd.f32 %v4866, %v4907
      %v4936 = vadd.f32 %v4867, %v4906
      %v4937 = vadd.f32 %v4868, %v4907
      %v4938 = vadd.f32 %v4869, %v4906
      %v4939 = vadd.f32 %v4870, %v4907
      %v4940 = vadd.f32 %v4871, %v4906
      %v4941 = vadd.f32 %v4872, %v4907
      %v4942 = vadd.f32 %v4873, %v4906
      %v4943 = vadd.f32 %v4874, %v4907
      %v4944 = vadd.f32 %v4875, %v4906
      %v4945 = vadd.f32 %v4876, %v4907
      %v4946 = vadd.f32 %v4877, %v4906
      %v4947 = vadd.f32 %v4878, %v4907
      %v4948 = vadd.f32 %v4879, %v4906
      %v4949 = vadd.f32 %v4880, %v4907
      %v4950 = vadd.f32 %v4881, %v4906
      %v4951 = vadd.f32 %v4882, %v4907
      %v4952 = vadd.f32 %v4883, %v4906
      %v4953 = vadd.f32 %v4884, %v4907
      %v4954 = vadd.f32 %v4885, %v4906
      %v4955 = vadd.f32 %v4886, %v4907
      %v4956 = vadd.f32 %v4887, %v4906
      %v4957 = vadd.f32 %v4888, %v4907
      %v4958 = vadd.f32 %v4889, %v4906
      %v4959 = vadd.f32 %v4890, %v4907
      %v4960 = vadd.f32 %v4891, %v4906
      %v4961 = vadd.f32 %v4892, %v4907
      %v4962 = vadd.f32 %v4893, %v4906
      %v4963 = vadd.f32 %v4894, %v4907
      %v4964 = vadd.f32 %v4895, %v4906
      %v4965 = vadd.f32 %v4896, %v4907
      %v4966 = vadd.f32 %v4897, %v4906
      %v4967 = vadd.f32 %v4898, %v4907
      %v4968 = vadd.f32 %v4899, %v4906
      %v4969 = vadd.f32 %v4900, %v4907
      %v4970 = vadd.f32 %v4901, %v4906
      %v4971 = vadd.f32 %v4902, %v4907
      %v4972 = vadd.f32 %v4903, %v4906
      %v4973 = vadd.f32 %v4904, %v4907
      %v4974 = vmax.f32 %v4910, 0.0
      %v4975 = vmax.f32 %v4911, 0.0
      %v4976 = vmax.f32 %v4912, 0.0
      %v4977 = vmax.f32 %v4913, 0.0
      %v4978 = vmax.f32 %v4914, 0.0
      %v4979 = vmax.f32 %v4915, 0.0
      %v4980 = vmax.f32 %v4916, 0.0
      %v4981 = vmax.f32 %v4917, 0.0
      %v4982 = vmax.f32 %v4918, 0.0
      %v4983 = vmax.f32 %v4919, 0.0
      %v4984 = vmax.f32 %v4920, 0.0
      %v4985 = vmax.f32 %v4921, 0.0
      %v4986 = vmax.f32 %v4922, 0.0
      %v4987 = vmax.f32 %v4923, 0.0
      %v4988 = vmax.f32 %v4924, 0.0
      %v4989 = vmax.f32 %v4925, 0.0
      %v4990 = vmax.f32 %v4926, 0.0
      %v4991 = vmax.f32 %v4927, 0.0
      %v4992 = vmax.f32 %v4928, 0.0
      %v4993 = vmax.f32 %v4929, 0.0
      %v4994 = vmax.f32 %v4930, 0.0
      %v4995 = vmax.f32 %v4931, 0.0
      %v4996 = vmax.f32 %v4932, 0.0
      %v4997 = vmax.f32 %v4933, 0.0
      %v4998 = vmax.f32 %v4934, 0.0
      %v4999 = vmax.f32 %v4935, 0.0
      %v5000 = vmax.f32 %v4936, 0.0
      %v5001 = vmax.f32 %v4937, 0.0
      %v5002 = vmax.f32 %v4938, 0.0
      %v5003 = vmax.f32 %v4939, 0.0
      %v5004 = vmax.f32 %v4940, 0.0
      %v5005 = vmax.f32 %v4941, 0.0
      %v5006 = vmax.f32 %v4942, 0.0
      %v5007 = vmax.f32 %v4943, 0.0
      %v5008 = vmax.f32 %v4944, 0.0
      %v5009 = vmax.f32 %v4945, 0.0
      %v5010 = vmax.f32 %v4946, 0.0
      %v5011 = vmax.f32 %v4947, 0.0
      %v5012 = vmax.f32 %v4948, 0.0
      %v5013 = vmax.f32 %v4949, 0.0
      %v5014 = vmax.f32 %v4950, 0.0
      %v5015 = vmax.f32 %v4951, 0.0
      %v5016 = vmax.f32 %v4952, 0.0
      %v5017 = vmax.f32 %v4953, 0.0
      %v5018 = vmax.f32 %v4954, 0.0
      %v5019 = vmax.f32 %v4955, 0.0
      %v5020 = vmax.f32 %v4956, 0.0
      %v5021 = vmax.f32 %v4957, 0.0
      %v5022 = vmax.f32 %v4958, 0.0
      %v5023 = vmax.f32 %v4959, 0.0
      %v5024 = vmax.f32 %v4960, 0.0
      %v5025 = vmax.f32 %v4961, 0.0
      %v5026 = vmax.f32 %v4962, 0.0
      %v5027 = vmax.f32 %v4963, 0.0
      %v5028 = vmax.f32 %v4964, 0.0
      %v5029 = vmax.f32 %v4965, 0.0
      %v5030 = vmax.f32 %v4966, 0.0
      %v5031 = vmax.f32 %v4967, 0.0
      %v5032 = vmax.f32 %v4968, 0.0
      %v5033 = vmax.f32 %v4969, 0.0
      %v5034 = vmax.f32 %v4970, 0.0
      %v5035 = vmax.f32 %v4971, 0.0
      %v5036 = vmax.f32 %v4972, 0.0
      %v5037 = vmax.f32 %v4973, 0.0
      %v5038 = vmin.f32 %v4974, 6.0
      %v5039 = vmin.f32 %v4975, 6.0
      %v5040 = vmin.f32 %v4976, 6.0
      %v5041 = vmin.f32 %v4977, 6.0
      %v5042 = vmin.f32 %v4978, 6.0
      %v5043 = vmin.f32 %v4979, 6.0
      %v5044 = vmin.f32 %v4980, 6.0
      %v5045 = vmin.f32 %v4981, 6.0
      %v5046 = vmin.f32 %v4982, 6.0
      %v5047 = vmin.f32 %v4983, 6.0
      %v5048 = vmin.f32 %v4984, 6.0
      %v5049 = vmin.f32 %v4985, 6.0
      %v5050 = vmin.f32 %v4986, 6.0
      %v5051 = vmin.f32 %v4987, 6.0
      %v5052 = vmin.f32 %v4988, 6.0
      %v5053 = vmin.f32 %v4989, 6.0
      %v5054 = vmin.f32 %v4990, 6.0
      %v5055 = vmin.f32 %v4991, 6.0
      %v5056 = vmin.f32 %v4992, 6.0
      %v5057 = vmin.f32 %v4993, 6.0
      %v5058 = vmin.f32 %v4994, 6.0
      %v5059 = vmin.f32 %v4995, 6.0
      %v5060 = vmin.f32 %v4996, 6.0
      %v5061 = vmin.f32 %v4997, 6.0
      %v5062 = vmin.f32 %v4998, 6.0
      %v5063 = vmin.f32 %v4999, 6.0
      %v5064 = vmin.f32 %v5000, 6.0
      %v5065 = vmin.f32 %v5001, 6.0
      %v5066 = vmin.f32 %v5002, 6.0
      %v5067 = vmin.f32 %v5003, 6.0
      %v5068 = vmin.f32 %v5004, 6.0
      %v5069 = vmin.f32 %v5005, 6.0
      %v5070 = vmin.f32 %v5006, 6.0
      %v5071 = vmin.f32 %v5007, 6.0
      %v5072 = vmin.f32 %v5008, 6.0
      %v5073 = vmin.f32 %v5009, 6.0
      %v5074 = vmin.f32 %v5010, 6.0
      %v5075 = vmin.f32 %v5011, 6.0
      %v5076 = vmin.f32 %v5012, 6.0
      %v5077 = vmin.f32 %v5013, 6.0
      %v5078 = vmin.f32 %v5014, 6.0
      %v5079 = vmin.f32 %v5015, 6.0
      %v5080 = vmin.f32 %v5016, 6.0
      %v5081 = vmin.f32 %v5017, 6.0
      %v5082 = vmin.f32 %v5018, 6.0
      %v5083 = vmin.f32 %v5019, 6.0
      %v5084 = vmin.f32 %v5020, 6.0
      %v5085 = vmin.f32 %v5021, 6.0
      %v5086 = vmin.f32 %v5022, 6.0
      %v5087 = vmin.f32 %v5023, 6.0
      %v5088 = vmin.f32 %v5024, 6.0
      %v5089 = vmin.f32 %v5025, 6.0
      %v5090 = vmin.f32 %v5026, 6.0
      %v5091 = vmin.f32 %v5027, 6.0
      %v5092 = vmin.f32 %v5028, 6.0
      %v5093 = vmin.f32 %v5029, 6.0
      %v5094 = vmin.f32 %v5030, 6.0
      %v5095 = vmin.f32 %v5031, 6.0
      %v5096 = vmin.f32 %v5032, 6.0
      %v5097 = vmin.f32 %v5033, 6.0
      %v5098 = vmin.f32 %v5034, 6.0
      %v5099 = vmin.f32 %v5035, 6.0
      %v5100 = vmin.f32 %v5036, 6.0
      %v5101 = vmin.f32 %v5037, 6.0
      %v5102 = vpack.c.bf16 %v5040, %v5038
      %v5103 = vpack.c.bf16 %v5041, %v5039
      %v5104 = vpack.c.bf16 %v5044, %v5042
      %v5105 = vpack.c.bf16 %v5045, %v5043
      %v5106 = vpack.c.bf16 %v5048, %v5046
      %v5107 = vpack.c.bf16 %v5049, %v5047
      %v5108 = vpack.c.bf16 %v5052, %v5050
      %v5109 = vpack.c.bf16 %v5053, %v5051
      %v5110 = vpack.c.bf16 %v5056, %v5054
      %v5111 = vpack.c.bf16 %v5057, %v5055
      %v5112 = vpack.c.bf16 %v5060, %v5058
      %v5113 = vpack.c.bf16 %v5061, %v5059
      %v5114 = vpack.c.bf16 %v5064, %v5062
      %v5115 = vpack.c.bf16 %v5065, %v5063
      %v5116 = vpack.c.bf16 %v5068, %v5066
      %v5117 = vpack.c.bf16 %v5069, %v5067
      %v5118 = vpack.c.bf16 %v5072, %v5070
      %v5119 = vpack.c.bf16 %v5073, %v5071
      %v5120 = vpack.c.bf16 %v5076, %v5074
      %v5121 = vpack.c.bf16 %v5077, %v5075
      %v5122 = vpack.c.bf16 %v5080, %v5078
      %v5123 = vpack.c.bf16 %v5081, %v5079
      %v5124 = vpack.c.bf16 %v5084, %v5082
      %v5125 = vpack.c.bf16 %v5085, %v5083
      %v5126 = vpack.c.bf16 %v5088, %v5086
      %v5127 = vpack.c.bf16 %v5089, %v5087
      %v5128 = vpack.c.bf16 %v5092, %v5090
      %v5129 = vpack.c.bf16 %v5093, %v5091
      %v5130 = vpack.c.bf16 %v5096, %v5094
      %v5131 = vpack.c.bf16 %v5097, %v5095
      %v5132 = vpack.c.bf16 %v5100, %v5098
      %v5133 = vpack.c.bf16 %v5101, %v5099
      %v5135 = vperm.slane %v501, 0
      %v5161 = vunpack.c.l.b16 %v477
      %v5162 = vunpack.c.l.b16 %v478
      %v5163 = vunpack.c.l.b16 %v479
      %v5164 = vunpack.c.l.b16 %v480
      %v5165 = vunpack.c.l.b16 %v481
      %v5166 = vunpack.c.l.b16 %v482
      %v5167 = vunpack.c.l.b16 %v483
      %v5168 = vunpack.c.l.b16 %v484
      %v5169 = vunpack.c.l.b16 %v485
      %v5170 = vunpack.c.l.b16 %v486
      %v5171 = vunpack.c.l.b16 %v487
      %v5172 = vunpack.c.l.b16 %v488
      %v5173 = vunpack.c.l.b16 %v489
      %v5174 = vunpack.c.l.b16 %v490
      %v5175 = vunpack.c.l.b16 %v491
      %v5176 = vunpack.c.l.b16 %v492
      %v5177 = vunpack.c.l.b16 %v493
      %v5178 = vunpack.c.l.b16 %v494
      %v5179 = vunpack.c.l.b16 %v495
      %v5180 = vunpack.c.l.b16 %v496
      %v5181 = vunpack.c.l.b16 %v497
      %v5182 = vunpack.c.l.b16 %v498
      %v5183 = vunpack.c.l.b16 %v499
      %v5184 = vunpack.c.l.b16 %v500
      %v5185 = vpack.c.b16 %v5162, %v5161
      %v5186 = vpack.c.b16 %v5164, %v5163
      %v5187 = vpack.c.b16 %v5166, %v5165
      %v5188 = vpack.c.b16 %v5168, %v5167
      %v5189 = vpack.c.b16 %v5170, %v5169
      %v5190 = vpack.c.b16 %v5172, %v5171
      %v5191 = vpack.c.b16 %v5174, %v5173
      %v5192 = vpack.c.b16 %v5176, %v5175
      %v5193 = vpack.c.b16 %v5178, %v5177
      %v5194 = vpack.c.b16 %v5180, %v5179
      %v5195 = vpack.c.b16 %v5182, %v5181
      %v5196 = vpack.c.b16 %v5184, %v5183
      %vm5209 = vcmask 523264
      %v5211 = vsel %vm5209, %v5103, 0
      %v5214 = vsel %vm5209, %v5105, 0
      %v5217 = vsel %vm5209, %v5107, 0
      %v5220 = vsel %vm5209, %v5109, 0
      %v5223 = vsel %vm5209, %v5111, 0
      %v5226 = vsel %vm5209, %v5113, 0
      %v5229 = vsel %vm5209, %v5115, 0
      %v5232 = vsel %vm5209, %v5117, 0
      %v5235 = vsel %vm5209, %v5119, 0
      %v5238 = vsel %vm5209, %v5121, 0
      %v5241 = vsel %vm5209, %v5123, 0
      %v5244 = vsel %vm5209, %v5125, 0
      %v5247 = vsel %vm5209, %v5127, 0
      %v5250 = vsel %vm5209, %v5129, 0
      %v5253 = vsel %vm5209, %v5131, 0
      %v5256 = vsel %vm5209, %v5133, 0
      %5258 = vmatpush.bf16.msra.mxu0 %v5192
      %5259 = vmatpush.bf16.msra.mxu0 %v5191
      %5260 = vmatpush.bf16.msra.mxu0 %v5190
      %5261 = vmatpush.bf16.msra.mxu0 %v5189
      %5262 = vmatpush.bf16.msra.mxu0 %v5188
      %5263 = vmatpush.bf16.msra.mxu0 %v5187
      %5264 = vmatpush.bf16.msra.mxu0 %v5186
      %5265 = vmatpush.bf16.msra.mxu0 %v5185
      %5266 = vmatmul.bf16.gmra.mxu0 %v5102
      %v5267 = vpop.f32.mrf.mxu0
      %v5268 = vadd.f32 %v5135, %v5267
      %v5269 = vpop.f32.mrf.mxu0
      %v5270 = vadd.f32 %v5135, %v5269
      %5271 = vmatmul.bf16.gmra.mxu0 %v5104
      %v5272 = vpop.f32.mrf.mxu0
      %v5273 = vadd.f32 %v5135, %v5272
      %v5274 = vpop.f32.mrf.mxu0
      %v5275 = vadd.f32 %v5135, %v5274
      %5276 = vmatmul.bf16.gmra.mxu0 %v5106
      %v5277 = vpop.f32.mrf.mxu0
      %v5278 = vadd.f32 %v5135, %v5277
      %v5279 = vpop.f32.mrf.mxu0
      %v5280 = vadd.f32 %v5135, %v5279
      %5281 = vmatmul.bf16.gmra.mxu0 %v5108
      %v5282 = vpop.f32.mrf.mxu0
      %v5283 = vadd.f32 %v5135, %v5282
      %v5284 = vpop.f32.mrf.mxu0
      %v5285 = vadd.f32 %v5135, %v5284
      %5286 = vmatmul.bf16.gmra.mxu0 %v5110
      %v5287 = vpop.f32.mrf.mxu0
      %v5288 = vadd.f32 %v5135, %v5287
      %v5289 = vpop.f32.mrf.mxu0
      %v5290 = vadd.f32 %v5135, %v5289
      %5291 = vmatmul.bf16.gmra.mxu0 %v5112
      %v5292 = vpop.f32.mrf.mxu0
      %v5293 = vadd.f32 %v5135, %v5292
      %v5294 = vpop.f32.mrf.mxu0
      %v5295 = vadd.f32 %v5135, %v5294
      %5296 = vmatmul.bf16.gmra.mxu0 %v5114
      %v5297 = vpop.f32.mrf.mxu0
      %v5298 = vadd.f32 %v5135, %v5297
      %v5299 = vpop.f32.mrf.mxu0
      %v5300 = vadd.f32 %v5135, %v5299
      %5301 = vmatmul.bf16.gmra.mxu0 %v5116
      %v5302 = vpop.f32.mrf.mxu0
      %v5303 = vadd.f32 %v5135, %v5302
      %v5304 = vpop.f32.mrf.mxu0
      %v5305 = vadd.f32 %v5135, %v5304
      %5306 = vmatmul.bf16.gmra.mxu0 %v5118
      %v5307 = vpop.f32.mrf.mxu0
      %v5308 = vadd.f32 %v5135, %v5307
      %v5309 = vpop.f32.mrf.mxu0
      %v5310 = vadd.f32 %v5135, %v5309
      %5311 = vmatmul.bf16.gmra.mxu0 %v5120
      %v5312 = vpop.f32.mrf.mxu0
      %v5313 = vadd.f32 %v5135, %v5312
      %v5314 = vpop.f32.mrf.mxu0
      %v5315 = vadd.f32 %v5135, %v5314
      %5316 = vmatmul.bf16.gmra.mxu0 %v5122
      %v5317 = vpop.f32.mrf.mxu0
      %v5318 = vadd.f32 %v5135, %v5317
      %v5319 = vpop.f32.mrf.mxu0
      %v5320 = vadd.f32 %v5135, %v5319
      %5321 = vmatmul.bf16.gmra.mxu0 %v5124
      %v5322 = vpop.f32.mrf.mxu0
      %v5323 = vadd.f32 %v5135, %v5322
      %v5324 = vpop.f32.mrf.mxu0
      %v5325 = vadd.f32 %v5135, %v5324
      %5326 = vmatmul.bf16.gmra.mxu0 %v5126
      %v5327 = vpop.f32.mrf.mxu0
      %v5328 = vadd.f32 %v5135, %v5327
      %v5329 = vpop.f32.mrf.mxu0
      %v5330 = vadd.f32 %v5135, %v5329
      %5331 = vmatmul.bf16.gmra.mxu0 %v5128
      %v5332 = vpop.f32.mrf.mxu0
      %v5333 = vadd.f32 %v5135, %v5332
      %v5334 = vpop.f32.mrf.mxu0
      %v5335 = vadd.f32 %v5135, %v5334
      %5336 = vmatmul.bf16.gmra.mxu0 %v5130
      %v5337 = vpop.f32.mrf.mxu0
      %v5338 = vadd.f32 %v5135, %v5337
      %v5339 = vpop.f32.mrf.mxu0
      %v5340 = vadd.f32 %v5135, %v5339
      %5341 = vmatmul.bf16.gmra.mxu0 %v5132
      %v5342 = vpop.f32.mrf.mxu0
      %v5343 = vadd.f32 %v5135, %v5342
      %v5344 = vpop.f32.mrf.mxu0
      %v5345 = vadd.f32 %v5135, %v5344
      %5346 = vdwg.mxu0
      %5347 = vmatpush.bf16.msra.mxu0 0
      %5348 = vmatpush.bf16.msra.mxu0 0
      %5349 = vmatpush.bf16.msra.mxu0 0
      %5350 = vmatpush.bf16.msra.mxu0 0
      %5351 = vmatpush.bf16.msra.mxu0 %v5196
      %5352 = vmatpush.bf16.msra.mxu0 %v5195
      %5353 = vmatpush.bf16.msra.mxu0 %v5194
      %5354 = vmatpush.bf16.msra.mxu0 %v5193
      %5355 = vmatmul.bf16.gmra.mxu0 %v5211
      %v5356 = vpop.f32.mrf.mxu0
      %v5357 = vadd.f32 %v5268, %v5356
      %v5358 = vpop.f32.mrf.mxu0
      %v5359 = vadd.f32 %v5270, %v5358
      %5360 = vmatmul.bf16.gmra.mxu0 %v5214
      %v5361 = vpop.f32.mrf.mxu0
      %v5362 = vadd.f32 %v5273, %v5361
      %v5363 = vpop.f32.mrf.mxu0
      %v5364 = vadd.f32 %v5275, %v5363
      %5365 = vmatmul.bf16.gmra.mxu0 %v5217
      %v5366 = vpop.f32.mrf.mxu0
      %v5367 = vadd.f32 %v5278, %v5366
      %v5368 = vpop.f32.mrf.mxu0
      %v5369 = vadd.f32 %v5280, %v5368
      %5370 = vmatmul.bf16.gmra.mxu0 %v5220
      %v5371 = vpop.f32.mrf.mxu0
      %v5372 = vadd.f32 %v5283, %v5371
      %v5373 = vpop.f32.mrf.mxu0
      %v5374 = vadd.f32 %v5285, %v5373
      %5375 = vmatmul.bf16.gmra.mxu0 %v5223
      %v5376 = vpop.f32.mrf.mxu0
      %v5377 = vadd.f32 %v5288, %v5376
      %v5378 = vpop.f32.mrf.mxu0
      %v5379 = vadd.f32 %v5290, %v5378
      %5380 = vmatmul.bf16.gmra.mxu0 %v5226
      %v5381 = vpop.f32.mrf.mxu0
      %v5382 = vadd.f32 %v5293, %v5381
      %v5383 = vpop.f32.mrf.mxu0
      %v5384 = vadd.f32 %v5295, %v5383
      %5385 = vmatmul.bf16.gmra.mxu0 %v5229
      %v5386 = vpop.f32.mrf.mxu0
      %v5387 = vadd.f32 %v5298, %v5386
      %v5388 = vpop.f32.mrf.mxu0
      %v5389 = vadd.f32 %v5300, %v5388
      %5390 = vmatmul.bf16.gmra.mxu0 %v5232
      %v5391 = vpop.f32.mrf.mxu0
      %v5392 = vadd.f32 %v5303, %v5391
      %v5393 = vpop.f32.mrf.mxu0
      %v5394 = vadd.f32 %v5305, %v5393
      %5395 = vmatmul.bf16.gmra.mxu0 %v5235
      %v5396 = vpop.f32.mrf.mxu0
      %v5397 = vadd.f32 %v5308, %v5396
      %v5398 = vpop.f32.mrf.mxu0
      %v5399 = vadd.f32 %v5310, %v5398
      %5400 = vmatmul.bf16.gmra.mxu0 %v5238
      %v5401 = vpop.f32.mrf.mxu0
      %v5402 = vadd.f32 %v5313, %v5401
      %v5403 = vpop.f32.mrf.mxu0
      %v5404 = vadd.f32 %v5315, %v5403
      %5405 = vmatmul.bf16.gmra.mxu0 %v5241
      %v5406 = vpop.f32.mrf.mxu0
      %v5407 = vadd.f32 %v5318, %v5406
      %v5408 = vpop.f32.mrf.mxu0
      %v5409 = vadd.f32 %v5320, %v5408
      %5410 = vmatmul.bf16.gmra.mxu0 %v5244
      %v5411 = vpop.f32.mrf.mxu0
      %v5412 = vadd.f32 %v5323, %v5411
      %v5413 = vpop.f32.mrf.mxu0
      %v5414 = vadd.f32 %v5325, %v5413
      %5415 = vmatmul.bf16.gmra.mxu0 %v5247
      %v5416 = vpop.f32.mrf.mxu0
      %v5417 = vadd.f32 %v5328, %v5416
      %v5418 = vpop.f32.mrf.mxu0
      %v5419 = vadd.f32 %v5330, %v5418
      %5420 = vmatmul.bf16.gmra.mxu0 %v5250
      %v5421 = vpop.f32.mrf.mxu0
      %v5422 = vadd.f32 %v5333, %v5421
      %v5423 = vpop.f32.mrf.mxu0
      %v5424 = vadd.f32 %v5335, %v5423
      %5425 = vmatmul.bf16.gmra.mxu0 %v5253
      %v5426 = vpop.f32.mrf.mxu0
      %v5427 = vadd.f32 %v5338, %v5426
      %v5428 = vpop.f32.mrf.mxu0
      %v5429 = vadd.f32 %v5340, %v5428
      %5430 = vmatmul.bf16.gmra.mxu0 %v5256
      %v5431 = vpop.f32.mrf.mxu0
      %v5432 = vadd.f32 %v5343, %v5431
      %v5433 = vpop.f32.mrf.mxu0
      %v5434 = vadd.f32 %v5345, %v5433
      %5435 = vdwg.mxu0
      %v5436 = vadd.f32 %v5357, %v502
      %v5437 = vadd.f32 %v5359, %v503
      %v5438 = vadd.f32 %v5362, %v504
      %v5439 = vadd.f32 %v5364, %v505
      %v5440 = vadd.f32 %v5367, %v506
      %v5441 = vadd.f32 %v5369, %v507
      %v5442 = vadd.f32 %v5372, %v508
      %v5443 = vadd.f32 %v5374, %v509
      %v5444 = vadd.f32 %v5377, %v510
      %v5445 = vadd.f32 %v5379, %v511
      %v5446 = vadd.f32 %v5382, %v512
      %v5447 = vadd.f32 %v5384, %v513
      %v5448 = vadd.f32 %v5387, %v514
      %v5449 = vadd.f32 %v5389, %v515
      %v5450 = vadd.f32 %v5392, %v516
      %v5451 = vadd.f32 %v5394, %v517
      %v5452 = vadd.f32 %v5397, %v518
      %v5453 = vadd.f32 %v5399, %v519
      %v5454 = vadd.f32 %v5402, %v520
      %v5455 = vadd.f32 %v5404, %v521
      %v5456 = vadd.f32 %v5407, %v522
      %v5457 = vadd.f32 %v5409, %v523
      %v5458 = vadd.f32 %v5412, %v524
      %v5459 = vadd.f32 %v5414, %v525
      %v5460 = vadd.f32 %v5417, %v526
      %v5461 = vadd.f32 %v5419, %v527
      %v5462 = vadd.f32 %v5422, %v528
      %v5463 = vadd.f32 %v5424, %v529
      %v5464 = vadd.f32 %v5427, %v530
      %v5465 = vadd.f32 %v5429, %v531
      %v5466 = vadd.f32 %v5432, %v532
      %v5467 = vadd.f32 %v5434, %v533
      %5468 = vst.msk [vmem:[%s352] sm:$0xff] %vm694, %v5436
      %5469 = vst.msk [vmem:[%s352 + $0x8] sm:$0xff] %vm694, %v5437
      %5470 = vst.msk [vmem:[%s352 + $0x10] sm:$0xff] %vm694, %v5438
      %5471 = vst.msk [vmem:[%s352 + $0x18] sm:$0xff] %vm694, %v5439
      %5472 = vst.msk [vmem:[%s352 + $0x20] sm:$0xff] %vm694, %v5440
      %5473 = vst.msk [vmem:[%s352 + $0x28] sm:$0xff] %vm694, %v5441
      %5474 = vst.msk [vmem:[%s352 + $0x30] sm:$0xff] %vm694, %v5442
      %5475 = vst.msk [vmem:[%s352 + $0x38] sm:$0xff] %vm694, %v5443
      %5476 = vst.msk [vmem:[%s352 + $0x40] sm:$0xff] %vm694, %v5444
      %5477 = vst.msk [vmem:[%s352 + $0x48] sm:$0xff] %vm694, %v5445
      %5478 = vst.msk [vmem:[%s352 + $0x50] sm:$0xff] %vm694, %v5446
      %5479 = vst.msk [vmem:[%s352 + $0x58] sm:$0xff] %vm694, %v5447
      %5480 = vst.msk [vmem:[%s352 + $0x60] sm:$0xff] %vm694, %v5448
      %5481 = vst.msk [vmem:[%s352 + $0x68] sm:$0xff] %vm694, %v5449
      %5482 = vst.msk [vmem:[%s352 + $0x70] sm:$0xff] %vm694, %v5450
      %5483 = vst.msk [vmem:[%s352 + $0x78] sm:$0xff] %vm694, %v5451
      %5484 = vst.msk [vmem:[%s352 + $0x80] sm:$0xff] %vm694, %v5452
      %5485 = vst.msk [vmem:[%s352 + $0x88] sm:$0xff] %vm694, %v5453
      %5486 = vst.msk [vmem:[%s352 + $0x90] sm:$0xff] %vm694, %v5454
      %5487 = vst.msk [vmem:[%s352 + $0x98] sm:$0xff] %vm694, %v5455
      %5488 = vst.msk [vmem:[%s352 + $0xa0] sm:$0xff] %vm694, %v5456
      %5489 = vst.msk [vmem:[%s352 + $0xa8] sm:$0xff] %vm694, %v5457
      %5490 = vst.msk [vmem:[%s352 + $0xb0] sm:$0xff] %vm694, %v5458
      %5491 = vst.msk [vmem:[%s352 + $0xb8] sm:$0xff] %vm694, %v5459
      %5492 = vst.msk [vmem:[%s352 + $0xc0] sm:$0xff] %vm694, %v5460
      %5493 = vst.msk [vmem:[%s352 + $0xc8] sm:$0xff] %vm694, %v5461
      %5494 = vst.msk [vmem:[%s352 + $0xd0] sm:$0xff] %vm694, %v5462
      %5495 = vst.msk [vmem:[%s352 + $0xd8] sm:$0xff] %vm694, %v5463
      %5496 = vst.msk [vmem:[%s352 + $0xe0] sm:$0xff] %vm694, %v5464
      %5497 = vst.msk [vmem:[%s352 + $0xe8] sm:$0xff] %vm694, %v5465
      %5498 = vst.msk [vmem:[%s352 + $0xf0] sm:$0xff] %vm694, %v5466
      %5499 = vst.msk [vmem:[%s352 + $0xf8] sm:$0xff] %vm694, %v5467
      %p5500 = scmp.lt.s32.totalorder %s20, 3
      %s5501 = scalar_select %p5500, %s20, 3
      %s5502 = smul.addr %s5501, 32
      %s5503 = smul.addr %s5502, 8
      %s5504 = scalar_lea.vmem %s9, %s5503
      // Predicated region
      $region57: #{tpu_custom_call.1} parent=55 // pred_check
        %p5505 = pneg %p237
      $region58: #{tpu_custom_call.1} parent=55 // pred_check_branch
        %5507 = sbr.rel (%p5505) target = $region60
      $region59: #{tpu_custom_call.1} parent=55 // pred_region
        _
      $region60: #{tpu_custom_call.1} parent=55 // pred_fallthru
        _
    $region56: #{tpu_custom_call.1} parent=5 // pred_fallthru
      _
    %p5508 = scmp.le.s32.totalorder 2, %s15
    // Predicated region
    $region61: #{tpu_custom_call.1} parent=5 // pred_check
      %p5509 = pneg %p5508
    $region62: #{tpu_custom_call.1} parent=5 // pred_check_branch
      %5511 = sbr.rel (%p5509) target = $region64
    $region63: #{tpu_custom_call.1} parent=5 // pred_region
      %s5512 = ssub.s32 %s15, 2
      // Predicated region
      $region65: #{tpu_custom_call.1} parent=63 // pred_check
        %p5513 = pneg %p243
      $region66: #{tpu_custom_call.1} parent=63 // pred_check_branch
        %5515 = sbr.rel (%p5513) target = $region68
      $region67: #{tpu_custom_call.1} parent=63 // pred_region
        %p5516 = scmp.lt.s32.totalorder %s21, 3
        %s5517 = scalar_select %p5516, %s21, 3
        %s5518 = smul.addr %s5517, 32
        %s5519 = smul.addr %s5518, 8
        %s5520 = scalar_lea.vmem %s9, %s5519
      $region68: #{tpu_custom_call.1} parent=63 // pred_fallthru
        _
    $region64: #{tpu_custom_call.1} parent=5 // pred_fallthru
      _
  $region6: #{tpu_custom_call.1} parent=0 // loop_footer
    %s19 = sadd.s32 1, %s15
  $region7: #{tpu_custom_call.1} parent=0 // loop_footer_branch
    %14 = sbr.rel target = $region3
  $region8: #{tpu_custom_call.1} parent=0 // loop_exit
    _

</llo_original>
